<compile_context>
chip_gen: v7x
topology: tpu7x:2x2x1
jax: 0.10.0
libtpu: 0.0.40
codegen_flags: <defaults>
</compile_context>

<pallas_src>
import jax
import jax.numpy as jnp
from jax import lax
from jax.experimental import pallas as pl
from jax.experimental.pallas import tpu as pltpu

# ---------------------------------------------------------------------------
# Module-level "globals" from RHI_Test.py, chosen deterministically in-script.
# ---------------------------------------------------------------------------
NUM_NEURON = 128          # num_neuron
SIMULATION_TIME = 50      # Simulation_time
I_MAX = 100.0             # I_max
PARAM_THRESHOLD = 30.0    # param_threshold
PARAM_A = 0.02            # param_a
PARAM_B = 0.2             # param_b
PARAM_C = -65.0           # param_c
PARAM_D = 8.0             # param_d
PARAM_MEM = -70.0         # param_mem (reset membrane potential)
PARAM_U = -14.0           # param_u   (reset recovery variable)
PARAM_DT = 0.5            # param_dt
TRICK_ID = 0              # TrickID (0 -> simulate the Izhikevich node)

# Constant-folded Izhikevich coefficients (Python floats; folded at trace time).
# With v := dt*u:
#   mem += dt*(0.04*mem^2 + 5*mem + 140 - u + I)
#        == (dt*0.04)*mem^2 + (1 + 5*dt)*mem + dt*(140 + I) - v
#   u   += dt*a*(b*mem - u)  ==>  v' = (1 - dt*a)*v + (dt^2*a*b)*mem
#   spike: u += d            ==>  v += dt*d
C_MEM2 = PARAM_DT * 0.04                       # 0.02
C_MEM1 = 1.0 + 5.0 * PARAM_DT                  # 3.5
DRIVE_CONST = PARAM_DT * 140.0                 # 70.0
C_VV = 1.0 - PARAM_DT * PARAM_A                # 0.99
C_VM = PARAM_DT * PARAM_DT * PARAM_A * PARAM_B # 0.001
V_INIT = PARAM_DT * PARAM_U                    # -7.0
V_SPIKE_INC = PARAM_DT * PARAM_D               # 4.0
INV_T = 1.0 / SIMULATION_TIME

# Max batch-tile rows per grid step.  4 live (tile_b, 128) f32 arrays (mem, v,
# spk, drive) at tile_b=64 occupy 32 vregs -> no spills out of the 64-vreg file.
_MAX_TILE_B = 64


def _izh_step(mem, v, spk, drive):
    """One IzhNodeMU step; algebraically identical to the PyTorch update.

    Original ordering preserved: mem update -> u update (uses updated mem) ->
    threshold -> mem reset to c -> u += d on spiking neurons.  The recovery
    variable is carried as v = dt*u (same fixed point, one fewer multiply).
    """
    mem = mem * (C_MEM2 * mem + C_MEM1) + (drive - v)
    v = C_VV * v + C_VM * mem
    spiked = mem > PARAM_THRESHOLD
    mem = jnp.where(spiked, PARAM_C, mem)
    v = jnp.where(spiked, v + V_SPIKE_INC, v)
    spk = spk + spiked.astype(jnp.float32)
    return mem, v, spk


# ---------------------------------------------------------------------------
# Pallas kernel
# ---------------------------------------------------------------------------
def _m1net_kernel(inp_ref, frn_ref):
    """One batch tile of the M1Net forward pass; everything VMEM-resident.

    inp_ref : VMEM (tile_b, N) batch of `input` rows (firing-rate drives)
    frn_ref : VMEM (tile_b, N) output FR_n (mean firing rate over the sim)
    """
    input_r = jnp.round(inp_ref[...] * I_MAX)
    # Hoisted per-neuron drive term: dt*(140 + input_r).
    drive = DRIVE_CONST + PARAM_DT * input_r

    mem0 = jnp.full_like(input_r, PARAM_MEM)
    v0 = jnp.full_like(input_r, V_INIT)
    spk0 = jnp.zeros_like(input_r)

    def step(_, carry):
        mem, v, spk = carry
        return _izh_step(mem, v, spk, drive)

    _, _, spike = lax.fori_loop(
        0, SIMULATION_TIME, step, (mem0, v0, spk0), unroll=True
    )
    frn_ref[...] = spike * INV_T


def _round_up(x, m):
    return ((x + m - 1) // m) * m


def _pick_tile(b):
    """Batch-tile rows: multiple of 8 (full sublanes), <= _MAX_TILE_B so the
    loop carry stays inside the vreg file.  Small batches => one grid step
    (amortize per-step overhead); large batches => >=2 tiles so v7x megacore
    can shard the grid across TensorCores."""
    return min(_MAX_TILE_B, _round_up(b, 8))


@jax.jit
def m1net_forward(inp):
    """M1Net forward.  inp: (N,) or (B, N) float32; returns FR_n, same shape.

    Independent forward calls are batched along the leading axis so each VPU
    op works on full (8,128)-or-larger vreg stacks.
    """
    squeeze = inp.ndim == 1
    x = inp.reshape(1, -1) if squeeze else inp
    b, n = x.shape
    x = x.astype(jnp.float32)

    tile_b = _pick_tile(b)
    b_pad = _round_up(b, tile_b)
    if b_pad != b:
        x = jnp.pad(x, ((0, b_pad - b), (0, 0)))
    grid = (b_pad // tile_b,)

    frn = pl.pallas_call(
        _m1net_kernel,
        out_shape=jax.ShapeDtypeStruct((b_pad, n), jnp.float32),
        grid_spec=pltpu.PrefetchScalarGridSpec(
            num_scalar_prefetch=0,
            grid=grid,
            in_specs=[pl.BlockSpec((tile_b, n), lambda i: (i, 0))],
            out_specs=pl.BlockSpec((tile_b, n), lambda i: (i, 0)),
        ),
        compiler_params=pltpu.CompilerParams(
            dimension_semantics=("parallel",)
        ),
    )(x)

    frn = frn[:b]
    return frn.reshape(-1) if squeeze else frn


# ---------------------------------------------------------------------------
# Pure-JAX reference (mirrors the PyTorch M1Net forward, TrickID == 0 branch).
# Uses the same algebraically-equivalent folded update via _izh_step so the
# comparison against the kernel is exact in float32.
# ---------------------------------------------------------------------------
def m1net_reference(inp):
    x = (inp.reshape(1, -1) if inp.ndim == 1 else inp).astype(jnp.float32)
    input_r = jnp.round(x * I_MAX)
    drive = DRIVE_CONST + PARAM_DT * input_r

    mem = jnp.full_like(input_r, PARAM_MEM)
    v = jnp.full_like(input_r, V_INIT)
    spk = jnp.zeros_like(input_r)
    for _ in range(SIMULATION_TIME):
        mem, v, spk = _izh_step(mem, v, spk, drive)
    fr_n = spk * INV_T
    return fr_n.reshape(inp.shape)


# ---------------------------------------------------------------------------
if __name__ == "__main__":
    key = jax.random.PRNGKey(0)

    # Batch of 16 independent M1Net forward calls, each over num_neuron=128
    # neurons, with firing-rate inputs in [0, 1) (so input_r in [0, I_max)).
    B = 16
    inp = jax.random.uniform(key, (B, NUM_NEURON), jnp.float32)

    fr_n = m1net_forward(inp)
    jax.block_until_ready(fr_n)

    fr_n_ref = m1net_reference(inp)
    assert fr_n.shape == (B, NUM_NEURON)
    assert jnp.allclose(fr_n, fr_n_ref, atol=1e-5, rtol=1e-5), "FR_n mismatch (batched)"

    # The module's native single-vector call path: input of shape (num_neuron,).
    fr_single = m1net_forward(inp[0])
    jax.block_until_ready(fr_single)
    assert fr_single.shape == (NUM_NEURON,)
    assert jnp.allclose(fr_single, fr_n_ref[0], atol=1e-5, rtol=1e-5), "FR_n mismatch (single)"

    print("KERNEL_OK")
</pallas_src>

<mosaic_0001>
module attributes {stable_mosaic.version = 11 : i64} {
  func.func @_m1net_kernel(%arg0: i32, %arg1: memref<16x128xf32, #tpu.memory_space<vmem>>, %arg2: memref<16x128xf32, #tpu.memory_space<vmem>>) attributes {dimension_semantics = [#tpu.dimension_semantics<parallel>], iteration_bounds = array<i64: 1>, scalar_prefetch = 0 : i64, scratch_operands = 0 : i64, tpu.core_type = #tpu.core_type<tc>, window_params = [{transform_indices = @transform_0, window_bounds = array<i64: 16, 128>}, {transform_indices = @transform_1, window_bounds = array<i64: 16, 128>}]} {
    %c0 = arith.constant 0 : index
    %c0_0 = arith.constant 0 : index
    %0 = vector.load %arg1[%c0, %c0_0] : memref<16x128xf32, #tpu.memory_space<vmem>>, vector<16x128xf32>
    %cst = arith.constant 1.000000e+02 : f32
    %1 = vector.broadcast %cst : f32 to vector<16x128xf32>
    %2 = arith.mulf %0, %1 : vector<16x128xf32>
    %3 = math.roundeven %2 : vector<16x128xf32>
    %cst_1 = arith.constant 5.000000e-01 : f32
    %4 = vector.broadcast %cst_1 : f32 to vector<16x128xf32>
    %5 = arith.mulf %4, %3 : vector<16x128xf32>
    %cst_2 = arith.constant 7.000000e+01 : f32
    %6 = vector.broadcast %cst_2 : f32 to vector<16x128xf32>
    %7 = arith.addf %6, %5 : vector<16x128xf32>
    %cst_3 = arith.constant -7.000000e+01 : f32
    %8 = vector.broadcast %cst_3 : f32 to vector<16x128xf32>
    %cst_4 = arith.constant -7.000000e+00 : f32
    %9 = vector.broadcast %cst_4 : f32 to vector<16x128xf32>
    %cst_5 = arith.constant 0.000000e+00 : f32
    %10 = vector.broadcast %cst_5 : f32 to vector<16x128xf32>
    %c0_i32 = arith.constant 0 : i32
    %cst_6 = arith.constant 2.000000e-02 : f32
    %11 = vector.broadcast %cst_6 : f32 to vector<16x128xf32>
    %12 = arith.mulf %11, %8 : vector<16x128xf32>
    %cst_7 = arith.constant 3.500000e+00 : f32
    %13 = vector.broadcast %cst_7 : f32 to vector<16x128xf32>
    %14 = arith.addf %12, %13 : vector<16x128xf32>
    %15 = arith.mulf %8, %14 : vector<16x128xf32>
    %16 = arith.subf %7, %9 : vector<16x128xf32>
    %17 = arith.addf %15, %16 : vector<16x128xf32>
    %cst_8 = arith.constant 9.900000e-01 : f32
    %18 = vector.broadcast %cst_8 : f32 to vector<16x128xf32>
    %19 = arith.mulf %18, %9 : vector<16x128xf32>
    %cst_9 = arith.constant 1.000000e-03 : f32
    %20 = vector.broadcast %cst_9 : f32 to vector<16x128xf32>
    %21 = arith.mulf %20, %17 : vector<16x128xf32>
    %22 = arith.addf %19, %21 : vector<16x128xf32>
    %cst_10 = arith.constant 3.000000e+01 : f32
    %23 = vector.broadcast %cst_10 : f32 to vector<16x128xf32>
    %24 = arith.cmpf ogt, %17, %23 : vector<16x128xf32>
    %cst_11 = arith.constant -6.500000e+01 : f32
    %25 = vector.broadcast %cst_11 : f32 to vector<16x128xf32>
    %26 = arith.select %24, %25, %17 : vector<16x128xi1>, vector<16x128xf32>
    %cst_12 = arith.constant 4.000000e+00 : f32
    %27 = vector.broadcast %cst_12 : f32 to vector<16x128xf32>
    %28 = arith.addf %22, %27 : vector<16x128xf32>
    %29 = arith.select %24, %28, %22 : vector<16x128xi1>, vector<16x128xf32>
    %30 = arith.extui %24 : vector<16x128xi1> to vector<16x128xi32>
    %31 = arith.sitofp %30 : vector<16x128xi32> to vector<16x128xf32>
    %32 = arith.addf %10, %31 : vector<16x128xf32>
    %c1_i32 = arith.constant 1 : i32
    %cst_13 = arith.constant 2.000000e-02 : f32
    %33 = vector.broadcast %cst_13 : f32 to vector<16x128xf32>
    %34 = arith.mulf %33, %26 : vector<16x128xf32>
    %cst_14 = arith.constant 3.500000e+00 : f32
    %35 = vector.broadcast %cst_14 : f32 to vector<16x128xf32>
    %36 = arith.addf %34, %35 : vector<16x128xf32>
    %37 = arith.mulf %26, %36 : vector<16x128xf32>
    %38 = arith.subf %7, %29 : vector<16x128xf32>
    %39 = arith.addf %37, %38 : vector<16x128xf32>
    %cst_15 = arith.constant 9.900000e-01 : f32
    %40 = vector.broadcast %cst_15 : f32 to vector<16x128xf32>
    %41 = arith.mulf %40, %29 : vector<16x128xf32>
    %cst_16 = arith.constant 1.000000e-03 : f32
    %42 = vector.broadcast %cst_16 : f32 to vector<16x128xf32>
    %43 = arith.mulf %42, %39 : vector<16x128xf32>
    %44 = arith.addf %41, %43 : vector<16x128xf32>
    %cst_17 = arith.constant 3.000000e+01 : f32
    %45 = vector.broadcast %cst_17 : f32 to vector<16x128xf32>
    %46 = arith.cmpf ogt, %39, %45 : vector<16x128xf32>
    %cst_18 = arith.constant -6.500000e+01 : f32
    %47 = vector.broadcast %cst_18 : f32 to vector<16x128xf32>
    %48 = arith.select %46, %47, %39 : vector<16x128xi1>, vector<16x128xf32>
    %cst_19 = arith.constant 4.000000e+00 : f32
    %49 = vector.broadcast %cst_19 : f32 to vector<16x128xf32>
    %50 = arith.addf %44, %49 : vector<16x128xf32>
    %51 = arith.select %46, %50, %44 : vector<16x128xi1>, vector<16x128xf32>
    %52 = arith.extui %46 : vector<16x128xi1> to vector<16x128xi32>
    %53 = arith.sitofp %52 : vector<16x128xi32> to vector<16x128xf32>
    %54 = arith.addf %32, %53 : vector<16x128xf32>
    %c2_i32 = arith.constant 2 : i32
    %cst_20 = arith.constant 2.000000e-02 : f32
    %55 = vector.broadcast %cst_20 : f32 to vector<16x128xf32>
    %56 = arith.mulf %55, %48 : vector<16x128xf32>
    %cst_21 = arith.constant 3.500000e+00 : f32
    %57 = vector.broadcast %cst_21 : f32 to vector<16x128xf32>
    %58 = arith.addf %56, %57 : vector<16x128xf32>
    %59 = arith.mulf %48, %58 : vector<16x128xf32>
    %60 = arith.subf %7, %51 : vector<16x128xf32>
    %61 = arith.addf %59, %60 : vector<16x128xf32>
    %cst_22 = arith.constant 9.900000e-01 : f32
    %62 = vector.broadcast %cst_22 : f32 to vector<16x128xf32>
    %63 = arith.mulf %62, %51 : vector<16x128xf32>
    %cst_23 = arith.constant 1.000000e-03 : f32
    %64 = vector.broadcast %cst_23 : f32 to vector<16x128xf32>
    %65 = arith.mulf %64, %61 : vector<16x128xf32>
    %66 = arith.addf %63, %65 : vector<16x128xf32>
    %cst_24 = arith.constant 3.000000e+01 : f32
    %67 = vector.broadcast %cst_24 : f32 to vector<16x128xf32>
    %68 = arith.cmpf ogt, %61, %67 : vector<16x128xf32>
    %cst_25 = arith.constant -6.500000e+01 : f32
    %69 = vector.broadcast %cst_25 : f32 to vector<16x128xf32>
    %70 = arith.select %68, %69, %61 : vector<16x128xi1>, vector<16x128xf32>
    %cst_26 = arith.constant 4.000000e+00 : f32
    %71 = vector.broadcast %cst_26 : f32 to vector<16x128xf32>
    %72 = arith.addf %66, %71 : vector<16x128xf32>
    %73 = arith.select %68, %72, %66 : vector<16x128xi1>, vector<16x128xf32>
    %74 = arith.extui %68 : vector<16x128xi1> to vector<16x128xi32>
    %75 = arith.sitofp %74 : vector<16x128xi32> to vector<16x128xf32>
    %76 = arith.addf %54, %75 : vector<16x128xf32>
    %c3_i32 = arith.constant 3 : i32
    %cst_27 = arith.constant 2.000000e-02 : f32
    %77 = vector.broadcast %cst_27 : f32 to vector<16x128xf32>
    %78 = arith.mulf %77, %70 : vector<16x128xf32>
    %cst_28 = arith.constant 3.500000e+00 : f32
    %79 = vector.broadcast %cst_28 : f32 to vector<16x128xf32>
    %80 = arith.addf %78, %79 : vector<16x128xf32>
    %81 = arith.mulf %70, %80 : vector<16x128xf32>
    %82 = arith.subf %7, %73 : vector<16x128xf32>
    %83 = arith.addf %81, %82 : vector<16x128xf32>
    %cst_29 = arith.constant 9.900000e-01 : f32
    %84 = vector.broadcast %cst_29 : f32 to vector<16x128xf32>
    %85 = arith.mulf %84, %73 : vector<16x128xf32>
    %cst_30 = arith.constant 1.000000e-03 : f32
    %86 = vector.broadcast %cst_30 : f32 to vector<16x128xf32>
    %87 = arith.mulf %86, %83 : vector<16x128xf32>
    %88 = arith.addf %85, %87 : vector<16x128xf32>
    %cst_31 = arith.constant 3.000000e+01 : f32
    %89 = vector.broadcast %cst_31 : f32 to vector<16x128xf32>
    %90 = arith.cmpf ogt, %83, %89 : vector<16x128xf32>
    %cst_32 = arith.constant -6.500000e+01 : f32
    %91 = vector.broadcast %cst_32 : f32 to vector<16x128xf32>
    %92 = arith.select %90, %91, %83 : vector<16x128xi1>, vector<16x128xf32>
    %cst_33 = arith.constant 4.000000e+00 : f32
    %93 = vector.broadcast %cst_33 : f32 to vector<16x128xf32>
    %94 = arith.addf %88, %93 : vector<16x128xf32>
    %95 = arith.select %90, %94, %88 : vector<16x128xi1>, vector<16x128xf32>
    %96 = arith.extui %90 : vector<16x128xi1> to vector<16x128xi32>
    %97 = arith.sitofp %96 : vector<16x128xi32> to vector<16x128xf32>
    %98 = arith.addf %76, %97 : vector<16x128xf32>
    %c4_i32 = arith.constant 4 : i32
    %cst_34 = arith.constant 2.000000e-02 : f32
    %99 = vector.broadcast %cst_34 : f32 to vector<16x128xf32>
    %100 = arith.mulf %99, %92 : vector<16x128xf32>
    %cst_35 = arith.constant 3.500000e+00 : f32
    %101 = vector.broadcast %cst_35 : f32 to vector<16x128xf32>
    %102 = arith.addf %100, %101 : vector<16x128xf32>
    %103 = arith.mulf %92, %102 : vector<16x128xf32>
    %104 = arith.subf %7, %95 : vector<16x128xf32>
    %105 = arith.addf %103, %104 : vector<16x128xf32>
    %cst_36 = arith.constant 9.900000e-01 : f32
    %106 = vector.broadcast %cst_36 : f32 to vector<16x128xf32>
    %107 = arith.mulf %106, %95 : vector<16x128xf32>
    %cst_37 = arith.constant 1.000000e-03 : f32
    %108 = vector.broadcast %cst_37 : f32 to vector<16x128xf32>
    %109 = arith.mulf %108, %105 : vector<16x128xf32>
    %110 = arith.addf %107, %109 : vector<16x128xf32>
    %cst_38 = arith.constant 3.000000e+01 : f32
    %111 = vector.broadcast %cst_38 : f32 to vector<16x128xf32>
    %112 = arith.cmpf ogt, %105, %111 : vector<16x128xf32>
    %cst_39 = arith.constant -6.500000e+01 : f32
    %113 = vector.broadcast %cst_39 : f32 to vector<16x128xf32>
    %114 = arith.select %112, %113, %105 : vector<16x128xi1>, vector<16x128xf32>
    %cst_40 = arith.constant 4.000000e+00 : f32
    %115 = vector.broadcast %cst_40 : f32 to vector<16x128xf32>
    %116 = arith.addf %110, %115 : vector<16x128xf32>
    %117 = arith.select %112, %116, %110 : vector<16x128xi1>, vector<16x128xf32>
    %118 = arith.extui %112 : vector<16x128xi1> to vector<16x128xi32>
    %119 = arith.sitofp %118 : vector<16x128xi32> to vector<16x128xf32>
    %120 = arith.addf %98, %119 : vector<16x128xf32>
    %c5_i32 = arith.constant 5 : i32
    %cst_41 = arith.constant 2.000000e-02 : f32
    %121 = vector.broadcast %cst_41 : f32 to vector<16x128xf32>
    %122 = arith.mulf %121, %114 : vector<16x128xf32>
    %cst_42 = arith.constant 3.500000e+00 : f32
    %123 = vector.broadcast %cst_42 : f32 to vector<16x128xf32>
    %124 = arith.addf %122, %123 : vector<16x128xf32>
    %125 = arith.mulf %114, %124 : vector<16x128xf32>
    %126 = arith.subf %7, %117 : vector<16x128xf32>
    %127 = arith.addf %125, %126 : vector<16x128xf32>
    %cst_43 = arith.constant 9.900000e-01 : f32
    %128 = vector.broadcast %cst_43 : f32 to vector<16x128xf32>
    %129 = arith.mulf %128, %117 : vector<16x128xf32>
    %cst_44 = arith.constant 1.000000e-03 : f32
    %130 = vector.broadcast %cst_44 : f32 to vector<16x128xf32>
    %131 = arith.mulf %130, %127 : vector<16x128xf32>
    %132 = arith.addf %129, %131 : vector<16x128xf32>
    %cst_45 = arith.constant 3.000000e+01 : f32
    %133 = vector.broadcast %cst_45 : f32 to vector<16x128xf32>
    %134 = arith.cmpf ogt, %127, %133 : vector<16x128xf32>
    %cst_46 = arith.constant -6.500000e+01 : f32
    %135 = vector.broadcast %cst_46 : f32 to vector<16x128xf32>
    %136 = arith.select %134, %135, %127 : vector<16x128xi1>, vector<16x128xf32>
    %cst_47 = arith.constant 4.000000e+00 : f32
    %137 = vector.broadcast %cst_47 : f32 to vector<16x128xf32>
    %138 = arith.addf %132, %137 : vector<16x128xf32>
    %139 = arith.select %134, %138, %132 : vector<16x128xi1>, vector<16x128xf32>
    %140 = arith.extui %134 : vector<16x128xi1> to vector<16x128xi32>
    %141 = arith.sitofp %140 : vector<16x128xi32> to vector<16x128xf32>
    %142 = arith.addf %120, %141 : vector<16x128xf32>
    %c6_i32 = arith.constant 6 : i32
    %cst_48 = arith.constant 2.000000e-02 : f32
    %143 = vector.broadcast %cst_48 : f32 to vector<16x128xf32>
    %144 = arith.mulf %143, %136 : vector<16x128xf32>
    %cst_49 = arith.constant 3.500000e+00 : f32
    %145 = vector.broadcast %cst_49 : f32 to vector<16x128xf32>
    %146 = arith.addf %144, %145 : vector<16x128xf32>
    %147 = arith.mulf %136, %146 : vector<16x128xf32>
    %148 = arith.subf %7, %139 : vector<16x128xf32>
    %149 = arith.addf %147, %148 : vector<16x128xf32>
    %cst_50 = arith.constant 9.900000e-01 : f32
    %150 = vector.broadcast %cst_50 : f32 to vector<16x128xf32>
    %151 = arith.mulf %150, %139 : vector<16x128xf32>
    %cst_51 = arith.constant 1.000000e-03 : f32
    %152 = vector.broadcast %cst_51 : f32 to vector<16x128xf32>
    %153 = arith.mulf %152, %149 : vector<16x128xf32>
    %154 = arith.addf %151, %153 : vector<16x128xf32>
    %cst_52 = arith.constant 3.000000e+01 : f32
    %155 = vector.broadcast %cst_52 : f32 to vector<16x128xf32>
    %156 = arith.cmpf ogt, %149, %155 : vector<16x128xf32>
    %cst_53 = arith.constant -6.500000e+01 : f32
    %157 = vector.broadcast %cst_53 : f32 to vector<16x128xf32>
    %158 = arith.select %156, %157, %149 : vector<16x128xi1>, vector<16x128xf32>
    %cst_54 = arith.constant 4.000000e+00 : f32
    %159 = vector.broadcast %cst_54 : f32 to vector<16x128xf32>
    %160 = arith.addf %154, %159 : vector<16x128xf32>
    %161 = arith.select %156, %160, %154 : vector<16x128xi1>, vector<16x128xf32>
    %162 = arith.extui %156 : vector<16x128xi1> to vector<16x128xi32>
    %163 = arith.sitofp %162 : vector<16x128xi32> to vector<16x128xf32>
    %164 = arith.addf %142, %163 : vector<16x128xf32>
    %c7_i32 = arith.constant 7 : i32
    %cst_55 = arith.constant 2.000000e-02 : f32
    %165 = vector.broadcast %cst_55 : f32 to vector<16x128xf32>
    %166 = arith.mulf %165, %158 : vector<16x128xf32>
    %cst_56 = arith.constant 3.500000e+00 : f32
    %167 = vector.broadcast %cst_56 : f32 to vector<16x128xf32>
    %168 = arith.addf %166, %167 : vector<16x128xf32>
    %169 = arith.mulf %158, %168 : vector<16x128xf32>
    %170 = arith.subf %7, %161 : vector<16x128xf32>
    %171 = arith.addf %169, %170 : vector<16x128xf32>
    %cst_57 = arith.constant 9.900000e-01 : f32
    %172 = vector.broadcast %cst_57 : f32 to vector<16x128xf32>
    %173 = arith.mulf %172, %161 : vector<16x128xf32>
    %cst_58 = arith.constant 1.000000e-03 : f32
    %174 = vector.broadcast %cst_58 : f32 to vector<16x128xf32>
    %175 = arith.mulf %174, %171 : vector<16x128xf32>
    %176 = arith.addf %173, %175 : vector<16x128xf32>
    %cst_59 = arith.constant 3.000000e+01 : f32
    %177 = vector.broadcast %cst_59 : f32 to vector<16x128xf32>
    %178 = arith.cmpf ogt, %171, %177 : vector<16x128xf32>
    %cst_60 = arith.constant -6.500000e+01 : f32
    %179 = vector.broadcast %cst_60 : f32 to vector<16x128xf32>
    %180 = arith.select %178, %179, %171 : vector<16x128xi1>, vector<16x128xf32>
    %cst_61 = arith.constant 4.000000e+00 : f32
    %181 = vector.broadcast %cst_61 : f32 to vector<16x128xf32>
    %182 = arith.addf %176, %181 : vector<16x128xf32>
    %183 = arith.select %178, %182, %176 : vector<16x128xi1>, vector<16x128xf32>
    %184 = arith.extui %178 : vector<16x128xi1> to vector<16x128xi32>
    %185 = arith.sitofp %184 : vector<16x128xi32> to vector<16x128xf32>
    %186 = arith.addf %164, %185 : vector<16x128xf32>
    %c8_i32 = arith.constant 8 : i32
    %cst_62 = arith.constant 2.000000e-02 : f32
    %187 = vector.broadcast %cst_62 : f32 to vector<16x128xf32>
    %188 = arith.mulf %187, %180 : vector<16x128xf32>
    %cst_63 = arith.constant 3.500000e+00 : f32
    %189 = vector.broadcast %cst_63 : f32 to vector<16x128xf32>
    %190 = arith.addf %188, %189 : vector<16x128xf32>
    %191 = arith.mulf %180, %190 : vector<16x128xf32>
    %192 = arith.subf %7, %183 : vector<16x128xf32>
    %193 = arith.addf %191, %192 : vector<16x128xf32>
    %cst_64 = arith.constant 9.900000e-01 : f32
    %194 = vector.broadcast %cst_64 : f32 to vector<16x128xf32>
    %195 = arith.mulf %194, %183 : vector<16x128xf32>
    %cst_65 = arith.constant 1.000000e-03 : f32
    %196 = vector.broadcast %cst_65 : f32 to vector<16x128xf32>
    %197 = arith.mulf %196, %193 : vector<16x128xf32>
    %198 = arith.addf %195, %197 : vector<16x128xf32>
    %cst_66 = arith.constant 3.000000e+01 : f32
    %199 = vector.broadcast %cst_66 : f32 to vector<16x128xf32>
    %200 = arith.cmpf ogt, %193, %199 : vector<16x128xf32>
    %cst_67 = arith.constant -6.500000e+01 : f32
    %201 = vector.broadcast %cst_67 : f32 to vector<16x128xf32>
    %202 = arith.select %200, %201, %193 : vector<16x128xi1>, vector<16x128xf32>
    %cst_68 = arith.constant 4.000000e+00 : f32
    %203 = vector.broadcast %cst_68 : f32 to vector<16x128xf32>
    %204 = arith.addf %198, %203 : vector<16x128xf32>
    %205 = arith.select %200, %204, %198 : vector<16x128xi1>, vector<16x128xf32>
    %206 = arith.extui %200 : vector<16x128xi1> to vector<16x128xi32>
    %207 = arith.sitofp %206 : vector<16x128xi32> to vector<16x128xf32>
    %208 = arith.addf %186, %207 : vector<16x128xf32>
    %c9_i32 = arith.constant 9 : i32
    %cst_69 = arith.constant 2.000000e-02 : f32
    %209 = vector.broadcast %cst_69 : f32 to vector<16x128xf32>
    %210 = arith.mulf %209, %202 : vector<16x128xf32>
    %cst_70 = arith.constant 3.500000e+00 : f32
    %211 = vector.broadcast %cst_70 : f32 to vector<16x128xf32>
    %212 = arith.addf %210, %211 : vector<16x128xf32>
    %213 = arith.mulf %202, %212 : vector<16x128xf32>
    %214 = arith.subf %7, %205 : vector<16x128xf32>
    %215 = arith.addf %213, %214 : vector<16x128xf32>
    %cst_71 = arith.constant 9.900000e-01 : f32
    %216 = vector.broadcast %cst_71 : f32 to vector<16x128xf32>
    %217 = arith.mulf %216, %205 : vector<16x128xf32>
    %cst_72 = arith.constant 1.000000e-03 : f32
    %218 = vector.broadcast %cst_72 : f32 to vector<16x128xf32>
    %219 = arith.mulf %218, %215 : vector<16x128xf32>
    %220 = arith.addf %217, %219 : vector<16x128xf32>
    %cst_73 = arith.constant 3.000000e+01 : f32
    %221 = vector.broadcast %cst_73 : f32 to vector<16x128xf32>
    %222 = arith.cmpf ogt, %215, %221 : vector<16x128xf32>
    %cst_74 = arith.constant -6.500000e+01 : f32
    %223 = vector.broadcast %cst_74 : f32 to vector<16x128xf32>
    %224 = arith.select %222, %223, %215 : vector<16x128xi1>, vector<16x128xf32>
    %cst_75 = arith.constant 4.000000e+00 : f32
    %225 = vector.broadcast %cst_75 : f32 to vector<16x128xf32>
    %226 = arith.addf %220, %225 : vector<16x128xf32>
    %227 = arith.select %222, %226, %220 : vector<16x128xi1>, vector<16x128xf32>
    %228 = arith.extui %222 : vector<16x128xi1> to vector<16x128xi32>
    %229 = arith.sitofp %228 : vector<16x128xi32> to vector<16x128xf32>
    %230 = arith.addf %208, %229 : vector<16x128xf32>
    %c10_i32 = arith.constant 10 : i32
    %cst_76 = arith.constant 2.000000e-02 : f32
    %231 = vector.broadcast %cst_76 : f32 to vector<16x128xf32>
    %232 = arith.mulf %231, %224 : vector<16x128xf32>
    %cst_77 = arith.constant 3.500000e+00 : f32
    %233 = vector.broadcast %cst_77 : f32 to vector<16x128xf32>
    %234 = arith.addf %232, %233 : vector<16x128xf32>
    %235 = arith.mulf %224, %234 : vector<16x128xf32>
    %236 = arith.subf %7, %227 : vector<16x128xf32>
    %237 = arith.addf %235, %236 : vector<16x128xf32>
    %cst_78 = arith.constant 9.900000e-01 : f32
    %238 = vector.broadcast %cst_78 : f32 to vector<16x128xf32>
    %239 = arith.mulf %238, %227 : vector<16x128xf32>
    %cst_79 = arith.constant 1.000000e-03 : f32
    %240 = vector.broadcast %cst_79 : f32 to vector<16x128xf32>
    %241 = arith.mulf %240, %237 : vector<16x128xf32>
    %242 = arith.addf %239, %241 : vector<16x128xf32>
    %cst_80 = arith.constant 3.000000e+01 : f32
    %243 = vector.broadcast %cst_80 : f32 to vector<16x128xf32>
    %244 = arith.cmpf ogt, %237, %243 : vector<16x128xf32>
    %cst_81 = arith.constant -6.500000e+01 : f32
    %245 = vector.broadcast %cst_81 : f32 to vector<16x128xf32>
    %246 = arith.select %244, %245, %237 : vector<16x128xi1>, vector<16x128xf32>
    %cst_82 = arith.constant 4.000000e+00 : f32
    %247 = vector.broadcast %cst_82 : f32 to vector<16x128xf32>
    %248 = arith.addf %242, %247 : vector<16x128xf32>
    %249 = arith.select %244, %248, %242 : vector<16x128xi1>, vector<16x128xf32>
    %250 = arith.extui %244 : vector<16x128xi1> to vector<16x128xi32>
    %251 = arith.sitofp %250 : vector<16x128xi32> to vector<16x128xf32>
    %252 = arith.addf %230, %251 : vector<16x128xf32>
    %c11_i32 = arith.constant 11 : i32
    %cst_83 = arith.constant 2.000000e-02 : f32
    %253 = vector.broadcast %cst_83 : f32 to vector<16x128xf32>
    %254 = arith.mulf %253, %246 : vector<16x128xf32>
    %cst_84 = arith.constant 3.500000e+00 : f32
    %255 = vector.broadcast %cst_84 : f32 to vector<16x128xf32>
    %256 = arith.addf %254, %255 : vector<16x128xf32>
    %257 = arith.mulf %246, %256 : vector<16x128xf32>
    %258 = arith.subf %7, %249 : vector<16x128xf32>
    %259 = arith.addf %257, %258 : vector<16x128xf32>
    %cst_85 = arith.constant 9.900000e-01 : f32
    %260 = vector.broadcast %cst_85 : f32 to vector<16x128xf32>
    %261 = arith.mulf %260, %249 : vector<16x128xf32>
    %cst_86 = arith.constant 1.000000e-03 : f32
    %262 = vector.broadcast %cst_86 : f32 to vector<16x128xf32>
    %263 = arith.mulf %262, %259 : vector<16x128xf32>
    %264 = arith.addf %261, %263 : vector<16x128xf32>
    %cst_87 = arith.constant 3.000000e+01 : f32
    %265 = vector.broadcast %cst_87 : f32 to vector<16x128xf32>
    %266 = arith.cmpf ogt, %259, %265 : vector<16x128xf32>
    %cst_88 = arith.constant -6.500000e+01 : f32
    %267 = vector.broadcast %cst_88 : f32 to vector<16x128xf32>
    %268 = arith.select %266, %267, %259 : vector<16x128xi1>, vector<16x128xf32>
    %cst_89 = arith.constant 4.000000e+00 : f32
    %269 = vector.broadcast %cst_89 : f32 to vector<16x128xf32>
    %270 = arith.addf %264, %269 : vector<16x128xf32>
    %271 = arith.select %266, %270, %264 : vector<16x128xi1>, vector<16x128xf32>
    %272 = arith.extui %266 : vector<16x128xi1> to vector<16x128xi32>
    %273 = arith.sitofp %272 : vector<16x128xi32> to vector<16x128xf32>
    %274 = arith.addf %252, %273 : vector<16x128xf32>
    %c12_i32 = arith.constant 12 : i32
    %cst_90 = arith.constant 2.000000e-02 : f32
    %275 = vector.broadcast %cst_90 : f32 to vector<16x128xf32>
    %276 = arith.mulf %275, %268 : vector<16x128xf32>
    %cst_91 = arith.constant 3.500000e+00 : f32
    %277 = vector.broadcast %cst_91 : f32 to vector<16x128xf32>
    %278 = arith.addf %276, %277 : vector<16x128xf32>
    %279 = arith.mulf %268, %278 : vector<16x128xf32>
    %280 = arith.subf %7, %271 : vector<16x128xf32>
    %281 = arith.addf %279, %280 : vector<16x128xf32>
    %cst_92 = arith.constant 9.900000e-01 : f32
    %282 = vector.broadcast %cst_92 : f32 to vector<16x128xf32>
    %283 = arith.mulf %282, %271 : vector<16x128xf32>
    %cst_93 = arith.constant 1.000000e-03 : f32
    %284 = vector.broadcast %cst_93 : f32 to vector<16x128xf32>
    %285 = arith.mulf %284, %281 : vector<16x128xf32>
    %286 = arith.addf %283, %285 : vector<16x128xf32>
    %cst_94 = arith.constant 3.000000e+01 : f32
    %287 = vector.broadcast %cst_94 : f32 to vector<16x128xf32>
    %288 = arith.cmpf ogt, %281, %287 : vector<16x128xf32>
    %cst_95 = arith.constant -6.500000e+01 : f32
    %289 = vector.broadcast %cst_95 : f32 to vector<16x128xf32>
    %290 = arith.select %288, %289, %281 : vector<16x128xi1>, vector<16x128xf32>
    %cst_96 = arith.constant 4.000000e+00 : f32
    %291 = vector.broadcast %cst_96 : f32 to vector<16x128xf32>
    %292 = arith.addf %286, %291 : vector<16x128xf32>
    %293 = arith.select %288, %292, %286 : vector<16x128xi1>, vector<16x128xf32>
    %294 = arith.extui %288 : vector<16x128xi1> to vector<16x128xi32>
    %295 = arith.sitofp %294 : vector<16x128xi32> to vector<16x128xf32>
    %296 = arith.addf %274, %295 : vector<16x128xf32>
    %c13_i32 = arith.constant 13 : i32
    %cst_97 = arith.constant 2.000000e-02 : f32
    %297 = vector.broadcast %cst_97 : f32 to vector<16x128xf32>
    %298 = arith.mulf %297, %290 : vector<16x128xf32>
    %cst_98 = arith.constant 3.500000e+00 : f32
    %299 = vector.broadcast %cst_98 : f32 to vector<16x128xf32>
    %300 = arith.addf %298, %299 : vector<16x128xf32>
    %301 = arith.mulf %290, %300 : vector<16x128xf32>
    %302 = arith.subf %7, %293 : vector<16x128xf32>
    %303 = arith.addf %301, %302 : vector<16x128xf32>
    %cst_99 = arith.constant 9.900000e-01 : f32
    %304 = vector.broadcast %cst_99 : f32 to vector<16x128xf32>
    %305 = arith.mulf %304, %293 : vector<16x128xf32>
    %cst_100 = arith.constant 1.000000e-03 : f32
    %306 = vector.broadcast %cst_100 : f32 to vector<16x128xf32>
    %307 = arith.mulf %306, %303 : vector<16x128xf32>
    %308 = arith.addf %305, %307 : vector<16x128xf32>
    %cst_101 = arith.constant 3.000000e+01 : f32
    %309 = vector.broadcast %cst_101 : f32 to vector<16x128xf32>
    %310 = arith.cmpf ogt, %303, %309 : vector<16x128xf32>
    %cst_102 = arith.constant -6.500000e+01 : f32
    %311 = vector.broadcast %cst_102 : f32 to vector<16x128xf32>
    %312 = arith.select %310, %311, %303 : vector<16x128xi1>, vector<16x128xf32>
    %cst_103 = arith.constant 4.000000e+00 : f32
    %313 = vector.broadcast %cst_103 : f32 to vector<16x128xf32>
    %314 = arith.addf %308, %313 : vector<16x128xf32>
    %315 = arith.select %310, %314, %308 : vector<16x128xi1>, vector<16x128xf32>
    %316 = arith.extui %310 : vector<16x128xi1> to vector<16x128xi32>
    %317 = arith.sitofp %316 : vector<16x128xi32> to vector<16x128xf32>
    %318 = arith.addf %296, %317 : vector<16x128xf32>
    %c14_i32 = arith.constant 14 : i32
    %cst_104 = arith.constant 2.000000e-02 : f32
    %319 = vector.broadcast %cst_104 : f32 to vector<16x128xf32>
    %320 = arith.mulf %319, %312 : vector<16x128xf32>
    %cst_105 = arith.constant 3.500000e+00 : f32
    %321 = vector.broadcast %cst_105 : f32 to vector<16x128xf32>
    %322 = arith.addf %320, %321 : vector<16x128xf32>
    %323 = arith.mulf %312, %322 : vector<16x128xf32>
    %324 = arith.subf %7, %315 : vector<16x128xf32>
    %325 = arith.addf %323, %324 : vector<16x128xf32>
    %cst_106 = arith.constant 9.900000e-01 : f32
    %326 = vector.broadcast %cst_106 : f32 to vector<16x128xf32>
    %327 = arith.mulf %326, %315 : vector<16x128xf32>
    %cst_107 = arith.constant 1.000000e-03 : f32
    %328 = vector.broadcast %cst_107 : f32 to vector<16x128xf32>
    %329 = arith.mulf %328, %325 : vector<16x128xf32>
    %330 = arith.addf %327, %329 : vector<16x128xf32>
    %cst_108 = arith.constant 3.000000e+01 : f32
    %331 = vector.broadcast %cst_108 : f32 to vector<16x128xf32>
    %332 = arith.cmpf ogt, %325, %331 : vector<16x128xf32>
    %cst_109 = arith.constant -6.500000e+01 : f32
    %333 = vector.broadcast %cst_109 : f32 to vector<16x128xf32>
    %334 = arith.select %332, %333, %325 : vector<16x128xi1>, vector<16x128xf32>
    %cst_110 = arith.constant 4.000000e+00 : f32
    %335 = vector.broadcast %cst_110 : f32 to vector<16x128xf32>
    %336 = arith.addf %330, %335 : vector<16x128xf32>
    %337 = arith.select %332, %336, %330 : vector<16x128xi1>, vector<16x128xf32>
    %338 = arith.extui %332 : vector<16x128xi1> to vector<16x128xi32>
    %339 = arith.sitofp %338 : vector<16x128xi32> to vector<16x128xf32>
    %340 = arith.addf %318, %339 : vector<16x128xf32>
    %c15_i32 = arith.constant 15 : i32
    %cst_111 = arith.constant 2.000000e-02 : f32
    %341 = vector.broadcast %cst_111 : f32 to vector<16x128xf32>
    %342 = arith.mulf %341, %334 : vector<16x128xf32>
    %cst_112 = arith.constant 3.500000e+00 : f32
    %343 = vector.broadcast %cst_112 : f32 to vector<16x128xf32>
    %344 = arith.addf %342, %343 : vector<16x128xf32>
    %345 = arith.mulf %334, %344 : vector<16x128xf32>
    %346 = arith.subf %7, %337 : vector<16x128xf32>
    %347 = arith.addf %345, %346 : vector<16x128xf32>
    %cst_113 = arith.constant 9.900000e-01 : f32
    %348 = vector.broadcast %cst_113 : f32 to vector<16x128xf32>
    %349 = arith.mulf %348, %337 : vector<16x128xf32>
    %cst_114 = arith.constant 1.000000e-03 : f32
    %350 = vector.broadcast %cst_114 : f32 to vector<16x128xf32>
    %351 = arith.mulf %350, %347 : vector<16x128xf32>
    %352 = arith.addf %349, %351 : vector<16x128xf32>
    %cst_115 = arith.constant 3.000000e+01 : f32
    %353 = vector.broadcast %cst_115 : f32 to vector<16x128xf32>
    %354 = arith.cmpf ogt, %347, %353 : vector<16x128xf32>
    %cst_116 = arith.constant -6.500000e+01 : f32
    %355 = vector.broadcast %cst_116 : f32 to vector<16x128xf32>
    %356 = arith.select %354, %355, %347 : vector<16x128xi1>, vector<16x128xf32>
    %cst_117 = arith.constant 4.000000e+00 : f32
    %357 = vector.broadcast %cst_117 : f32 to vector<16x128xf32>
    %358 = arith.addf %352, %357 : vector<16x128xf32>
    %359 = arith.select %354, %358, %352 : vector<16x128xi1>, vector<16x128xf32>
    %360 = arith.extui %354 : vector<16x128xi1> to vector<16x128xi32>
    %361 = arith.sitofp %360 : vector<16x128xi32> to vector<16x128xf32>
    %362 = arith.addf %340, %361 : vector<16x128xf32>
    %c16_i32 = arith.constant 16 : i32
    %cst_118 = arith.constant 2.000000e-02 : f32
    %363 = vector.broadcast %cst_118 : f32 to vector<16x128xf32>
    %364 = arith.mulf %363, %356 : vector<16x128xf32>
    %cst_119 = arith.constant 3.500000e+00 : f32
    %365 = vector.broadcast %cst_119 : f32 to vector<16x128xf32>
    %366 = arith.addf %364, %365 : vector<16x128xf32>
    %367 = arith.mulf %356, %366 : vector<16x128xf32>
    %368 = arith.subf %7, %359 : vector<16x128xf32>
    %369 = arith.addf %367, %368 : vector<16x128xf32>
    %cst_120 = arith.constant 9.900000e-01 : f32
    %370 = vector.broadcast %cst_120 : f32 to vector<16x128xf32>
    %371 = arith.mulf %370, %359 : vector<16x128xf32>
    %cst_121 = arith.constant 1.000000e-03 : f32
    %372 = vector.broadcast %cst_121 : f32 to vector<16x128xf32>
    %373 = arith.mulf %372, %369 : vector<16x128xf32>
    %374 = arith.addf %371, %373 : vector<16x128xf32>
    %cst_122 = arith.constant 3.000000e+01 : f32
    %375 = vector.broadcast %cst_122 : f32 to vector<16x128xf32>
    %376 = arith.cmpf ogt, %369, %375 : vector<16x128xf32>
    %cst_123 = arith.constant -6.500000e+01 : f32
    %377 = vector.broadcast %cst_123 : f32 to vector<16x128xf32>
    %378 = arith.select %376, %377, %369 : vector<16x128xi1>, vector<16x128xf32>
    %cst_124 = arith.constant 4.000000e+00 : f32
    %379 = vector.broadcast %cst_124 : f32 to vector<16x128xf32>
    %380 = arith.addf %374, %379 : vector<16x128xf32>
    %381 = arith.select %376, %380, %374 : vector<16x128xi1>, vector<16x128xf32>
    %382 = arith.extui %376 : vector<16x128xi1> to vector<16x128xi32>
    %383 = arith.sitofp %382 : vector<16x128xi32> to vector<16x128xf32>
    %384 = arith.addf %362, %383 : vector<16x128xf32>
    %c17_i32 = arith.constant 17 : i32
    %cst_125 = arith.constant 2.000000e-02 : f32
    %385 = vector.broadcast %cst_125 : f32 to vector<16x128xf32>
    %386 = arith.mulf %385, %378 : vector<16x128xf32>
    %cst_126 = arith.constant 3.500000e+00 : f32
    %387 = vector.broadcast %cst_126 : f32 to vector<16x128xf32>
    %388 = arith.addf %386, %387 : vector<16x128xf32>
    %389 = arith.mulf %378, %388 : vector<16x128xf32>
    %390 = arith.subf %7, %381 : vector<16x128xf32>
    %391 = arith.addf %389, %390 : vector<16x128xf32>
    %cst_127 = arith.constant 9.900000e-01 : f32
    %392 = vector.broadcast %cst_127 : f32 to vector<16x128xf32>
    %393 = arith.mulf %392, %381 : vector<16x128xf32>
    %cst_128 = arith.constant 1.000000e-03 : f32
    %394 = vector.broadcast %cst_128 : f32 to vector<16x128xf32>
    %395 = arith.mulf %394, %391 : vector<16x128xf32>
    %396 = arith.addf %393, %395 : vector<16x128xf32>
    %cst_129 = arith.constant 3.000000e+01 : f32
    %397 = vector.broadcast %cst_129 : f32 to vector<16x128xf32>
    %398 = arith.cmpf ogt, %391, %397 : vector<16x128xf32>
    %cst_130 = arith.constant -6.500000e+01 : f32
    %399 = vector.broadcast %cst_130 : f32 to vector<16x128xf32>
    %400 = arith.select %398, %399, %391 : vector<16x128xi1>, vector<16x128xf32>
    %cst_131 = arith.constant 4.000000e+00 : f32
    %401 = vector.broadcast %cst_131 : f32 to vector<16x128xf32>
    %402 = arith.addf %396, %401 : vector<16x128xf32>
    %403 = arith.select %398, %402, %396 : vector<16x128xi1>, vector<16x128xf32>
    %404 = arith.extui %398 : vector<16x128xi1> to vector<16x128xi32>
    %405 = arith.sitofp %404 : vector<16x128xi32> to vector<16x128xf32>
    %406 = arith.addf %384, %405 : vector<16x128xf32>
    %c18_i32 = arith.constant 18 : i32
    %cst_132 = arith.constant 2.000000e-02 : f32
    %407 = vector.broadcast %cst_132 : f32 to vector<16x128xf32>
    %408 = arith.mulf %407, %400 : vector<16x128xf32>
    %cst_133 = arith.constant 3.500000e+00 : f32
    %409 = vector.broadcast %cst_133 : f32 to vector<16x128xf32>
    %410 = arith.addf %408, %409 : vector<16x128xf32>
    %411 = arith.mulf %400, %410 : vector<16x128xf32>
    %412 = arith.subf %7, %403 : vector<16x128xf32>
    %413 = arith.addf %411, %412 : vector<16x128xf32>
    %cst_134 = arith.constant 9.900000e-01 : f32
    %414 = vector.broadcast %cst_134 : f32 to vector<16x128xf32>
    %415 = arith.mulf %414, %403 : vector<16x128xf32>
    %cst_135 = arith.constant 1.000000e-03 : f32
    %416 = vector.broadcast %cst_135 : f32 to vector<16x128xf32>
    %417 = arith.mulf %416, %413 : vector<16x128xf32>
    %418 = arith.addf %415, %417 : vector<16x128xf32>
    %cst_136 = arith.constant 3.000000e+01 : f32
    %419 = vector.broadcast %cst_136 : f32 to vector<16x128xf32>
    %420 = arith.cmpf ogt, %413, %419 : vector<16x128xf32>
    %cst_137 = arith.constant -6.500000e+01 : f32
    %421 = vector.broadcast %cst_137 : f32 to vector<16x128xf32>
    %422 = arith.select %420, %421, %413 : vector<16x128xi1>, vector<16x128xf32>
    %cst_138 = arith.constant 4.000000e+00 : f32
    %423 = vector.broadcast %cst_138 : f32 to vector<16x128xf32>
    %424 = arith.addf %418, %423 : vector<16x128xf32>
    %425 = arith.select %420, %424, %418 : vector<16x128xi1>, vector<16x128xf32>
    %426 = arith.extui %420 : vector<16x128xi1> to vector<16x128xi32>
    %427 = arith.sitofp %426 : vector<16x128xi32> to vector<16x128xf32>
    %428 = arith.addf %406, %427 : vector<16x128xf32>
    %c19_i32 = arith.constant 19 : i32
    %cst_139 = arith.constant 2.000000e-02 : f32
    %429 = vector.broadcast %cst_139 : f32 to vector<16x128xf32>
    %430 = arith.mulf %429, %422 : vector<16x128xf32>
    %cst_140 = arith.constant 3.500000e+00 : f32
    %431 = vector.broadcast %cst_140 : f32 to vector<16x128xf32>
    %432 = arith.addf %430, %431 : vector<16x128xf32>
    %433 = arith.mulf %422, %432 : vector<16x128xf32>
    %434 = arith.subf %7, %425 : vector<16x128xf32>
    %435 = arith.addf %433, %434 : vector<16x128xf32>
    %cst_141 = arith.constant 9.900000e-01 : f32
    %436 = vector.broadcast %cst_141 : f32 to vector<16x128xf32>
    %437 = arith.mulf %436, %425 : vector<16x128xf32>
    %cst_142 = arith.constant 1.000000e-03 : f32
    %438 = vector.broadcast %cst_142 : f32 to vector<16x128xf32>
    %439 = arith.mulf %438, %435 : vector<16x128xf32>
    %440 = arith.addf %437, %439 : vector<16x128xf32>
    %cst_143 = arith.constant 3.000000e+01 : f32
    %441 = vector.broadcast %cst_143 : f32 to vector<16x128xf32>
    %442 = arith.cmpf ogt, %435, %441 : vector<16x128xf32>
    %cst_144 = arith.constant -6.500000e+01 : f32
    %443 = vector.broadcast %cst_144 : f32 to vector<16x128xf32>
    %444 = arith.select %442, %443, %435 : vector<16x128xi1>, vector<16x128xf32>
    %cst_145 = arith.constant 4.000000e+00 : f32
    %445 = vector.broadcast %cst_145 : f32 to vector<16x128xf32>
    %446 = arith.addf %440, %445 : vector<16x128xf32>
    %447 = arith.select %442, %446, %440 : vector<16x128xi1>, vector<16x128xf32>
    %448 = arith.extui %442 : vector<16x128xi1> to vector<16x128xi32>
    %449 = arith.sitofp %448 : vector<16x128xi32> to vector<16x128xf32>
    %450 = arith.addf %428, %449 : vector<16x128xf32>
    %c20_i32 = arith.constant 20 : i32
    %cst_146 = arith.constant 2.000000e-02 : f32
    %451 = vector.broadcast %cst_146 : f32 to vector<16x128xf32>
    %452 = arith.mulf %451, %444 : vector<16x128xf32>
    %cst_147 = arith.constant 3.500000e+00 : f32
    %453 = vector.broadcast %cst_147 : f32 to vector<16x128xf32>
    %454 = arith.addf %452, %453 : vector<16x128xf32>
    %455 = arith.mulf %444, %454 : vector<16x128xf32>
    %456 = arith.subf %7, %447 : vector<16x128xf32>
    %457 = arith.addf %455, %456 : vector<16x128xf32>
    %cst_148 = arith.constant 9.900000e-01 : f32
    %458 = vector.broadcast %cst_148 : f32 to vector<16x128xf32>
    %459 = arith.mulf %458, %447 : vector<16x128xf32>
    %cst_149 = arith.constant 1.000000e-03 : f32
    %460 = vector.broadcast %cst_149 : f32 to vector<16x128xf32>
    %461 = arith.mulf %460, %457 : vector<16x128xf32>
    %462 = arith.addf %459, %461 : vector<16x128xf32>
    %cst_150 = arith.constant 3.000000e+01 : f32
    %463 = vector.broadcast %cst_150 : f32 to vector<16x128xf32>
    %464 = arith.cmpf ogt, %457, %463 : vector<16x128xf32>
    %cst_151 = arith.constant -6.500000e+01 : f32
    %465 = vector.broadcast %cst_151 : f32 to vector<16x128xf32>
    %466 = arith.select %464, %465, %457 : vector<16x128xi1>, vector<16x128xf32>
    %cst_152 = arith.constant 4.000000e+00 : f32
    %467 = vector.broadcast %cst_152 : f32 to vector<16x128xf32>
    %468 = arith.addf %462, %467 : vector<16x128xf32>
    %469 = arith.select %464, %468, %462 : vector<16x128xi1>, vector<16x128xf32>
    %470 = arith.extui %464 : vector<16x128xi1> to vector<16x128xi32>
    %471 = arith.sitofp %470 : vector<16x128xi32> to vector<16x128xf32>
    %472 = arith.addf %450, %471 : vector<16x128xf32>
    %c21_i32 = arith.constant 21 : i32
    %cst_153 = arith.constant 2.000000e-02 : f32
    %473 = vector.broadcast %cst_153 : f32 to vector<16x128xf32>
    %474 = arith.mulf %473, %466 : vector<16x128xf32>
    %cst_154 = arith.constant 3.500000e+00 : f32
    %475 = vector.broadcast %cst_154 : f32 to vector<16x128xf32>
    %476 = arith.addf %474, %475 : vector<16x128xf32>
    %477 = arith.mulf %466, %476 : vector<16x128xf32>
    %478 = arith.subf %7, %469 : vector<16x128xf32>
    %479 = arith.addf %477, %478 : vector<16x128xf32>
    %cst_155 = arith.constant 9.900000e-01 : f32
    %480 = vector.broadcast %cst_155 : f32 to vector<16x128xf32>
    %481 = arith.mulf %480, %469 : vector<16x128xf32>
    %cst_156 = arith.constant 1.000000e-03 : f32
    %482 = vector.broadcast %cst_156 : f32 to vector<16x128xf32>
    %483 = arith.mulf %482, %479 : vector<16x128xf32>
    %484 = arith.addf %481, %483 : vector<16x128xf32>
    %cst_157 = arith.constant 3.000000e+01 : f32
    %485 = vector.broadcast %cst_157 : f32 to vector<16x128xf32>
    %486 = arith.cmpf ogt, %479, %485 : vector<16x128xf32>
    %cst_158 = arith.constant -6.500000e+01 : f32
    %487 = vector.broadcast %cst_158 : f32 to vector<16x128xf32>
    %488 = arith.select %486, %487, %479 : vector<16x128xi1>, vector<16x128xf32>
    %cst_159 = arith.constant 4.000000e+00 : f32
    %489 = vector.broadcast %cst_159 : f32 to vector<16x128xf32>
    %490 = arith.addf %484, %489 : vector<16x128xf32>
    %491 = arith.select %486, %490, %484 : vector<16x128xi1>, vector<16x128xf32>
    %492 = arith.extui %486 : vector<16x128xi1> to vector<16x128xi32>
    %493 = arith.sitofp %492 : vector<16x128xi32> to vector<16x128xf32>
    %494 = arith.addf %472, %493 : vector<16x128xf32>
    %c22_i32 = arith.constant 22 : i32
    %cst_160 = arith.constant 2.000000e-02 : f32
    %495 = vector.broadcast %cst_160 : f32 to vector<16x128xf32>
    %496 = arith.mulf %495, %488 : vector<16x128xf32>
    %cst_161 = arith.constant 3.500000e+00 : f32
    %497 = vector.broadcast %cst_161 : f32 to vector<16x128xf32>
    %498 = arith.addf %496, %497 : vector<16x128xf32>
    %499 = arith.mulf %488, %498 : vector<16x128xf32>
    %500 = arith.subf %7, %491 : vector<16x128xf32>
    %501 = arith.addf %499, %500 : vector<16x128xf32>
    %cst_162 = arith.constant 9.900000e-01 : f32
    %502 = vector.broadcast %cst_162 : f32 to vector<16x128xf32>
    %503 = arith.mulf %502, %491 : vector<16x128xf32>
    %cst_163 = arith.constant 1.000000e-03 : f32
    %504 = vector.broadcast %cst_163 : f32 to vector<16x128xf32>
    %505 = arith.mulf %504, %501 : vector<16x128xf32>
    %506 = arith.addf %503, %505 : vector<16x128xf32>
    %cst_164 = arith.constant 3.000000e+01 : f32
    %507 = vector.broadcast %cst_164 : f32 to vector<16x128xf32>
    %508 = arith.cmpf ogt, %501, %507 : vector<16x128xf32>
    %cst_165 = arith.constant -6.500000e+01 : f32
    %509 = vector.broadcast %cst_165 : f32 to vector<16x128xf32>
    %510 = arith.select %508, %509, %501 : vector<16x128xi1>, vector<16x128xf32>
    %cst_166 = arith.constant 4.000000e+00 : f32
    %511 = vector.broadcast %cst_166 : f32 to vector<16x128xf32>
    %512 = arith.addf %506, %511 : vector<16x128xf32>
    %513 = arith.select %508, %512, %506 : vector<16x128xi1>, vector<16x128xf32>
    %514 = arith.extui %508 : vector<16x128xi1> to vector<16x128xi32>
    %515 = arith.sitofp %514 : vector<16x128xi32> to vector<16x128xf32>
    %516 = arith.addf %494, %515 : vector<16x128xf32>
    %c23_i32 = arith.constant 23 : i32
    %cst_167 = arith.constant 2.000000e-02 : f32
    %517 = vector.broadcast %cst_167 : f32 to vector<16x128xf32>
    %518 = arith.mulf %517, %510 : vector<16x128xf32>
    %cst_168 = arith.constant 3.500000e+00 : f32
    %519 = vector.broadcast %cst_168 : f32 to vector<16x128xf32>
    %520 = arith.addf %518, %519 : vector<16x128xf32>
    %521 = arith.mulf %510, %520 : vector<16x128xf32>
    %522 = arith.subf %7, %513 : vector<16x128xf32>
    %523 = arith.addf %521, %522 : vector<16x128xf32>
    %cst_169 = arith.constant 9.900000e-01 : f32
    %524 = vector.broadcast %cst_169 : f32 to vector<16x128xf32>
    %525 = arith.mulf %524, %513 : vector<16x128xf32>
    %cst_170 = arith.constant 1.000000e-03 : f32
    %526 = vector.broadcast %cst_170 : f32 to vector<16x128xf32>
    %527 = arith.mulf %526, %523 : vector<16x128xf32>
    %528 = arith.addf %525, %527 : vector<16x128xf32>
    %cst_171 = arith.constant 3.000000e+01 : f32
    %529 = vector.broadcast %cst_171 : f32 to vector<16x128xf32>
    %530 = arith.cmpf ogt, %523, %529 : vector<16x128xf32>
    %cst_172 = arith.constant -6.500000e+01 : f32
    %531 = vector.broadcast %cst_172 : f32 to vector<16x128xf32>
    %532 = arith.select %530, %531, %523 : vector<16x128xi1>, vector<16x128xf32>
    %cst_173 = arith.constant 4.000000e+00 : f32
    %533 = vector.broadcast %cst_173 : f32 to vector<16x128xf32>
    %534 = arith.addf %528, %533 : vector<16x128xf32>
    %535 = arith.select %530, %534, %528 : vector<16x128xi1>, vector<16x128xf32>
    %536 = arith.extui %530 : vector<16x128xi1> to vector<16x128xi32>
    %537 = arith.sitofp %536 : vector<16x128xi32> to vector<16x128xf32>
    %538 = arith.addf %516, %537 : vector<16x128xf32>
    %c24_i32 = arith.constant 24 : i32
    %cst_174 = arith.constant 2.000000e-02 : f32
    %539 = vector.broadcast %cst_174 : f32 to vector<16x128xf32>
    %540 = arith.mulf %539, %532 : vector<16x128xf32>
    %cst_175 = arith.constant 3.500000e+00 : f32
    %541 = vector.broadcast %cst_175 : f32 to vector<16x128xf32>
    %542 = arith.addf %540, %541 : vector<16x128xf32>
    %543 = arith.mulf %532, %542 : vector<16x128xf32>
    %544 = arith.subf %7, %535 : vector<16x128xf32>
    %545 = arith.addf %543, %544 : vector<16x128xf32>
    %cst_176 = arith.constant 9.900000e-01 : f32
    %546 = vector.broadcast %cst_176 : f32 to vector<16x128xf32>
    %547 = arith.mulf %546, %535 : vector<16x128xf32>
    %cst_177 = arith.constant 1.000000e-03 : f32
    %548 = vector.broadcast %cst_177 : f32 to vector<16x128xf32>
    %549 = arith.mulf %548, %545 : vector<16x128xf32>
    %550 = arith.addf %547, %549 : vector<16x128xf32>
    %cst_178 = arith.constant 3.000000e+01 : f32
    %551 = vector.broadcast %cst_178 : f32 to vector<16x128xf32>
    %552 = arith.cmpf ogt, %545, %551 : vector<16x128xf32>
    %cst_179 = arith.constant -6.500000e+01 : f32
    %553 = vector.broadcast %cst_179 : f32 to vector<16x128xf32>
    %554 = arith.select %552, %553, %545 : vector<16x128xi1>, vector<16x128xf32>
    %cst_180 = arith.constant 4.000000e+00 : f32
    %555 = vector.broadcast %cst_180 : f32 to vector<16x128xf32>
    %556 = arith.addf %550, %555 : vector<16x128xf32>
    %557 = arith.select %552, %556, %550 : vector<16x128xi1>, vector<16x128xf32>
    %558 = arith.extui %552 : vector<16x128xi1> to vector<16x128xi32>
    %559 = arith.sitofp %558 : vector<16x128xi32> to vector<16x128xf32>
    %560 = arith.addf %538, %559 : vector<16x128xf32>
    %c25_i32 = arith.constant 25 : i32
    %cst_181 = arith.constant 2.000000e-02 : f32
    %561 = vector.broadcast %cst_181 : f32 to vector<16x128xf32>
    %562 = arith.mulf %561, %554 : vector<16x128xf32>
    %cst_182 = arith.constant 3.500000e+00 : f32
    %563 = vector.broadcast %cst_182 : f32 to vector<16x128xf32>
    %564 = arith.addf %562, %563 : vector<16x128xf32>
    %565 = arith.mulf %554, %564 : vector<16x128xf32>
    %566 = arith.subf %7, %557 : vector<16x128xf32>
    %567 = arith.addf %565, %566 : vector<16x128xf32>
    %cst_183 = arith.constant 9.900000e-01 : f32
    %568 = vector.broadcast %cst_183 : f32 to vector<16x128xf32>
    %569 = arith.mulf %568, %557 : vector<16x128xf32>
    %cst_184 = arith.constant 1.000000e-03 : f32
    %570 = vector.broadcast %cst_184 : f32 to vector<16x128xf32>
    %571 = arith.mulf %570, %567 : vector<16x128xf32>
    %572 = arith.addf %569, %571 : vector<16x128xf32>
    %cst_185 = arith.constant 3.000000e+01 : f32
    %573 = vector.broadcast %cst_185 : f32 to vector<16x128xf32>
    %574 = arith.cmpf ogt, %567, %573 : vector<16x128xf32>
    %cst_186 = arith.constant -6.500000e+01 : f32
    %575 = vector.broadcast %cst_186 : f32 to vector<16x128xf32>
    %576 = arith.select %574, %575, %567 : vector<16x128xi1>, vector<16x128xf32>
    %cst_187 = arith.constant 4.000000e+00 : f32
    %577 = vector.broadcast %cst_187 : f32 to vector<16x128xf32>
    %578 = arith.addf %572, %577 : vector<16x128xf32>
    %579 = arith.select %574, %578, %572 : vector<16x128xi1>, vector<16x128xf32>
    %580 = arith.extui %574 : vector<16x128xi1> to vector<16x128xi32>
    %581 = arith.sitofp %580 : vector<16x128xi32> to vector<16x128xf32>
    %582 = arith.addf %560, %581 : vector<16x128xf32>
    %c26_i32 = arith.constant 26 : i32
    %cst_188 = arith.constant 2.000000e-02 : f32
    %583 = vector.broadcast %cst_188 : f32 to vector<16x128xf32>
    %584 = arith.mulf %583, %576 : vector<16x128xf32>
    %cst_189 = arith.constant 3.500000e+00 : f32
    %585 = vector.broadcast %cst_189 : f32 to vector<16x128xf32>
    %586 = arith.addf %584, %585 : vector<16x128xf32>
    %587 = arith.mulf %576, %586 : vector<16x128xf32>
    %588 = arith.subf %7, %579 : vector<16x128xf32>
    %589 = arith.addf %587, %588 : vector<16x128xf32>
    %cst_190 = arith.constant 9.900000e-01 : f32
    %590 = vector.broadcast %cst_190 : f32 to vector<16x128xf32>
    %591 = arith.mulf %590, %579 : vector<16x128xf32>
    %cst_191 = arith.constant 1.000000e-03 : f32
    %592 = vector.broadcast %cst_191 : f32 to vector<16x128xf32>
    %593 = arith.mulf %592, %589 : vector<16x128xf32>
    %594 = arith.addf %591, %593 : vector<16x128xf32>
    %cst_192 = arith.constant 3.000000e+01 : f32
    %595 = vector.broadcast %cst_192 : f32 to vector<16x128xf32>
    %596 = arith.cmpf ogt, %589, %595 : vector<16x128xf32>
    %cst_193 = arith.constant -6.500000e+01 : f32
    %597 = vector.broadcast %cst_193 : f32 to vector<16x128xf32>
    %598 = arith.select %596, %597, %589 : vector<16x128xi1>, vector<16x128xf32>
    %cst_194 = arith.constant 4.000000e+00 : f32
    %599 = vector.broadcast %cst_194 : f32 to vector<16x128xf32>
    %600 = arith.addf %594, %599 : vector<16x128xf32>
    %601 = arith.select %596, %600, %594 : vector<16x128xi1>, vector<16x128xf32>
    %602 = arith.extui %596 : vector<16x128xi1> to vector<16x128xi32>
    %603 = arith.sitofp %602 : vector<16x128xi32> to vector<16x128xf32>
    %604 = arith.addf %582, %603 : vector<16x128xf32>
    %c27_i32 = arith.constant 27 : i32
    %cst_195 = arith.constant 2.000000e-02 : f32
    %605 = vector.broadcast %cst_195 : f32 to vector<16x128xf32>
    %606 = arith.mulf %605, %598 : vector<16x128xf32>
    %cst_196 = arith.constant 3.500000e+00 : f32
    %607 = vector.broadcast %cst_196 : f32 to vector<16x128xf32>
    %608 = arith.addf %606, %607 : vector<16x128xf32>
    %609 = arith.mulf %598, %608 : vector<16x128xf32>
    %610 = arith.subf %7, %601 : vector<16x128xf32>
    %611 = arith.addf %609, %610 : vector<16x128xf32>
    %cst_197 = arith.constant 9.900000e-01 : f32
    %612 = vector.broadcast %cst_197 : f32 to vector<16x128xf32>
    %613 = arith.mulf %612, %601 : vector<16x128xf32>
    %cst_198 = arith.constant 1.000000e-03 : f32
    %614 = vector.broadcast %cst_198 : f32 to vector<16x128xf32>
    %615 = arith.mulf %614, %611 : vector<16x128xf32>
    %616 = arith.addf %613, %615 : vector<16x128xf32>
    %cst_199 = arith.constant 3.000000e+01 : f32
    %617 = vector.broadcast %cst_199 : f32 to vector<16x128xf32>
    %618 = arith.cmpf ogt, %611, %617 : vector<16x128xf32>
    %cst_200 = arith.constant -6.500000e+01 : f32
    %619 = vector.broadcast %cst_200 : f32 to vector<16x128xf32>
    %620 = arith.select %618, %619, %611 : vector<16x128xi1>, vector<16x128xf32>
    %cst_201 = arith.constant 4.000000e+00 : f32
    %621 = vector.broadcast %cst_201 : f32 to vector<16x128xf32>
    %622 = arith.addf %616, %621 : vector<16x128xf32>
    %623 = arith.select %618, %622, %616 : vector<16x128xi1>, vector<16x128xf32>
    %624 = arith.extui %618 : vector<16x128xi1> to vector<16x128xi32>
    %625 = arith.sitofp %624 : vector<16x128xi32> to vector<16x128xf32>
    %626 = arith.addf %604, %625 : vector<16x128xf32>
    %c28_i32 = arith.constant 28 : i32
    %cst_202 = arith.constant 2.000000e-02 : f32
    %627 = vector.broadcast %cst_202 : f32 to vector<16x128xf32>
    %628 = arith.mulf %627, %620 : vector<16x128xf32>
    %cst_203 = arith.constant 3.500000e+00 : f32
    %629 = vector.broadcast %cst_203 : f32 to vector<16x128xf32>
    %630 = arith.addf %628, %629 : vector<16x128xf32>
    %631 = arith.mulf %620, %630 : vector<16x128xf32>
    %632 = arith.subf %7, %623 : vector<16x128xf32>
    %633 = arith.addf %631, %632 : vector<16x128xf32>
    %cst_204 = arith.constant 9.900000e-01 : f32
    %634 = vector.broadcast %cst_204 : f32 to vector<16x128xf32>
    %635 = arith.mulf %634, %623 : vector<16x128xf32>
    %cst_205 = arith.constant 1.000000e-03 : f32
    %636 = vector.broadcast %cst_205 : f32 to vector<16x128xf32>
    %637 = arith.mulf %636, %633 : vector<16x128xf32>
    %638 = arith.addf %635, %637 : vector<16x128xf32>
    %cst_206 = arith.constant 3.000000e+01 : f32
    %639 = vector.broadcast %cst_206 : f32 to vector<16x128xf32>
    %640 = arith.cmpf ogt, %633, %639 : vector<16x128xf32>
    %cst_207 = arith.constant -6.500000e+01 : f32
    %641 = vector.broadcast %cst_207 : f32 to vector<16x128xf32>
    %642 = arith.select %640, %641, %633 : vector<16x128xi1>, vector<16x128xf32>
    %cst_208 = arith.constant 4.000000e+00 : f32
    %643 = vector.broadcast %cst_208 : f32 to vector<16x128xf32>
    %644 = arith.addf %638, %643 : vector<16x128xf32>
    %645 = arith.select %640, %644, %638 : vector<16x128xi1>, vector<16x128xf32>
    %646 = arith.extui %640 : vector<16x128xi1> to vector<16x128xi32>
    %647 = arith.sitofp %646 : vector<16x128xi32> to vector<16x128xf32>
    %648 = arith.addf %626, %647 : vector<16x128xf32>
    %c29_i32 = arith.constant 29 : i32
    %cst_209 = arith.constant 2.000000e-02 : f32
    %649 = vector.broadcast %cst_209 : f32 to vector<16x128xf32>
    %650 = arith.mulf %649, %642 : vector<16x128xf32>
    %cst_210 = arith.constant 3.500000e+00 : f32
    %651 = vector.broadcast %cst_210 : f32 to vector<16x128xf32>
    %652 = arith.addf %650, %651 : vector<16x128xf32>
    %653 = arith.mulf %642, %652 : vector<16x128xf32>
    %654 = arith.subf %7, %645 : vector<16x128xf32>
    %655 = arith.addf %653, %654 : vector<16x128xf32>
    %cst_211 = arith.constant 9.900000e-01 : f32
    %656 = vector.broadcast %cst_211 : f32 to vector<16x128xf32>
    %657 = arith.mulf %656, %645 : vector<16x128xf32>
    %cst_212 = arith.constant 1.000000e-03 : f32
    %658 = vector.broadcast %cst_212 : f32 to vector<16x128xf32>
    %659 = arith.mulf %658, %655 : vector<16x128xf32>
    %660 = arith.addf %657, %659 : vector<16x128xf32>
    %cst_213 = arith.constant 3.000000e+01 : f32
    %661 = vector.broadcast %cst_213 : f32 to vector<16x128xf32>
    %662 = arith.cmpf ogt, %655, %661 : vector<16x128xf32>
    %cst_214 = arith.constant -6.500000e+01 : f32
    %663 = vector.broadcast %cst_214 : f32 to vector<16x128xf32>
    %664 = arith.select %662, %663, %655 : vector<16x128xi1>, vector<16x128xf32>
    %cst_215 = arith.constant 4.000000e+00 : f32
    %665 = vector.broadcast %cst_215 : f32 to vector<16x128xf32>
    %666 = arith.addf %660, %665 : vector<16x128xf32>
    %667 = arith.select %662, %666, %660 : vector<16x128xi1>, vector<16x128xf32>
    %668 = arith.extui %662 : vector<16x128xi1> to vector<16x128xi32>
    %669 = arith.sitofp %668 : vector<16x128xi32> to vector<16x128xf32>
    %670 = arith.addf %648, %669 : vector<16x128xf32>
    %c30_i32 = arith.constant 30 : i32
    %cst_216 = arith.constant 2.000000e-02 : f32
    %671 = vector.broadcast %cst_216 : f32 to vector<16x128xf32>
    %672 = arith.mulf %671, %664 : vector<16x128xf32>
    %cst_217 = arith.constant 3.500000e+00 : f32
    %673 = vector.broadcast %cst_217 : f32 to vector<16x128xf32>
    %674 = arith.addf %672, %673 : vector<16x128xf32>
    %675 = arith.mulf %664, %674 : vector<16x128xf32>
    %676 = arith.subf %7, %667 : vector<16x128xf32>
    %677 = arith.addf %675, %676 : vector<16x128xf32>
    %cst_218 = arith.constant 9.900000e-01 : f32
    %678 = vector.broadcast %cst_218 : f32 to vector<16x128xf32>
    %679 = arith.mulf %678, %667 : vector<16x128xf32>
    %cst_219 = arith.constant 1.000000e-03 : f32
    %680 = vector.broadcast %cst_219 : f32 to vector<16x128xf32>
    %681 = arith.mulf %680, %677 : vector<16x128xf32>
    %682 = arith.addf %679, %681 : vector<16x128xf32>
    %cst_220 = arith.constant 3.000000e+01 : f32
    %683 = vector.broadcast %cst_220 : f32 to vector<16x128xf32>
    %684 = arith.cmpf ogt, %677, %683 : vector<16x128xf32>
    %cst_221 = arith.constant -6.500000e+01 : f32
    %685 = vector.broadcast %cst_221 : f32 to vector<16x128xf32>
    %686 = arith.select %684, %685, %677 : vector<16x128xi1>, vector<16x128xf32>
    %cst_222 = arith.constant 4.000000e+00 : f32
    %687 = vector.broadcast %cst_222 : f32 to vector<16x128xf32>
    %688 = arith.addf %682, %687 : vector<16x128xf32>
    %689 = arith.select %684, %688, %682 : vector<16x128xi1>, vector<16x128xf32>
    %690 = arith.extui %684 : vector<16x128xi1> to vector<16x128xi32>
    %691 = arith.sitofp %690 : vector<16x128xi32> to vector<16x128xf32>
    %692 = arith.addf %670, %691 : vector<16x128xf32>
    %c31_i32 = arith.constant 31 : i32
    %cst_223 = arith.constant 2.000000e-02 : f32
    %693 = vector.broadcast %cst_223 : f32 to vector<16x128xf32>
    %694 = arith.mulf %693, %686 : vector<16x128xf32>
    %cst_224 = arith.constant 3.500000e+00 : f32
    %695 = vector.broadcast %cst_224 : f32 to vector<16x128xf32>
    %696 = arith.addf %694, %695 : vector<16x128xf32>
    %697 = arith.mulf %686, %696 : vector<16x128xf32>
    %698 = arith.subf %7, %689 : vector<16x128xf32>
    %699 = arith.addf %697, %698 : vector<16x128xf32>
    %cst_225 = arith.constant 9.900000e-01 : f32
    %700 = vector.broadcast %cst_225 : f32 to vector<16x128xf32>
    %701 = arith.mulf %700, %689 : vector<16x128xf32>
    %cst_226 = arith.constant 1.000000e-03 : f32
    %702 = vector.broadcast %cst_226 : f32 to vector<16x128xf32>
    %703 = arith.mulf %702, %699 : vector<16x128xf32>
    %704 = arith.addf %701, %703 : vector<16x128xf32>
    %cst_227 = arith.constant 3.000000e+01 : f32
    %705 = vector.broadcast %cst_227 : f32 to vector<16x128xf32>
    %706 = arith.cmpf ogt, %699, %705 : vector<16x128xf32>
    %cst_228 = arith.constant -6.500000e+01 : f32
    %707 = vector.broadcast %cst_228 : f32 to vector<16x128xf32>
    %708 = arith.select %706, %707, %699 : vector<16x128xi1>, vector<16x128xf32>
    %cst_229 = arith.constant 4.000000e+00 : f32
    %709 = vector.broadcast %cst_229 : f32 to vector<16x128xf32>
    %710 = arith.addf %704, %709 : vector<16x128xf32>
    %711 = arith.select %706, %710, %704 : vector<16x128xi1>, vector<16x128xf32>
    %712 = arith.extui %706 : vector<16x128xi1> to vector<16x128xi32>
    %713 = arith.sitofp %712 : vector<16x128xi32> to vector<16x128xf32>
    %714 = arith.addf %692, %713 : vector<16x128xf32>
    %c32_i32 = arith.constant 32 : i32
    %cst_230 = arith.constant 2.000000e-02 : f32
    %715 = vector.broadcast %cst_230 : f32 to vector<16x128xf32>
    %716 = arith.mulf %715, %708 : vector<16x128xf32>
    %cst_231 = arith.constant 3.500000e+00 : f32
    %717 = vector.broadcast %cst_231 : f32 to vector<16x128xf32>
    %718 = arith.addf %716, %717 : vector<16x128xf32>
    %719 = arith.mulf %708, %718 : vector<16x128xf32>
    %720 = arith.subf %7, %711 : vector<16x128xf32>
    %721 = arith.addf %719, %720 : vector<16x128xf32>
    %cst_232 = arith.constant 9.900000e-01 : f32
    %722 = vector.broadcast %cst_232 : f32 to vector<16x128xf32>
    %723 = arith.mulf %722, %711 : vector<16x128xf32>
    %cst_233 = arith.constant 1.000000e-03 : f32
    %724 = vector.broadcast %cst_233 : f32 to vector<16x128xf32>
    %725 = arith.mulf %724, %721 : vector<16x128xf32>
    %726 = arith.addf %723, %725 : vector<16x128xf32>
    %cst_234 = arith.constant 3.000000e+01 : f32
    %727 = vector.broadcast %cst_234 : f32 to vector<16x128xf32>
    %728 = arith.cmpf ogt, %721, %727 : vector<16x128xf32>
    %cst_235 = arith.constant -6.500000e+01 : f32
    %729 = vector.broadcast %cst_235 : f32 to vector<16x128xf32>
    %730 = arith.select %728, %729, %721 : vector<16x128xi1>, vector<16x128xf32>
    %cst_236 = arith.constant 4.000000e+00 : f32
    %731 = vector.broadcast %cst_236 : f32 to vector<16x128xf32>
    %732 = arith.addf %726, %731 : vector<16x128xf32>
    %733 = arith.select %728, %732, %726 : vector<16x128xi1>, vector<16x128xf32>
    %734 = arith.extui %728 : vector<16x128xi1> to vector<16x128xi32>
    %735 = arith.sitofp %734 : vector<16x128xi32> to vector<16x128xf32>
    %736 = arith.addf %714, %735 : vector<16x128xf32>
    %c33_i32 = arith.constant 33 : i32
    %cst_237 = arith.constant 2.000000e-02 : f32
    %737 = vector.broadcast %cst_237 : f32 to vector<16x128xf32>
    %738 = arith.mulf %737, %730 : vector<16x128xf32>
    %cst_238 = arith.constant 3.500000e+00 : f32
    %739 = vector.broadcast %cst_238 : f32 to vector<16x128xf32>
    %740 = arith.addf %738, %739 : vector<16x128xf32>
    %741 = arith.mulf %730, %740 : vector<16x128xf32>
    %742 = arith.subf %7, %733 : vector<16x128xf32>
    %743 = arith.addf %741, %742 : vector<16x128xf32>
    %cst_239 = arith.constant 9.900000e-01 : f32
    %744 = vector.broadcast %cst_239 : f32 to vector<16x128xf32>
    %745 = arith.mulf %744, %733 : vector<16x128xf32>
    %cst_240 = arith.constant 1.000000e-03 : f32
    %746 = vector.broadcast %cst_240 : f32 to vector<16x128xf32>
    %747 = arith.mulf %746, %743 : vector<16x128xf32>
    %748 = arith.addf %745, %747 : vector<16x128xf32>
    %cst_241 = arith.constant 3.000000e+01 : f32
    %749 = vector.broadcast %cst_241 : f32 to vector<16x128xf32>
    %750 = arith.cmpf ogt, %743, %749 : vector<16x128xf32>
    %cst_242 = arith.constant -6.500000e+01 : f32
    %751 = vector.broadcast %cst_242 : f32 to vector<16x128xf32>
    %752 = arith.select %750, %751, %743 : vector<16x128xi1>, vector<16x128xf32>
    %cst_243 = arith.constant 4.000000e+00 : f32
    %753 = vector.broadcast %cst_243 : f32 to vector<16x128xf32>
    %754 = arith.addf %748, %753 : vector<16x128xf32>
    %755 = arith.select %750, %754, %748 : vector<16x128xi1>, vector<16x128xf32>
    %756 = arith.extui %750 : vector<16x128xi1> to vector<16x128xi32>
    %757 = arith.sitofp %756 : vector<16x128xi32> to vector<16x128xf32>
    %758 = arith.addf %736, %757 : vector<16x128xf32>
    %c34_i32 = arith.constant 34 : i32
    %cst_244 = arith.constant 2.000000e-02 : f32
    %759 = vector.broadcast %cst_244 : f32 to vector<16x128xf32>
    %760 = arith.mulf %759, %752 : vector<16x128xf32>
    %cst_245 = arith.constant 3.500000e+00 : f32
    %761 = vector.broadcast %cst_245 : f32 to vector<16x128xf32>
    %762 = arith.addf %760, %761 : vector<16x128xf32>
    %763 = arith.mulf %752, %762 : vector<16x128xf32>
    %764 = arith.subf %7, %755 : vector<16x128xf32>
    %765 = arith.addf %763, %764 : vector<16x128xf32>
    %cst_246 = arith.constant 9.900000e-01 : f32
    %766 = vector.broadcast %cst_246 : f32 to vector<16x128xf32>
    %767 = arith.mulf %766, %755 : vector<16x128xf32>
    %cst_247 = arith.constant 1.000000e-03 : f32
    %768 = vector.broadcast %cst_247 : f32 to vector<16x128xf32>
    %769 = arith.mulf %768, %765 : vector<16x128xf32>
    %770 = arith.addf %767, %769 : vector<16x128xf32>
    %cst_248 = arith.constant 3.000000e+01 : f32
    %771 = vector.broadcast %cst_248 : f32 to vector<16x128xf32>
    %772 = arith.cmpf ogt, %765, %771 : vector<16x128xf32>
    %cst_249 = arith.constant -6.500000e+01 : f32
    %773 = vector.broadcast %cst_249 : f32 to vector<16x128xf32>
    %774 = arith.select %772, %773, %765 : vector<16x128xi1>, vector<16x128xf32>
    %cst_250 = arith.constant 4.000000e+00 : f32
    %775 = vector.broadcast %cst_250 : f32 to vector<16x128xf32>
    %776 = arith.addf %770, %775 : vector<16x128xf32>
    %777 = arith.select %772, %776, %770 : vector<16x128xi1>, vector<16x128xf32>
    %778 = arith.extui %772 : vector<16x128xi1> to vector<16x128xi32>
    %779 = arith.sitofp %778 : vector<16x128xi32> to vector<16x128xf32>
    %780 = arith.addf %758, %779 : vector<16x128xf32>
    %c35_i32 = arith.constant 35 : i32
    %cst_251 = arith.constant 2.000000e-02 : f32
    %781 = vector.broadcast %cst_251 : f32 to vector<16x128xf32>
    %782 = arith.mulf %781, %774 : vector<16x128xf32>
    %cst_252 = arith.constant 3.500000e+00 : f32
    %783 = vector.broadcast %cst_252 : f32 to vector<16x128xf32>
    %784 = arith.addf %782, %783 : vector<16x128xf32>
    %785 = arith.mulf %774, %784 : vector<16x128xf32>
    %786 = arith.subf %7, %777 : vector<16x128xf32>
    %787 = arith.addf %785, %786 : vector<16x128xf32>
    %cst_253 = arith.constant 9.900000e-01 : f32
    %788 = vector.broadcast %cst_253 : f32 to vector<16x128xf32>
    %789 = arith.mulf %788, %777 : vector<16x128xf32>
    %cst_254 = arith.constant 1.000000e-03 : f32
    %790 = vector.broadcast %cst_254 : f32 to vector<16x128xf32>
    %791 = arith.mulf %790, %787 : vector<16x128xf32>
    %792 = arith.addf %789, %791 : vector<16x128xf32>
    %cst_255 = arith.constant 3.000000e+01 : f32
    %793 = vector.broadcast %cst_255 : f32 to vector<16x128xf32>
    %794 = arith.cmpf ogt, %787, %793 : vector<16x128xf32>
    %cst_256 = arith.constant -6.500000e+01 : f32
    %795 = vector.broadcast %cst_256 : f32 to vector<16x128xf32>
    %796 = arith.select %794, %795, %787 : vector<16x128xi1>, vector<16x128xf32>
    %cst_257 = arith.constant 4.000000e+00 : f32
    %797 = vector.broadcast %cst_257 : f32 to vector<16x128xf32>
    %798 = arith.addf %792, %797 : vector<16x128xf32>
    %799 = arith.select %794, %798, %792 : vector<16x128xi1>, vector<16x128xf32>
    %800 = arith.extui %794 : vector<16x128xi1> to vector<16x128xi32>
    %801 = arith.sitofp %800 : vector<16x128xi32> to vector<16x128xf32>
    %802 = arith.addf %780, %801 : vector<16x128xf32>
    %c36_i32 = arith.constant 36 : i32
    %cst_258 = arith.constant 2.000000e-02 : f32
    %803 = vector.broadcast %cst_258 : f32 to vector<16x128xf32>
    %804 = arith.mulf %803, %796 : vector<16x128xf32>
    %cst_259 = arith.constant 3.500000e+00 : f32
    %805 = vector.broadcast %cst_259 : f32 to vector<16x128xf32>
    %806 = arith.addf %804, %805 : vector<16x128xf32>
    %807 = arith.mulf %796, %806 : vector<16x128xf32>
    %808 = arith.subf %7, %799 : vector<16x128xf32>
    %809 = arith.addf %807, %808 : vector<16x128xf32>
    %cst_260 = arith.constant 9.900000e-01 : f32
    %810 = vector.broadcast %cst_260 : f32 to vector<16x128xf32>
    %811 = arith.mulf %810, %799 : vector<16x128xf32>
    %cst_261 = arith.constant 1.000000e-03 : f32
    %812 = vector.broadcast %cst_261 : f32 to vector<16x128xf32>
    %813 = arith.mulf %812, %809 : vector<16x128xf32>
    %814 = arith.addf %811, %813 : vector<16x128xf32>
    %cst_262 = arith.constant 3.000000e+01 : f32
    %815 = vector.broadcast %cst_262 : f32 to vector<16x128xf32>
    %816 = arith.cmpf ogt, %809, %815 : vector<16x128xf32>
    %cst_263 = arith.constant -6.500000e+01 : f32
    %817 = vector.broadcast %cst_263 : f32 to vector<16x128xf32>
    %818 = arith.select %816, %817, %809 : vector<16x128xi1>, vector<16x128xf32>
    %cst_264 = arith.constant 4.000000e+00 : f32
    %819 = vector.broadcast %cst_264 : f32 to vector<16x128xf32>
    %820 = arith.addf %814, %819 : vector<16x128xf32>
    %821 = arith.select %816, %820, %814 : vector<16x128xi1>, vector<16x128xf32>
    %822 = arith.extui %816 : vector<16x128xi1> to vector<16x128xi32>
    %823 = arith.sitofp %822 : vector<16x128xi32> to vector<16x128xf32>
    %824 = arith.addf %802, %823 : vector<16x128xf32>
    %c37_i32 = arith.constant 37 : i32
    %cst_265 = arith.constant 2.000000e-02 : f32
    %825 = vector.broadcast %cst_265 : f32 to vector<16x128xf32>
    %826 = arith.mulf %825, %818 : vector<16x128xf32>
    %cst_266 = arith.constant 3.500000e+00 : f32
    %827 = vector.broadcast %cst_266 : f32 to vector<16x128xf32>
    %828 = arith.addf %826, %827 : vector<16x128xf32>
    %829 = arith.mulf %818, %828 : vector<16x128xf32>
    %830 = arith.subf %7, %821 : vector<16x128xf32>
    %831 = arith.addf %829, %830 : vector<16x128xf32>
    %cst_267 = arith.constant 9.900000e-01 : f32
    %832 = vector.broadcast %cst_267 : f32 to vector<16x128xf32>
    %833 = arith.mulf %832, %821 : vector<16x128xf32>
    %cst_268 = arith.constant 1.000000e-03 : f32
    %834 = vector.broadcast %cst_268 : f32 to vector<16x128xf32>
    %835 = arith.mulf %834, %831 : vector<16x128xf32>
    %836 = arith.addf %833, %835 : vector<16x128xf32>
    %cst_269 = arith.constant 3.000000e+01 : f32
    %837 = vector.broadcast %cst_269 : f32 to vector<16x128xf32>
    %838 = arith.cmpf ogt, %831, %837 : vector<16x128xf32>
    %cst_270 = arith.constant -6.500000e+01 : f32
    %839 = vector.broadcast %cst_270 : f32 to vector<16x128xf32>
    %840 = arith.select %838, %839, %831 : vector<16x128xi1>, vector<16x128xf32>
    %cst_271 = arith.constant 4.000000e+00 : f32
    %841 = vector.broadcast %cst_271 : f32 to vector<16x128xf32>
    %842 = arith.addf %836, %841 : vector<16x128xf32>
    %843 = arith.select %838, %842, %836 : vector<16x128xi1>, vector<16x128xf32>
    %844 = arith.extui %838 : vector<16x128xi1> to vector<16x128xi32>
    %845 = arith.sitofp %844 : vector<16x128xi32> to vector<16x128xf32>
    %846 = arith.addf %824, %845 : vector<16x128xf32>
    %c38_i32 = arith.constant 38 : i32
    %cst_272 = arith.constant 2.000000e-02 : f32
    %847 = vector.broadcast %cst_272 : f32 to vector<16x128xf32>
    %848 = arith.mulf %847, %840 : vector<16x128xf32>
    %cst_273 = arith.constant 3.500000e+00 : f32
    %849 = vector.broadcast %cst_273 : f32 to vector<16x128xf32>
    %850 = arith.addf %848, %849 : vector<16x128xf32>
    %851 = arith.mulf %840, %850 : vector<16x128xf32>
    %852 = arith.subf %7, %843 : vector<16x128xf32>
    %853 = arith.addf %851, %852 : vector<16x128xf32>
    %cst_274 = arith.constant 9.900000e-01 : f32
    %854 = vector.broadcast %cst_274 : f32 to vector<16x128xf32>
    %855 = arith.mulf %854, %843 : vector<16x128xf32>
    %cst_275 = arith.constant 1.000000e-03 : f32
    %856 = vector.broadcast %cst_275 : f32 to vector<16x128xf32>
    %857 = arith.mulf %856, %853 : vector<16x128xf32>
    %858 = arith.addf %855, %857 : vector<16x128xf32>
    %cst_276 = arith.constant 3.000000e+01 : f32
    %859 = vector.broadcast %cst_276 : f32 to vector<16x128xf32>
    %860 = arith.cmpf ogt, %853, %859 : vector<16x128xf32>
    %cst_277 = arith.constant -6.500000e+01 : f32
    %861 = vector.broadcast %cst_277 : f32 to vector<16x128xf32>
    %862 = arith.select %860, %861, %853 : vector<16x128xi1>, vector<16x128xf32>
    %cst_278 = arith.constant 4.000000e+00 : f32
    %863 = vector.broadcast %cst_278 : f32 to vector<16x128xf32>
    %864 = arith.addf %858, %863 : vector<16x128xf32>
    %865 = arith.select %860, %864, %858 : vector<16x128xi1>, vector<16x128xf32>
    %866 = arith.extui %860 : vector<16x128xi1> to vector<16x128xi32>
    %867 = arith.sitofp %866 : vector<16x128xi32> to vector<16x128xf32>
    %868 = arith.addf %846, %867 : vector<16x128xf32>
    %c39_i32 = arith.constant 39 : i32
    %cst_279 = arith.constant 2.000000e-02 : f32
    %869 = vector.broadcast %cst_279 : f32 to vector<16x128xf32>
    %870 = arith.mulf %869, %862 : vector<16x128xf32>
    %cst_280 = arith.constant 3.500000e+00 : f32
    %871 = vector.broadcast %cst_280 : f32 to vector<16x128xf32>
    %872 = arith.addf %870, %871 : vector<16x128xf32>
    %873 = arith.mulf %862, %872 : vector<16x128xf32>
    %874 = arith.subf %7, %865 : vector<16x128xf32>
    %875 = arith.addf %873, %874 : vector<16x128xf32>
    %cst_281 = arith.constant 9.900000e-01 : f32
    %876 = vector.broadcast %cst_281 : f32 to vector<16x128xf32>
    %877 = arith.mulf %876, %865 : vector<16x128xf32>
    %cst_282 = arith.constant 1.000000e-03 : f32
    %878 = vector.broadcast %cst_282 : f32 to vector<16x128xf32>
    %879 = arith.mulf %878, %875 : vector<16x128xf32>
    %880 = arith.addf %877, %879 : vector<16x128xf32>
    %cst_283 = arith.constant 3.000000e+01 : f32
    %881 = vector.broadcast %cst_283 : f32 to vector<16x128xf32>
    %882 = arith.cmpf ogt, %875, %881 : vector<16x128xf32>
    %cst_284 = arith.constant -6.500000e+01 : f32
    %883 = vector.broadcast %cst_284 : f32 to vector<16x128xf32>
    %884 = arith.select %882, %883, %875 : vector<16x128xi1>, vector<16x128xf32>
    %cst_285 = arith.constant 4.000000e+00 : f32
    %885 = vector.broadcast %cst_285 : f32 to vector<16x128xf32>
    %886 = arith.addf %880, %885 : vector<16x128xf32>
    %887 = arith.select %882, %886, %880 : vector<16x128xi1>, vector<16x128xf32>
    %888 = arith.extui %882 : vector<16x128xi1> to vector<16x128xi32>
    %889 = arith.sitofp %888 : vector<16x128xi32> to vector<16x128xf32>
    %890 = arith.addf %868, %889 : vector<16x128xf32>
    %c40_i32 = arith.constant 40 : i32
    %cst_286 = arith.constant 2.000000e-02 : f32
    %891 = vector.broadcast %cst_286 : f32 to vector<16x128xf32>
    %892 = arith.mulf %891, %884 : vector<16x128xf32>
    %cst_287 = arith.constant 3.500000e+00 : f32
    %893 = vector.broadcast %cst_287 : f32 to vector<16x128xf32>
    %894 = arith.addf %892, %893 : vector<16x128xf32>
    %895 = arith.mulf %884, %894 : vector<16x128xf32>
    %896 = arith.subf %7, %887 : vector<16x128xf32>
    %897 = arith.addf %895, %896 : vector<16x128xf32>
    %cst_288 = arith.constant 9.900000e-01 : f32
    %898 = vector.broadcast %cst_288 : f32 to vector<16x128xf32>
    %899 = arith.mulf %898, %887 : vector<16x128xf32>
    %cst_289 = arith.constant 1.000000e-03 : f32
    %900 = vector.broadcast %cst_289 : f32 to vector<16x128xf32>
    %901 = arith.mulf %900, %897 : vector<16x128xf32>
    %902 = arith.addf %899, %901 : vector<16x128xf32>
    %cst_290 = arith.constant 3.000000e+01 : f32
    %903 = vector.broadcast %cst_290 : f32 to vector<16x128xf32>
    %904 = arith.cmpf ogt, %897, %903 : vector<16x128xf32>
    %cst_291 = arith.constant -6.500000e+01 : f32
    %905 = vector.broadcast %cst_291 : f32 to vector<16x128xf32>
    %906 = arith.select %904, %905, %897 : vector<16x128xi1>, vector<16x128xf32>
    %cst_292 = arith.constant 4.000000e+00 : f32
    %907 = vector.broadcast %cst_292 : f32 to vector<16x128xf32>
    %908 = arith.addf %902, %907 : vector<16x128xf32>
    %909 = arith.select %904, %908, %902 : vector<16x128xi1>, vector<16x128xf32>
    %910 = arith.extui %904 : vector<16x128xi1> to vector<16x128xi32>
    %911 = arith.sitofp %910 : vector<16x128xi32> to vector<16x128xf32>
    %912 = arith.addf %890, %911 : vector<16x128xf32>
    %c41_i32 = arith.constant 41 : i32
    %cst_293 = arith.constant 2.000000e-02 : f32
    %913 = vector.broadcast %cst_293 : f32 to vector<16x128xf32>
    %914 = arith.mulf %913, %906 : vector<16x128xf32>
    %cst_294 = arith.constant 3.500000e+00 : f32
    %915 = vector.broadcast %cst_294 : f32 to vector<16x128xf32>
    %916 = arith.addf %914, %915 : vector<16x128xf32>
    %917 = arith.mulf %906, %916 : vector<16x128xf32>
    %918 = arith.subf %7, %909 : vector<16x128xf32>
    %919 = arith.addf %917, %918 : vector<16x128xf32>
    %cst_295 = arith.constant 9.900000e-01 : f32
    %920 = vector.broadcast %cst_295 : f32 to vector<16x128xf32>
    %921 = arith.mulf %920, %909 : vector<16x128xf32>
    %cst_296 = arith.constant 1.000000e-03 : f32
    %922 = vector.broadcast %cst_296 : f32 to vector<16x128xf32>
    %923 = arith.mulf %922, %919 : vector<16x128xf32>
    %924 = arith.addf %921, %923 : vector<16x128xf32>
    %cst_297 = arith.constant 3.000000e+01 : f32
    %925 = vector.broadcast %cst_297 : f32 to vector<16x128xf32>
    %926 = arith.cmpf ogt, %919, %925 : vector<16x128xf32>
    %cst_298 = arith.constant -6.500000e+01 : f32
    %927 = vector.broadcast %cst_298 : f32 to vector<16x128xf32>
    %928 = arith.select %926, %927, %919 : vector<16x128xi1>, vector<16x128xf32>
    %cst_299 = arith.constant 4.000000e+00 : f32
    %929 = vector.broadcast %cst_299 : f32 to vector<16x128xf32>
    %930 = arith.addf %924, %929 : vector<16x128xf32>
    %931 = arith.select %926, %930, %924 : vector<16x128xi1>, vector<16x128xf32>
    %932 = arith.extui %926 : vector<16x128xi1> to vector<16x128xi32>
    %933 = arith.sitofp %932 : vector<16x128xi32> to vector<16x128xf32>
    %934 = arith.addf %912, %933 : vector<16x128xf32>
    %c42_i32 = arith.constant 42 : i32
    %cst_300 = arith.constant 2.000000e-02 : f32
    %935 = vector.broadcast %cst_300 : f32 to vector<16x128xf32>
    %936 = arith.mulf %935, %928 : vector<16x128xf32>
    %cst_301 = arith.constant 3.500000e+00 : f32
    %937 = vector.broadcast %cst_301 : f32 to vector<16x128xf32>
    %938 = arith.addf %936, %937 : vector<16x128xf32>
    %939 = arith.mulf %928, %938 : vector<16x128xf32>
    %940 = arith.subf %7, %931 : vector<16x128xf32>
    %941 = arith.addf %939, %940 : vector<16x128xf32>
    %cst_302 = arith.constant 9.900000e-01 : f32
    %942 = vector.broadcast %cst_302 : f32 to vector<16x128xf32>
    %943 = arith.mulf %942, %931 : vector<16x128xf32>
    %cst_303 = arith.constant 1.000000e-03 : f32
    %944 = vector.broadcast %cst_303 : f32 to vector<16x128xf32>
    %945 = arith.mulf %944, %941 : vector<16x128xf32>
    %946 = arith.addf %943, %945 : vector<16x128xf32>
    %cst_304 = arith.constant 3.000000e+01 : f32
    %947 = vector.broadcast %cst_304 : f32 to vector<16x128xf32>
    %948 = arith.cmpf ogt, %941, %947 : vector<16x128xf32>
    %cst_305 = arith.constant -6.500000e+01 : f32
    %949 = vector.broadcast %cst_305 : f32 to vector<16x128xf32>
    %950 = arith.select %948, %949, %941 : vector<16x128xi1>, vector<16x128xf32>
    %cst_306 = arith.constant 4.000000e+00 : f32
    %951 = vector.broadcast %cst_306 : f32 to vector<16x128xf32>
    %952 = arith.addf %946, %951 : vector<16x128xf32>
    %953 = arith.select %948, %952, %946 : vector<16x128xi1>, vector<16x128xf32>
    %954 = arith.extui %948 : vector<16x128xi1> to vector<16x128xi32>
    %955 = arith.sitofp %954 : vector<16x128xi32> to vector<16x128xf32>
    %956 = arith.addf %934, %955 : vector<16x128xf32>
    %c43_i32 = arith.constant 43 : i32
    %cst_307 = arith.constant 2.000000e-02 : f32
    %957 = vector.broadcast %cst_307 : f32 to vector<16x128xf32>
    %958 = arith.mulf %957, %950 : vector<16x128xf32>
    %cst_308 = arith.constant 3.500000e+00 : f32
    %959 = vector.broadcast %cst_308 : f32 to vector<16x128xf32>
    %960 = arith.addf %958, %959 : vector<16x128xf32>
    %961 = arith.mulf %950, %960 : vector<16x128xf32>
    %962 = arith.subf %7, %953 : vector<16x128xf32>
    %963 = arith.addf %961, %962 : vector<16x128xf32>
    %cst_309 = arith.constant 9.900000e-01 : f32
    %964 = vector.broadcast %cst_309 : f32 to vector<16x128xf32>
    %965 = arith.mulf %964, %953 : vector<16x128xf32>
    %cst_310 = arith.constant 1.000000e-03 : f32
    %966 = vector.broadcast %cst_310 : f32 to vector<16x128xf32>
    %967 = arith.mulf %966, %963 : vector<16x128xf32>
    %968 = arith.addf %965, %967 : vector<16x128xf32>
    %cst_311 = arith.constant 3.000000e+01 : f32
    %969 = vector.broadcast %cst_311 : f32 to vector<16x128xf32>
    %970 = arith.cmpf ogt, %963, %969 : vector<16x128xf32>
    %cst_312 = arith.constant -6.500000e+01 : f32
    %971 = vector.broadcast %cst_312 : f32 to vector<16x128xf32>
    %972 = arith.select %970, %971, %963 : vector<16x128xi1>, vector<16x128xf32>
    %cst_313 = arith.constant 4.000000e+00 : f32
    %973 = vector.broadcast %cst_313 : f32 to vector<16x128xf32>
    %974 = arith.addf %968, %973 : vector<16x128xf32>
    %975 = arith.select %970, %974, %968 : vector<16x128xi1>, vector<16x128xf32>
    %976 = arith.extui %970 : vector<16x128xi1> to vector<16x128xi32>
    %977 = arith.sitofp %976 : vector<16x128xi32> to vector<16x128xf32>
    %978 = arith.addf %956, %977 : vector<16x128xf32>
    %c44_i32 = arith.constant 44 : i32
    %cst_314 = arith.constant 2.000000e-02 : f32
    %979 = vector.broadcast %cst_314 : f32 to vector<16x128xf32>
    %980 = arith.mulf %979, %972 : vector<16x128xf32>
    %cst_315 = arith.constant 3.500000e+00 : f32
    %981 = vector.broadcast %cst_315 : f32 to vector<16x128xf32>
    %982 = arith.addf %980, %981 : vector<16x128xf32>
    %983 = arith.mulf %972, %982 : vector<16x128xf32>
    %984 = arith.subf %7, %975 : vector<16x128xf32>
    %985 = arith.addf %983, %984 : vector<16x128xf32>
    %cst_316 = arith.constant 9.900000e-01 : f32
    %986 = vector.broadcast %cst_316 : f32 to vector<16x128xf32>
    %987 = arith.mulf %986, %975 : vector<16x128xf32>
    %cst_317 = arith.constant 1.000000e-03 : f32
    %988 = vector.broadcast %cst_317 : f32 to vector<16x128xf32>
    %989 = arith.mulf %988, %985 : vector<16x128xf32>
    %990 = arith.addf %987, %989 : vector<16x128xf32>
    %cst_318 = arith.constant 3.000000e+01 : f32
    %991 = vector.broadcast %cst_318 : f32 to vector<16x128xf32>
    %992 = arith.cmpf ogt, %985, %991 : vector<16x128xf32>
    %cst_319 = arith.constant -6.500000e+01 : f32
    %993 = vector.broadcast %cst_319 : f32 to vector<16x128xf32>
    %994 = arith.select %992, %993, %985 : vector<16x128xi1>, vector<16x128xf32>
    %cst_320 = arith.constant 4.000000e+00 : f32
    %995 = vector.broadcast %cst_320 : f32 to vector<16x128xf32>
    %996 = arith.addf %990, %995 : vector<16x128xf32>
    %997 = arith.select %992, %996, %990 : vector<16x128xi1>, vector<16x128xf32>
    %998 = arith.extui %992 : vector<16x128xi1> to vector<16x128xi32>
    %999 = arith.sitofp %998 : vector<16x128xi32> to vector<16x128xf32>
    %1000 = arith.addf %978, %999 : vector<16x128xf32>
    %c45_i32 = arith.constant 45 : i32
    %cst_321 = arith.constant 2.000000e-02 : f32
    %1001 = vector.broadcast %cst_321 : f32 to vector<16x128xf32>
    %1002 = arith.mulf %1001, %994 : vector<16x128xf32>
    %cst_322 = arith.constant 3.500000e+00 : f32
    %1003 = vector.broadcast %cst_322 : f32 to vector<16x128xf32>
    %1004 = arith.addf %1002, %1003 : vector<16x128xf32>
    %1005 = arith.mulf %994, %1004 : vector<16x128xf32>
    %1006 = arith.subf %7, %997 : vector<16x128xf32>
    %1007 = arith.addf %1005, %1006 : vector<16x128xf32>
    %cst_323 = arith.constant 9.900000e-01 : f32
    %1008 = vector.broadcast %cst_323 : f32 to vector<16x128xf32>
    %1009 = arith.mulf %1008, %997 : vector<16x128xf32>
    %cst_324 = arith.constant 1.000000e-03 : f32
    %1010 = vector.broadcast %cst_324 : f32 to vector<16x128xf32>
    %1011 = arith.mulf %1010, %1007 : vector<16x128xf32>
    %1012 = arith.addf %1009, %1011 : vector<16x128xf32>
    %cst_325 = arith.constant 3.000000e+01 : f32
    %1013 = vector.broadcast %cst_325 : f32 to vector<16x128xf32>
    %1014 = arith.cmpf ogt, %1007, %1013 : vector<16x128xf32>
    %cst_326 = arith.constant -6.500000e+01 : f32
    %1015 = vector.broadcast %cst_326 : f32 to vector<16x128xf32>
    %1016 = arith.select %1014, %1015, %1007 : vector<16x128xi1>, vector<16x128xf32>
    %cst_327 = arith.constant 4.000000e+00 : f32
    %1017 = vector.broadcast %cst_327 : f32 to vector<16x128xf32>
    %1018 = arith.addf %1012, %1017 : vector<16x128xf32>
    %1019 = arith.select %1014, %1018, %1012 : vector<16x128xi1>, vector<16x128xf32>
    %1020 = arith.extui %1014 : vector<16x128xi1> to vector<16x128xi32>
    %1021 = arith.sitofp %1020 : vector<16x128xi32> to vector<16x128xf32>
    %1022 = arith.addf %1000, %1021 : vector<16x128xf32>
    %c46_i32 = arith.constant 46 : i32
    %cst_328 = arith.constant 2.000000e-02 : f32
    %1023 = vector.broadcast %cst_328 : f32 to vector<16x128xf32>
    %1024 = arith.mulf %1023, %1016 : vector<16x128xf32>
    %cst_329 = arith.constant 3.500000e+00 : f32
    %1025 = vector.broadcast %cst_329 : f32 to vector<16x128xf32>
    %1026 = arith.addf %1024, %1025 : vector<16x128xf32>
    %1027 = arith.mulf %1016, %1026 : vector<16x128xf32>
    %1028 = arith.subf %7, %1019 : vector<16x128xf32>
    %1029 = arith.addf %1027, %1028 : vector<16x128xf32>
    %cst_330 = arith.constant 9.900000e-01 : f32
    %1030 = vector.broadcast %cst_330 : f32 to vector<16x128xf32>
    %1031 = arith.mulf %1030, %1019 : vector<16x128xf32>
    %cst_331 = arith.constant 1.000000e-03 : f32
    %1032 = vector.broadcast %cst_331 : f32 to vector<16x128xf32>
    %1033 = arith.mulf %1032, %1029 : vector<16x128xf32>
    %1034 = arith.addf %1031, %1033 : vector<16x128xf32>
    %cst_332 = arith.constant 3.000000e+01 : f32
    %1035 = vector.broadcast %cst_332 : f32 to vector<16x128xf32>
    %1036 = arith.cmpf ogt, %1029, %1035 : vector<16x128xf32>
    %cst_333 = arith.constant -6.500000e+01 : f32
    %1037 = vector.broadcast %cst_333 : f32 to vector<16x128xf32>
    %1038 = arith.select %1036, %1037, %1029 : vector<16x128xi1>, vector<16x128xf32>
    %cst_334 = arith.constant 4.000000e+00 : f32
    %1039 = vector.broadcast %cst_334 : f32 to vector<16x128xf32>
    %1040 = arith.addf %1034, %1039 : vector<16x128xf32>
    %1041 = arith.select %1036, %1040, %1034 : vector<16x128xi1>, vector<16x128xf32>
    %1042 = arith.extui %1036 : vector<16x128xi1> to vector<16x128xi32>
    %1043 = arith.sitofp %1042 : vector<16x128xi32> to vector<16x128xf32>
    %1044 = arith.addf %1022, %1043 : vector<16x128xf32>
    %c47_i32 = arith.constant 47 : i32
    %cst_335 = arith.constant 2.000000e-02 : f32
    %1045 = vector.broadcast %cst_335 : f32 to vector<16x128xf32>
    %1046 = arith.mulf %1045, %1038 : vector<16x128xf32>
    %cst_336 = arith.constant 3.500000e+00 : f32
    %1047 = vector.broadcast %cst_336 : f32 to vector<16x128xf32>
    %1048 = arith.addf %1046, %1047 : vector<16x128xf32>
    %1049 = arith.mulf %1038, %1048 : vector<16x128xf32>
    %1050 = arith.subf %7, %1041 : vector<16x128xf32>
    %1051 = arith.addf %1049, %1050 : vector<16x128xf32>
    %cst_337 = arith.constant 9.900000e-01 : f32
    %1052 = vector.broadcast %cst_337 : f32 to vector<16x128xf32>
    %1053 = arith.mulf %1052, %1041 : vector<16x128xf32>
    %cst_338 = arith.constant 1.000000e-03 : f32
    %1054 = vector.broadcast %cst_338 : f32 to vector<16x128xf32>
    %1055 = arith.mulf %1054, %1051 : vector<16x128xf32>
    %1056 = arith.addf %1053, %1055 : vector<16x128xf32>
    %cst_339 = arith.constant 3.000000e+01 : f32
    %1057 = vector.broadcast %cst_339 : f32 to vector<16x128xf32>
    %1058 = arith.cmpf ogt, %1051, %1057 : vector<16x128xf32>
    %cst_340 = arith.constant -6.500000e+01 : f32
    %1059 = vector.broadcast %cst_340 : f32 to vector<16x128xf32>
    %1060 = arith.select %1058, %1059, %1051 : vector<16x128xi1>, vector<16x128xf32>
    %cst_341 = arith.constant 4.000000e+00 : f32
    %1061 = vector.broadcast %cst_341 : f32 to vector<16x128xf32>
    %1062 = arith.addf %1056, %1061 : vector<16x128xf32>
    %1063 = arith.select %1058, %1062, %1056 : vector<16x128xi1>, vector<16x128xf32>
    %1064 = arith.extui %1058 : vector<16x128xi1> to vector<16x128xi32>
    %1065 = arith.sitofp %1064 : vector<16x128xi32> to vector<16x128xf32>
    %1066 = arith.addf %1044, %1065 : vector<16x128xf32>
    %c48_i32 = arith.constant 48 : i32
    %cst_342 = arith.constant 2.000000e-02 : f32
    %1067 = vector.broadcast %cst_342 : f32 to vector<16x128xf32>
    %1068 = arith.mulf %1067, %1060 : vector<16x128xf32>
    %cst_343 = arith.constant 3.500000e+00 : f32
    %1069 = vector.broadcast %cst_343 : f32 to vector<16x128xf32>
    %1070 = arith.addf %1068, %1069 : vector<16x128xf32>
    %1071 = arith.mulf %1060, %1070 : vector<16x128xf32>
    %1072 = arith.subf %7, %1063 : vector<16x128xf32>
    %1073 = arith.addf %1071, %1072 : vector<16x128xf32>
    %cst_344 = arith.constant 9.900000e-01 : f32
    %1074 = vector.broadcast %cst_344 : f32 to vector<16x128xf32>
    %1075 = arith.mulf %1074, %1063 : vector<16x128xf32>
    %cst_345 = arith.constant 1.000000e-03 : f32
    %1076 = vector.broadcast %cst_345 : f32 to vector<16x128xf32>
    %1077 = arith.mulf %1076, %1073 : vector<16x128xf32>
    %1078 = arith.addf %1075, %1077 : vector<16x128xf32>
    %cst_346 = arith.constant 3.000000e+01 : f32
    %1079 = vector.broadcast %cst_346 : f32 to vector<16x128xf32>
    %1080 = arith.cmpf ogt, %1073, %1079 : vector<16x128xf32>
    %cst_347 = arith.constant -6.500000e+01 : f32
    %1081 = vector.broadcast %cst_347 : f32 to vector<16x128xf32>
    %1082 = arith.select %1080, %1081, %1073 : vector<16x128xi1>, vector<16x128xf32>
    %cst_348 = arith.constant 4.000000e+00 : f32
    %1083 = vector.broadcast %cst_348 : f32 to vector<16x128xf32>
    %1084 = arith.addf %1078, %1083 : vector<16x128xf32>
    %1085 = arith.select %1080, %1084, %1078 : vector<16x128xi1>, vector<16x128xf32>
    %1086 = arith.extui %1080 : vector<16x128xi1> to vector<16x128xi32>
    %1087 = arith.sitofp %1086 : vector<16x128xi32> to vector<16x128xf32>
    %1088 = arith.addf %1066, %1087 : vector<16x128xf32>
    %c49_i32 = arith.constant 49 : i32
    %cst_349 = arith.constant 2.000000e-02 : f32
    %1089 = vector.broadcast %cst_349 : f32 to vector<16x128xf32>
    %1090 = arith.mulf %1089, %1082 : vector<16x128xf32>
    %cst_350 = arith.constant 3.500000e+00 : f32
    %1091 = vector.broadcast %cst_350 : f32 to vector<16x128xf32>
    %1092 = arith.addf %1090, %1091 : vector<16x128xf32>
    %1093 = arith.mulf %1082, %1092 : vector<16x128xf32>
    %1094 = arith.subf %7, %1085 : vector<16x128xf32>
    %1095 = arith.addf %1093, %1094 : vector<16x128xf32>
    %cst_351 = arith.constant 9.900000e-01 : f32
    %1096 = vector.broadcast %cst_351 : f32 to vector<16x128xf32>
    %1097 = arith.mulf %1096, %1085 : vector<16x128xf32>
    %cst_352 = arith.constant 1.000000e-03 : f32
    %1098 = vector.broadcast %cst_352 : f32 to vector<16x128xf32>
    %1099 = arith.mulf %1098, %1095 : vector<16x128xf32>
    %1100 = arith.addf %1097, %1099 : vector<16x128xf32>
    %cst_353 = arith.constant 3.000000e+01 : f32
    %1101 = vector.broadcast %cst_353 : f32 to vector<16x128xf32>
    %1102 = arith.cmpf ogt, %1095, %1101 : vector<16x128xf32>
    %cst_354 = arith.constant -6.500000e+01 : f32
    %1103 = vector.broadcast %cst_354 : f32 to vector<16x128xf32>
    %1104 = arith.select %1102, %1103, %1095 : vector<16x128xi1>, vector<16x128xf32>
    %cst_355 = arith.constant 4.000000e+00 : f32
    %1105 = vector.broadcast %cst_355 : f32 to vector<16x128xf32>
    %1106 = arith.addf %1100, %1105 : vector<16x128xf32>
    %1107 = arith.select %1102, %1106, %1100 : vector<16x128xi1>, vector<16x128xf32>
    %1108 = arith.extui %1102 : vector<16x128xi1> to vector<16x128xi32>
    %1109 = arith.sitofp %1108 : vector<16x128xi32> to vector<16x128xf32>
    %1110 = arith.addf %1088, %1109 : vector<16x128xf32>
    %cst_356 = arith.constant 2.000000e-02 : f32
    %1111 = vector.broadcast %cst_356 : f32 to vector<16x128xf32>
    %1112 = arith.mulf %1110, %1111 : vector<16x128xf32>
    %c0_357 = arith.constant 0 : index
    %c0_358 = arith.constant 0 : index
    %1113 = vector.load %arg2[%c0_357, %c0_358] : memref<16x128xf32, #tpu.memory_space<vmem>>, vector<16x128xf32>
    tpu.vector_store %arg2[%c0_357, %c0_358], %1112 {strides = array<i32>} : memref<16x128xf32, #tpu.memory_space<vmem>>, vector<16x128xf32>,
    return
  }
  func.func @transform_0(%arg0: i32) -> (i32, i32) {
    %c0_i32 = arith.constant 0 : i32
    %c0_i32_0 = arith.constant 0 : i32
    return %arg0, %c0_i32 : i32, i32
  }
  func.func @transform_1(%arg0: i32) -> (i32, i32) {
    %c0_i32 = arith.constant 0 : i32
    %c0_i32_0 = arith.constant 0 : i32
    return %arg0, %c0_i32 : i32, i32
  }
}

</mosaic_0001>

<llo_original>
// kernel: m1net_forward.1
$region0: #{m1net_forward.1}
  #allocation0 [shape = 'u32[]', space=smem, size = 0x4, offset = 0x4, fixed_abs, tag = 'smem constant byte address 0x4 - core index']
  #allocation1 [shape = 'u32[144,128]{1,0:T(1,128)}', space=vmem, size = 0x12000, scoped, tag = 'internal scratch']
  %s0 = inlined_call_operand.hbm [shape: f32[16,128], index: 0, kind: input, shape index: {}]
  %s1 = inlined_call_operand.hbm [shape: f32[16,128], index: 1, kind: output, shape index: {}]
  %s2 = sld [smem:[#allocation0]]
  $region18: #{m1net_forward.1} parent=0
    _
  %s4 = ssub.s32 1, %s2
  %s5 = scalar_select 0, %s4, %s2
  $region1: #{m1net_forward.1} parent=0
    #allocation2 [shape = 'u8[8192]{0}', space=vmem, size = 0x2000, scoped, tag = 'input window, operand 0, single buffered']
    #allocation3 [shape = 's32[1]{0}', space=sflag, size = 0x4, scoped, tag = 'scoped memory for m1net_forward.1']
    #allocation4 [shape = 's32[1]{0}', space=sflag, size = 0x4, scoped, tag = 'scoped memory for m1net_forward.1']
    #allocation5 [shape = 'u8[8192]{0}', space=vmem, size = 0x2000, scoped, tag = 'output window, operand 0, single buffered']
    %6 = vsyncpa [#allocation3], 0
    %7 = vsyncpa [#allocation4], 0
    // Predicated region
    $region2: #{m1net_forward.1} parent=1 // pred_check
      _
    $region3: #{m1net_forward.1} parent=1 // pred_check_branch
      %9 = sbr.rel (0) target = $region5
    $region4: #{m1net_forward.1} parent=1 // pred_region
      %s11 = ssub.s32 256, 256
      %12 = vsyncadd [#allocation3], %s11
      %s13 = sshll.u32 [#allocation2], 4
      %s14 = int_to_ptr.vmem [resolvable:$true] %s13
      %19 = dma.hbm_to_vmem [thread:$0]  %s0, 256, %s14, [#allocation3], 128, 128, 8
    $region5: #{m1net_forward.1} parent=1 // pred_fallthru
      _
    // Predicated region
    $region6: #{m1net_forward.1} parent=1 // pred_check
      _
    $region7: #{m1net_forward.1} parent=1 // pred_check_branch
      %21 = sbr.rel (0) target = $region9
    $region8: #{m1net_forward.1} parent=1 // pred_region
      %22 = dma.done [#allocation3], 256
    $region9: #{m1net_forward.1} parent=1 // pred_fallthru
      _
    %v23 = vld [vmem:[#allocation2] sm:$0xff]
    %v24 = vld [vmem:[#allocation2 + $0x8] sm:$0xff]
    %v25 = vmul.f32 %v23, 100.0
    %v26 = vmul.f32 %v24, 100.0
    %v27 = vround.ne.pseudo %v25
    %v28 = vround.ne.pseudo %v26
    %v29 = vmul.f32 %v27, 0.5
    %v30 = vmul.f32 %v28, 0.5
    %v31 = vadd.f32 %v29, 70.0
    %v32 = vadd.f32 %v30, 70.0
    %v33 = vsub.f32 %v31, -7.0
    %v34 = vsub.f32 %v32, -7.0
    %v35 = vadd.f32 %v33, -147.0
    %v36 = vadd.f32 %v34, -147.0
    %v37 = vmul.f32 %v35, 0.001
    %v38 = vmul.f32 %v36, 0.001
    %v39 = vadd.f32 %v37, -6.9300003
    %v40 = vadd.f32 %v38, -6.9300003
    %vm41 = vcmp.gt.f32.partialorder %v35, 30.0
    %vm42 = vcmp.gt.f32.partialorder %v36, 30.0
    %v43 = vsel %vm41, -65.0, %v35
    %v44 = vsel %vm42, -65.0, %v36
    %v45 = vadd.f32 %v39, 4.0
    %v46 = vadd.f32 %v40, 4.0
    %v47 = vsel %vm41, %v45, %v39
    %v48 = vsel %vm42, %v46, %v40
    %v49 = vsel %vm41, 1, 0
    %v50 = vsel %vm42, 1, 0
    %v51 = vcvt.s32.f32 %v49
    %v52 = vcvt.s32.f32 %v50
    %v53 = vadd.f32 %v51, 0.0
    %v54 = vadd.f32 %v52, 0.0
    %v55 = vmul.f32 %v43, 0.02
    %v56 = vmul.f32 %v44, 0.02
    %v57 = vadd.f32 %v55, 3.5
    %v58 = vadd.f32 %v56, 3.5
    %v59 = vmul.f32 %v43, %v57
    %v60 = vmul.f32 %v44, %v58
    %v61 = vsub.f32 %v31, %v47
    %v62 = vsub.f32 %v32, %v48
    %v63 = vadd.f32 %v59, %v61
    %v64 = vadd.f32 %v60, %v62
    %v65 = vmul.f32 %v47, 0.99
    %v66 = vmul.f32 %v48, 0.99
    %v67 = vmul.f32 %v63, 0.001
    %v68 = vmul.f32 %v64, 0.001
    %v69 = vadd.f32 %v65, %v67
    %v70 = vadd.f32 %v66, %v68
    %vm71 = vcmp.gt.f32.partialorder %v63, 30.0
    %vm72 = vcmp.gt.f32.partialorder %v64, 30.0
    %v73 = vsel %vm71, -65.0, %v63
    %v74 = vsel %vm72, -65.0, %v64
    %v75 = vadd.f32 %v69, 4.0
    %v76 = vadd.f32 %v70, 4.0
    %v77 = vsel %vm71, %v75, %v69
    %v78 = vsel %vm72, %v76, %v70
    %v79 = vsel %vm71, 1, 0
    %v80 = vsel %vm72, 1, 0
    %v81 = vcvt.s32.f32 %v79
    %v82 = vcvt.s32.f32 %v80
    %v83 = vadd.f32 %v53, %v81
    %v84 = vadd.f32 %v54, %v82
    %v85 = vmul.f32 %v73, 0.02
    %v86 = vmul.f32 %v74, 0.02
    %v87 = vadd.f32 %v85, 3.5
    %v88 = vadd.f32 %v86, 3.5
    %v89 = vmul.f32 %v73, %v87
    %v90 = vmul.f32 %v74, %v88
    %v91 = vsub.f32 %v31, %v77
    %v92 = vsub.f32 %v32, %v78
    %v93 = vadd.f32 %v89, %v91
    %v94 = vadd.f32 %v90, %v92
    %v95 = vmul.f32 %v77, 0.99
    %v96 = vmul.f32 %v78, 0.99
    %v97 = vmul.f32 %v93, 0.001
    %v98 = vmul.f32 %v94, 0.001
    %v99 = vadd.f32 %v95, %v97
    %v100 = vadd.f32 %v96, %v98
    %vm101 = vcmp.gt.f32.partialorder %v93, 30.0
    %vm102 = vcmp.gt.f32.partialorder %v94, 30.0
    %v103 = vsel %vm101, -65.0, %v93
    %v104 = vsel %vm102, -65.0, %v94
    %v105 = vadd.f32 %v99, 4.0
    %v106 = vadd.f32 %v100, 4.0
    %v107 = vsel %vm101, %v105, %v99
    %v108 = vsel %vm102, %v106, %v100
    %v109 = vsel %vm101, 1, 0
    %v110 = vsel %vm102, 1, 0
    %v111 = vcvt.s32.f32 %v109
    %v112 = vcvt.s32.f32 %v110
    %v113 = vadd.f32 %v83, %v111
    %v114 = vadd.f32 %v84, %v112
    %v115 = vmul.f32 %v103, 0.02
    %v116 = vmul.f32 %v104, 0.02
    %v117 = vadd.f32 %v115, 3.5
    %v118 = vadd.f32 %v116, 3.5
    %v119 = vmul.f32 %v103, %v117
    %v120 = vmul.f32 %v104, %v118
    %v121 = vsub.f32 %v31, %v107
    %v122 = vsub.f32 %v32, %v108
    %v123 = vadd.f32 %v119, %v121
    %v124 = vadd.f32 %v120, %v122
    %v125 = vmul.f32 %v107, 0.99
    %v126 = vmul.f32 %v108, 0.99
    %v127 = vmul.f32 %v123, 0.001
    %v128 = vmul.f32 %v124, 0.001
    %v129 = vadd.f32 %v125, %v127
    %v130 = vadd.f32 %v126, %v128
    %vm131 = vcmp.gt.f32.partialorder %v123, 30.0
    %vm132 = vcmp.gt.f32.partialorder %v124, 30.0
    %v133 = vsel %vm131, -65.0, %v123
    %v134 = vsel %vm132, -65.0, %v124
    %v135 = vadd.f32 %v129, 4.0
    %v136 = vadd.f32 %v130, 4.0
    %v137 = vsel %vm131, %v135, %v129
    %v138 = vsel %vm132, %v136, %v130
    %v139 = vsel %vm131, 1, 0
    %v140 = vsel %vm132, 1, 0
    %v141 = vcvt.s32.f32 %v139
    %v142 = vcvt.s32.f32 %v140
    %v143 = vadd.f32 %v113, %v141
    %v144 = vadd.f32 %v114, %v142
    %v145 = vmul.f32 %v133, 0.02
    %v146 = vmul.f32 %v134, 0.02
    %v147 = vadd.f32 %v145, 3.5
    %v148 = vadd.f32 %v146, 3.5
    %v149 = vmul.f32 %v133, %v147
    %v150 = vmul.f32 %v134, %v148
    %v151 = vsub.f32 %v31, %v137
    %v152 = vsub.f32 %v32, %v138
    %v153 = vadd.f32 %v149, %v151
    %v154 = vadd.f32 %v150, %v152
    %v155 = vmul.f32 %v137, 0.99
    %v156 = vmul.f32 %v138, 0.99
    %v157 = vmul.f32 %v153, 0.001
    %v158 = vmul.f32 %v154, 0.001
    %v159 = vadd.f32 %v155, %v157
    %v160 = vadd.f32 %v156, %v158
    %vm161 = vcmp.gt.f32.partialorder %v153, 30.0
    %vm162 = vcmp.gt.f32.partialorder %v154, 30.0
    %v163 = vsel %vm161, -65.0, %v153
    %v164 = vsel %vm162, -65.0, %v154
    %v165 = vadd.f32 %v159, 4.0
    %v166 = vadd.f32 %v160, 4.0
    %v167 = vsel %vm161, %v165, %v159
    %v168 = vsel %vm162, %v166, %v160
    %v169 = vsel %vm161, 1, 0
    %v170 = vsel %vm162, 1, 0
    %v171 = vcvt.s32.f32 %v169
    %v172 = vcvt.s32.f32 %v170
    %v173 = vadd.f32 %v143, %v171
    %v174 = vadd.f32 %v144, %v172
    %v175 = vmul.f32 %v163, 0.02
    %v176 = vmul.f32 %v164, 0.02
    %v177 = vadd.f32 %v175, 3.5
    %v178 = vadd.f32 %v176, 3.5
    %v179 = vmul.f32 %v163, %v177
    %v180 = vmul.f32 %v164, %v178
    %v181 = vsub.f32 %v31, %v167
    %v182 = vsub.f32 %v32, %v168
    %v183 = vadd.f32 %v179, %v181
    %v184 = vadd.f32 %v180, %v182
    %v185 = vmul.f32 %v167, 0.99
    %v186 = vmul.f32 %v168, 0.99
    %v187 = vmul.f32 %v183, 0.001
    %v188 = vmul.f32 %v184, 0.001
    %v189 = vadd.f32 %v185, %v187
    %v190 = vadd.f32 %v186, %v188
    %vm191 = vcmp.gt.f32.partialorder %v183, 30.0
    %vm192 = vcmp.gt.f32.partialorder %v184, 30.0
    %v193 = vsel %vm191, -65.0, %v183
    %v194 = vsel %vm192, -65.0, %v184
    %v195 = vadd.f32 %v189, 4.0
    %v196 = vadd.f32 %v190, 4.0
    %v197 = vsel %vm191, %v195, %v189
    %v198 = vsel %vm192, %v196, %v190
    %v199 = vsel %vm191, 1, 0
    %v200 = vsel %vm192, 1, 0
    %v201 = vcvt.s32.f32 %v199
    %v202 = vcvt.s32.f32 %v200
    %v203 = vadd.f32 %v173, %v201
    %v204 = vadd.f32 %v174, %v202
    %v205 = vmul.f32 %v193, 0.02
    %v206 = vmul.f32 %v194, 0.02
    %v207 = vadd.f32 %v205, 3.5
    %v208 = vadd.f32 %v206, 3.5
    %v209 = vmul.f32 %v193, %v207
    %v210 = vmul.f32 %v194, %v208
    %v211 = vsub.f32 %v31, %v197
    %v212 = vsub.f32 %v32, %v198
    %v213 = vadd.f32 %v209, %v211
    %v214 = vadd.f32 %v210, %v212
    %v215 = vmul.f32 %v197, 0.99
    %v216 = vmul.f32 %v198, 0.99
    %v217 = vmul.f32 %v213, 0.001
    %v218 = vmul.f32 %v214, 0.001
    %v219 = vadd.f32 %v215, %v217
    %v220 = vadd.f32 %v216, %v218
    %vm221 = vcmp.gt.f32.partialorder %v213, 30.0
    %vm222 = vcmp.gt.f32.partialorder %v214, 30.0
    %v223 = vsel %vm221, -65.0, %v213
    %v224 = vsel %vm222, -65.0, %v214
    %v225 = vadd.f32 %v219, 4.0
    %v226 = vadd.f32 %v220, 4.0
    %v227 = vsel %vm221, %v225, %v219
    %v228 = vsel %vm222, %v226, %v220
    %v229 = vsel %vm221, 1, 0
    %v230 = vsel %vm222, 1, 0
    %v231 = vcvt.s32.f32 %v229
    %v232 = vcvt.s32.f32 %v230
    %v233 = vadd.f32 %v203, %v231
    %v234 = vadd.f32 %v204, %v232
    %v235 = vmul.f32 %v223, 0.02
    %v236 = vmul.f32 %v224, 0.02
    %v237 = vadd.f32 %v235, 3.5
    %v238 = vadd.f32 %v236, 3.5
    %v239 = vmul.f32 %v223, %v237
    %v240 = vmul.f32 %v224, %v238
    %v241 = vsub.f32 %v31, %v227
    %v242 = vsub.f32 %v32, %v228
    %v243 = vadd.f32 %v239, %v241
    %v244 = vadd.f32 %v240, %v242
    %v245 = vmul.f32 %v227, 0.99
    %v246 = vmul.f32 %v228, 0.99
    %v247 = vmul.f32 %v243, 0.001
    %v248 = vmul.f32 %v244, 0.001
    %v249 = vadd.f32 %v245, %v247
    %v250 = vadd.f32 %v246, %v248
    %vm251 = vcmp.gt.f32.partialorder %v243, 30.0
    %vm252 = vcmp.gt.f32.partialorder %v244, 30.0
    %v253 = vsel %vm251, -65.0, %v243
    %v254 = vsel %vm252, -65.0, %v244
    %v255 = vadd.f32 %v249, 4.0
    %v256 = vadd.f32 %v250, 4.0
    %v257 = vsel %vm251, %v255, %v249
    %v258 = vsel %vm252, %v256, %v250
    %v259 = vsel %vm251, 1, 0
    %v260 = vsel %vm252, 1, 0
    %v261 = vcvt.s32.f32 %v259
    %v262 = vcvt.s32.f32 %v260
    %v263 = vadd.f32 %v233, %v261
    %v264 = vadd.f32 %v234, %v262
    %v265 = vmul.f32 %v253, 0.02
    %v266 = vmul.f32 %v254, 0.02
    %v267 = vadd.f32 %v265, 3.5
    %v268 = vadd.f32 %v266, 3.5
    %v269 = vmul.f32 %v253, %v267
    %v270 = vmul.f32 %v254, %v268
    %v271 = vsub.f32 %v31, %v257
    %v272 = vsub.f32 %v32, %v258
    %v273 = vadd.f32 %v269, %v271
    %v274 = vadd.f32 %v270, %v272
    %v275 = vmul.f32 %v257, 0.99
    %v276 = vmul.f32 %v258, 0.99
    %v277 = vmul.f32 %v273, 0.001
    %v278 = vmul.f32 %v274, 0.001
    %v279 = vadd.f32 %v275, %v277
    %v280 = vadd.f32 %v276, %v278
    %vm281 = vcmp.gt.f32.partialorder %v273, 30.0
    %vm282 = vcmp.gt.f32.partialorder %v274, 30.0
    %v283 = vsel %vm281, -65.0, %v273
    %v284 = vsel %vm282, -65.0, %v274
    %v285 = vadd.f32 %v279, 4.0
    %v286 = vadd.f32 %v280, 4.0
    %v287 = vsel %vm281, %v285, %v279
    %v288 = vsel %vm282, %v286, %v280
    %v289 = vsel %vm281, 1, 0
    %v290 = vsel %vm282, 1, 0
    %v291 = vcvt.s32.f32 %v289
    %v292 = vcvt.s32.f32 %v290
    %v293 = vadd.f32 %v263, %v291
    %v294 = vadd.f32 %v264, %v292
    %v295 = vmul.f32 %v283, 0.02
    %v296 = vmul.f32 %v284, 0.02
    %v297 = vadd.f32 %v295, 3.5
    %v298 = vadd.f32 %v296, 3.5
    %v299 = vmul.f32 %v283, %v297
    %v300 = vmul.f32 %v284, %v298
    %v301 = vsub.f32 %v31, %v287
    %v302 = vsub.f32 %v32, %v288
    %v303 = vadd.f32 %v299, %v301
    %v304 = vadd.f32 %v300, %v302
    %v305 = vmul.f32 %v287, 0.99
    %v306 = vmul.f32 %v288, 0.99
    %v307 = vmul.f32 %v303, 0.001
    %v308 = vmul.f32 %v304, 0.001
    %v309 = vadd.f32 %v305, %v307
    %v310 = vadd.f32 %v306, %v308
    %vm311 = vcmp.gt.f32.partialorder %v303, 30.0
    %vm312 = vcmp.gt.f32.partialorder %v304, 30.0
    %v313 = vsel %vm311, -65.0, %v303
    %v314 = vsel %vm312, -65.0, %v304
    %v315 = vadd.f32 %v309, 4.0
    %v316 = vadd.f32 %v310, 4.0
    %v317 = vsel %vm311, %v315, %v309
    %v318 = vsel %vm312, %v316, %v310
    %v319 = vsel %vm311, 1, 0
    %v320 = vsel %vm312, 1, 0
    %v321 = vcvt.s32.f32 %v319
    %v322 = vcvt.s32.f32 %v320
    %v323 = vadd.f32 %v293, %v321
    %v324 = vadd.f32 %v294, %v322
    %v325 = vmul.f32 %v313, 0.02
    %v326 = vmul.f32 %v314, 0.02
    %v327 = vadd.f32 %v325, 3.5
    %v328 = vadd.f32 %v326, 3.5
    %v329 = vmul.f32 %v313, %v327
    %v330 = vmul.f32 %v314, %v328
    %v331 = vsub.f32 %v31, %v317
    %v332 = vsub.f32 %v32, %v318
    %v333 = vadd.f32 %v329, %v331
    %v334 = vadd.f32 %v330, %v332
    %v335 = vmul.f32 %v317, 0.99
    %v336 = vmul.f32 %v318, 0.99
    %v337 = vmul.f32 %v333, 0.001
    %v338 = vmul.f32 %v334, 0.001
    %v339 = vadd.f32 %v335, %v337
    %v340 = vadd.f32 %v336, %v338
    %vm341 = vcmp.gt.f32.partialorder %v333, 30.0
    %vm342 = vcmp.gt.f32.partialorder %v334, 30.0
    %v343 = vsel %vm341, -65.0, %v333
    %v344 = vsel %vm342, -65.0, %v334
    %v345 = vadd.f32 %v339, 4.0
    %v346 = vadd.f32 %v340, 4.0
    %v347 = vsel %vm341, %v345, %v339
    %v348 = vsel %vm342, %v346, %v340
    %v349 = vsel %vm341, 1, 0
    %v350 = vsel %vm342, 1, 0
    %v351 = vcvt.s32.f32 %v349
    %v352 = vcvt.s32.f32 %v350
    %v353 = vadd.f32 %v323, %v351
    %v354 = vadd.f32 %v324, %v352
    %v355 = vmul.f32 %v343, 0.02
    %v356 = vmul.f32 %v344, 0.02
    %v357 = vadd.f32 %v355, 3.5
    %v358 = vadd.f32 %v356, 3.5
    %v359 = vmul.f32 %v343, %v357
    %v360 = vmul.f32 %v344, %v358
    %v361 = vsub.f32 %v31, %v347
    %v362 = vsub.f32 %v32, %v348
    %v363 = vadd.f32 %v359, %v361
    %v364 = vadd.f32 %v360, %v362
    %v365 = vmul.f32 %v347, 0.99
    %v366 = vmul.f32 %v348, 0.99
    %v367 = vmul.f32 %v363, 0.001
    %v368 = vmul.f32 %v364, 0.001
    %v369 = vadd.f32 %v365, %v367
    %v370 = vadd.f32 %v366, %v368
    %vm371 = vcmp.gt.f32.partialorder %v363, 30.0
    %vm372 = vcmp.gt.f32.partialorder %v364, 30.0
    %v373 = vsel %vm371, -65.0, %v363
    %v374 = vsel %vm372, -65.0, %v364
    %v375 = vadd.f32 %v369, 4.0
    %v376 = vadd.f32 %v370, 4.0
    %v377 = vsel %vm371, %v375, %v369
    %v378 = vsel %vm372, %v376, %v370
    %v379 = vsel %vm371, 1, 0
    %v380 = vsel %vm372, 1, 0
    %v381 = vcvt.s32.f32 %v379
    %v382 = vcvt.s32.f32 %v380
    %v383 = vadd.f32 %v353, %v381
    %v384 = vadd.f32 %v354, %v382
    %v385 = vmul.f32 %v373, 0.02
    %v386 = vmul.f32 %v374, 0.02
    %v387 = vadd.f32 %v385, 3.5
    %v388 = vadd.f32 %v386, 3.5
    %v389 = vmul.f32 %v373, %v387
    %v390 = vmul.f32 %v374, %v388
    %v391 = vsub.f32 %v31, %v377
    %v392 = vsub.f32 %v32, %v378
    %v393 = vadd.f32 %v389, %v391
    %v394 = vadd.f32 %v390, %v392
    %v395 = vmul.f32 %v377, 0.99
    %v396 = vmul.f32 %v378, 0.99
    %v397 = vmul.f32 %v393, 0.001
    %v398 = vmul.f32 %v394, 0.001
    %v399 = vadd.f32 %v395, %v397
    %v400 = vadd.f32 %v396, %v398
    %vm401 = vcmp.gt.f32.partialorder %v393, 30.0
    %vm402 = vcmp.gt.f32.partialorder %v394, 30.0
    %v403 = vsel %vm401, -65.0, %v393
    %v404 = vsel %vm402, -65.0, %v394
    %v405 = vadd.f32 %v399, 4.0
    %v406 = vadd.f32 %v400, 4.0
    %v407 = vsel %vm401, %v405, %v399
    %v408 = vsel %vm402, %v406, %v400
    %v409 = vsel %vm401, 1, 0
    %v410 = vsel %vm402, 1, 0
    %v411 = vcvt.s32.f32 %v409
    %v412 = vcvt.s32.f32 %v410
    %v413 = vadd.f32 %v383, %v411
    %v414 = vadd.f32 %v384, %v412
    %v415 = vmul.f32 %v403, 0.02
    %v416 = vmul.f32 %v404, 0.02
    %v417 = vadd.f32 %v415, 3.5
    %v418 = vadd.f32 %v416, 3.5
    %v419 = vmul.f32 %v403, %v417
    %v420 = vmul.f32 %v404, %v418
    %v421 = vsub.f32 %v31, %v407
    %v422 = vsub.f32 %v32, %v408
    %v423 = vadd.f32 %v419, %v421
    %v424 = vadd.f32 %v420, %v422
    %v425 = vmul.f32 %v407, 0.99
    %v426 = vmul.f32 %v408, 0.99
    %v427 = vmul.f32 %v423, 0.001
    %v428 = vmul.f32 %v424, 0.001
    %v429 = vadd.f32 %v425, %v427
    %v430 = vadd.f32 %v426, %v428
    %vm431 = vcmp.gt.f32.partialorder %v423, 30.0
    %vm432 = vcmp.gt.f32.partialorder %v424, 30.0
    %v433 = vsel %vm431, -65.0, %v423
    %v434 = vsel %vm432, -65.0, %v424
    %v435 = vadd.f32 %v429, 4.0
    %v436 = vadd.f32 %v430, 4.0
    %v437 = vsel %vm431, %v435, %v429
    %v438 = vsel %vm432, %v436, %v430
    %v439 = vsel %vm431, 1, 0
    %v440 = vsel %vm432, 1, 0
    %v441 = vcvt.s32.f32 %v439
    %v442 = vcvt.s32.f32 %v440
    %v443 = vadd.f32 %v413, %v441
    %v444 = vadd.f32 %v414, %v442
    %v445 = vmul.f32 %v433, 0.02
    %v446 = vmul.f32 %v434, 0.02
    %v447 = vadd.f32 %v445, 3.5
    %v448 = vadd.f32 %v446, 3.5
    %v449 = vmul.f32 %v433, %v447
    %v450 = vmul.f32 %v434, %v448
    %v451 = vsub.f32 %v31, %v437
    %v452 = vsub.f32 %v32, %v438
    %v453 = vadd.f32 %v449, %v451
    %v454 = vadd.f32 %v450, %v452
    %v455 = vmul.f32 %v437, 0.99
    %v456 = vmul.f32 %v438, 0.99
    %v457 = vmul.f32 %v453, 0.001
    %v458 = vmul.f32 %v454, 0.001
    %v459 = vadd.f32 %v455, %v457
    %v460 = vadd.f32 %v456, %v458
    %vm461 = vcmp.gt.f32.partialorder %v453, 30.0
    %vm462 = vcmp.gt.f32.partialorder %v454, 30.0
    %v463 = vsel %vm461, -65.0, %v453
    %v464 = vsel %vm462, -65.0, %v454
    %v465 = vadd.f32 %v459, 4.0
    %v466 = vadd.f32 %v460, 4.0
    %v467 = vsel %vm461, %v465, %v459
    %v468 = vsel %vm462, %v466, %v460
    %v469 = vsel %vm461, 1, 0
    %v470 = vsel %vm462, 1, 0
    %v471 = vcvt.s32.f32 %v469
    %v472 = vcvt.s32.f32 %v470
    %v473 = vadd.f32 %v443, %v471
    %v474 = vadd.f32 %v444, %v472
    %v475 = vmul.f32 %v463, 0.02
    %v476 = vmul.f32 %v464, 0.02
    %v477 = vadd.f32 %v475, 3.5
    %v478 = vadd.f32 %v476, 3.5
    %v479 = vmul.f32 %v463, %v477
    %v480 = vmul.f32 %v464, %v478
    %v481 = vsub.f32 %v31, %v467
    %v482 = vsub.f32 %v32, %v468
    %v483 = vadd.f32 %v479, %v481
    %v484 = vadd.f32 %v480, %v482
    %v485 = vmul.f32 %v467, 0.99
    %v486 = vmul.f32 %v468, 0.99
    %v487 = vmul.f32 %v483, 0.001
    %v488 = vmul.f32 %v484, 0.001
    %v489 = vadd.f32 %v485, %v487
    %v490 = vadd.f32 %v486, %v488
    %vm491 = vcmp.gt.f32.partialorder %v483, 30.0
    %vm492 = vcmp.gt.f32.partialorder %v484, 30.0
    %v493 = vsel %vm491, -65.0, %v483
    %v494 = vsel %vm492, -65.0, %v484
    %v495 = vadd.f32 %v489, 4.0
    %v496 = vadd.f32 %v490, 4.0
    %v497 = vsel %vm491, %v495, %v489
    %v498 = vsel %vm492, %v496, %v490
    %v499 = vsel %vm491, 1, 0
    %v500 = vsel %vm492, 1, 0
    %v501 = vcvt.s32.f32 %v499
    %v502 = vcvt.s32.f32 %v500
    %v503 = vadd.f32 %v473, %v501
    %v504 = vadd.f32 %v474, %v502
    %v505 = vmul.f32 %v493, 0.02
    %v506 = vmul.f32 %v494, 0.02
    %v507 = vadd.f32 %v505, 3.5
    %v508 = vadd.f32 %v506, 3.5
    %v509 = vmul.f32 %v493, %v507
    %v510 = vmul.f32 %v494, %v508
    %v511 = vsub.f32 %v31, %v497
    %v512 = vsub.f32 %v32, %v498
    %v513 = vadd.f32 %v509, %v511
    %v514 = vadd.f32 %v510, %v512
    %v515 = vmul.f32 %v497, 0.99
    %v516 = vmul.f32 %v498, 0.99
    %v517 = vmul.f32 %v513, 0.001
    %v518 = vmul.f32 %v514, 0.001
    %v519 = vadd.f32 %v515, %v517
    %v520 = vadd.f32 %v516, %v518
    %vm521 = vcmp.gt.f32.partialorder %v513, 30.0
    %vm522 = vcmp.gt.f32.partialorder %v514, 30.0
    %v523 = vsel %vm521, -65.0, %v513
    %v524 = vsel %vm522, -65.0, %v514
    %v525 = vadd.f32 %v519, 4.0
    %v526 = vadd.f32 %v520, 4.0
    %v527 = vsel %vm521, %v525, %v519
    %v528 = vsel %vm522, %v526, %v520
    %v529 = vsel %vm521, 1, 0
    %v530 = vsel %vm522, 1, 0
    %v531 = vcvt.s32.f32 %v529
    %v532 = vcvt.s32.f32 %v530
    %v533 = vadd.f32 %v503, %v531
    %v534 = vadd.f32 %v504, %v532
    %v535 = vmul.f32 %v523, 0.02
    %v536 = vmul.f32 %v524, 0.02
    %v537 = vadd.f32 %v535, 3.5
    %v538 = vadd.f32 %v536, 3.5
    %v539 = vmul.f32 %v523, %v537
    %v540 = vmul.f32 %v524, %v538
    %v541 = vsub.f32 %v31, %v527
    %v542 = vsub.f32 %v32, %v528
    %v543 = vadd.f32 %v539, %v541
    %v544 = vadd.f32 %v540, %v542
    %v545 = vmul.f32 %v527, 0.99
    %v546 = vmul.f32 %v528, 0.99
    %v547 = vmul.f32 %v543, 0.001
    %v548 = vmul.f32 %v544, 0.001
    %v549 = vadd.f32 %v545, %v547
    %v550 = vadd.f32 %v546, %v548
    %vm551 = vcmp.gt.f32.partialorder %v543, 30.0
    %vm552 = vcmp.gt.f32.partialorder %v544, 30.0
    %v553 = vsel %vm551, -65.0, %v543
    %v554 = vsel %vm552, -65.0, %v544
    %v555 = vadd.f32 %v549, 4.0
    %v556 = vadd.f32 %v550, 4.0
    %v557 = vsel %vm551, %v555, %v549
    %v558 = vsel %vm552, %v556, %v550
    %v559 = vsel %vm551, 1, 0
    %v560 = vsel %vm552, 1, 0
    %v561 = vcvt.s32.f32 %v559
    %v562 = vcvt.s32.f32 %v560
    %v563 = vadd.f32 %v533, %v561
    %v564 = vadd.f32 %v534, %v562
    %v565 = vmul.f32 %v553, 0.02
    %v566 = vmul.f32 %v554, 0.02
    %v567 = vadd.f32 %v565, 3.5
    %v568 = vadd.f32 %v566, 3.5
    %v569 = vmul.f32 %v553, %v567
    %v570 = vmul.f32 %v554, %v568
    %v571 = vsub.f32 %v31, %v557
    %v572 = vsub.f32 %v32, %v558
    %v573 = vadd.f32 %v569, %v571
    %v574 = vadd.f32 %v570, %v572
    %v575 = vmul.f32 %v557, 0.99
    %v576 = vmul.f32 %v558, 0.99
    %v577 = vmul.f32 %v573, 0.001
    %v578 = vmul.f32 %v574, 0.001
    %v579 = vadd.f32 %v575, %v577
    %v580 = vadd.f32 %v576, %v578
    %vm581 = vcmp.gt.f32.partialorder %v573, 30.0
    %vm582 = vcmp.gt.f32.partialorder %v574, 30.0
    %v583 = vsel %vm581, -65.0, %v573
    %v584 = vsel %vm582, -65.0, %v574
    %v585 = vadd.f32 %v579, 4.0
    %v586 = vadd.f32 %v580, 4.0
    %v587 = vsel %vm581, %v585, %v579
    %v588 = vsel %vm582, %v586, %v580
    %v589 = vsel %vm581, 1, 0
    %v590 = vsel %vm582, 1, 0
    %v591 = vcvt.s32.f32 %v589
    %v592 = vcvt.s32.f32 %v590
    %v593 = vadd.f32 %v563, %v591
    %v594 = vadd.f32 %v564, %v592
    %v595 = vmul.f32 %v583, 0.02
    %v596 = vmul.f32 %v584, 0.02
    %v597 = vadd.f32 %v595, 3.5
    %v598 = vadd.f32 %v596, 3.5
    %v599 = vmul.f32 %v583, %v597
    %v600 = vmul.f32 %v584, %v598
    %v601 = vsub.f32 %v31, %v587
    %v602 = vsub.f32 %v32, %v588
    %v603 = vadd.f32 %v599, %v601
    %v604 = vadd.f32 %v600, %v602
    %v605 = vmul.f32 %v587, 0.99
    %v606 = vmul.f32 %v588, 0.99
    %v607 = vmul.f32 %v603, 0.001
    %v608 = vmul.f32 %v604, 0.001
    %v609 = vadd.f32 %v605, %v607
    %v610 = vadd.f32 %v606, %v608
    %vm611 = vcmp.gt.f32.partialorder %v603, 30.0
    %vm612 = vcmp.gt.f32.partialorder %v604, 30.0
    %v613 = vsel %vm611, -65.0, %v603
    %v614 = vsel %vm612, -65.0, %v604
    %v615 = vadd.f32 %v609, 4.0
    %v616 = vadd.f32 %v610, 4.0
    %v617 = vsel %vm611, %v615, %v609
    %v618 = vsel %vm612, %v616, %v610
    %v619 = vsel %vm611, 1, 0
    %v620 = vsel %vm612, 1, 0
    %v621 = vcvt.s32.f32 %v619
    %v622 = vcvt.s32.f32 %v620
    %v623 = vadd.f32 %v593, %v621
    %v624 = vadd.f32 %v594, %v622
    %v625 = vmul.f32 %v613, 0.02
    %v626 = vmul.f32 %v614, 0.02
    %v627 = vadd.f32 %v625, 3.5
    %v628 = vadd.f32 %v626, 3.5
    %v629 = vmul.f32 %v613, %v627
    %v630 = vmul.f32 %v614, %v628
    %v631 = vsub.f32 %v31, %v617
    %v632 = vsub.f32 %v32, %v618
    %v633 = vadd.f32 %v629, %v631
    %v634 = vadd.f32 %v630, %v632
    %v635 = vmul.f32 %v617, 0.99
    %v636 = vmul.f32 %v618, 0.99
    %v637 = vmul.f32 %v633, 0.001
    %v638 = vmul.f32 %v634, 0.001
    %v639 = vadd.f32 %v635, %v637
    %v640 = vadd.f32 %v636, %v638
    %vm641 = vcmp.gt.f32.partialorder %v633, 30.0
    %vm642 = vcmp.gt.f32.partialorder %v634, 30.0
    %v643 = vsel %vm641, -65.0, %v633
    %v644 = vsel %vm642, -65.0, %v634
    %v645 = vadd.f32 %v639, 4.0
    %v646 = vadd.f32 %v640, 4.0
    %v647 = vsel %vm641, %v645, %v639
    %v648 = vsel %vm642, %v646, %v640
    %v649 = vsel %vm641, 1, 0
    %v650 = vsel %vm642, 1, 0
    %v651 = vcvt.s32.f32 %v649
    %v652 = vcvt.s32.f32 %v650
    %v653 = vadd.f32 %v623, %v651
    %v654 = vadd.f32 %v624, %v652
    %v655 = vmul.f32 %v643, 0.02
    %v656 = vmul.f32 %v644, 0.02
    %v657 = vadd.f32 %v655, 3.5
    %v658 = vadd.f32 %v656, 3.5
    %v659 = vmul.f32 %v643, %v657
    %v660 = vmul.f32 %v644, %v658
    %v661 = vsub.f32 %v31, %v647
    %v662 = vsub.f32 %v32, %v648
    %v663 = vadd.f32 %v659, %v661
    %v664 = vadd.f32 %v660, %v662
    %v665 = vmul.f32 %v647, 0.99
    %v666 = vmul.f32 %v648, 0.99
    %v667 = vmul.f32 %v663, 0.001
    %v668 = vmul.f32 %v664, 0.001
    %v669 = vadd.f32 %v665, %v667
    %v670 = vadd.f32 %v666, %v668
    %vm671 = vcmp.gt.f32.partialorder %v663, 30.0
    %vm672 = vcmp.gt.f32.partialorder %v664, 30.0
    %v673 = vsel %vm671, -65.0, %v663
    %v674 = vsel %vm672, -65.0, %v664
    %v675 = vadd.f32 %v669, 4.0
    %v676 = vadd.f32 %v670, 4.0
    %v677 = vsel %vm671, %v675, %v669
    %v678 = vsel %vm672, %v676, %v670
    %v679 = vsel %vm671, 1, 0
    %v680 = vsel %vm672, 1, 0
    %v681 = vcvt.s32.f32 %v679
    %v682 = vcvt.s32.f32 %v680
    %v683 = vadd.f32 %v653, %v681
    %v684 = vadd.f32 %v654, %v682
    %v685 = vmul.f32 %v673, 0.02
    %v686 = vmul.f32 %v674, 0.02
    %v687 = vadd.f32 %v685, 3.5
    %v688 = vadd.f32 %v686, 3.5
    %v689 = vmul.f32 %v673, %v687
    %v690 = vmul.f32 %v674, %v688
    %v691 = vsub.f32 %v31, %v677
    %v692 = vsub.f32 %v32, %v678
    %v693 = vadd.f32 %v689, %v691
    %v694 = vadd.f32 %v690, %v692
    %v695 = vmul.f32 %v677, 0.99
    %v696 = vmul.f32 %v678, 0.99
    %v697 = vmul.f32 %v693, 0.001
    %v698 = vmul.f32 %v694, 0.001
    %v699 = vadd.f32 %v695, %v697
    %v700 = vadd.f32 %v696, %v698
    %vm701 = vcmp.gt.f32.partialorder %v693, 30.0
    %vm702 = vcmp.gt.f32.partialorder %v694, 30.0
    %v703 = vsel %vm701, -65.0, %v693
    %v704 = vsel %vm702, -65.0, %v694
    %v705 = vadd.f32 %v699, 4.0
    %v706 = vadd.f32 %v700, 4.0
    %v707 = vsel %vm701, %v705, %v699
    %v708 = vsel %vm702, %v706, %v700
    %v709 = vsel %vm701, 1, 0
    %v710 = vsel %vm702, 1, 0
    %v711 = vcvt.s32.f32 %v709
    %v712 = vcvt.s32.f32 %v710
    %v713 = vadd.f32 %v683, %v711
    %v714 = vadd.f32 %v684, %v712
    %v715 = vmul.f32 %v703, 0.02
    %v716 = vmul.f32 %v704, 0.02
    %v717 = vadd.f32 %v715, 3.5
    %v718 = vadd.f32 %v716, 3.5
    %v719 = vmul.f32 %v703, %v717
    %v720 = vmul.f32 %v704, %v718
    %v721 = vsub.f32 %v31, %v707
    %v722 = vsub.f32 %v32, %v708
    %v723 = vadd.f32 %v719, %v721
    %v724 = vadd.f32 %v720, %v722
    %v725 = vmul.f32 %v707, 0.99
    %v726 = vmul.f32 %v708, 0.99
    %v727 = vmul.f32 %v723, 0.001
    %v728 = vmul.f32 %v724, 0.001
    %v729 = vadd.f32 %v725, %v727
    %v730 = vadd.f32 %v726, %v728
    %vm731 = vcmp.gt.f32.partialorder %v723, 30.0
    %vm732 = vcmp.gt.f32.partialorder %v724, 30.0
    %v733 = vsel %vm731, -65.0, %v723
    %v734 = vsel %vm732, -65.0, %v724
    %v735 = vadd.f32 %v729, 4.0
    %v736 = vadd.f32 %v730, 4.0
    %v737 = vsel %vm731, %v735, %v729
    %v738 = vsel %vm732, %v736, %v730
    %v739 = vsel %vm731, 1, 0
    %v740 = vsel %vm732, 1, 0
    %v741 = vcvt.s32.f32 %v739
    %v742 = vcvt.s32.f32 %v740
    %v743 = vadd.f32 %v713, %v741
    %v744 = vadd.f32 %v714, %v742
    %v745 = vmul.f32 %v733, 0.02
    %v746 = vmul.f32 %v734, 0.02
    %v747 = vadd.f32 %v745, 3.5
    %v748 = vadd.f32 %v746, 3.5
    %v749 = vmul.f32 %v733, %v747
    %v750 = vmul.f32 %v734, %v748
    %v751 = vsub.f32 %v31, %v737
    %v752 = vsub.f32 %v32, %v738
    %v753 = vadd.f32 %v749, %v751
    %v754 = vadd.f32 %v750, %v752
    %v755 = vmul.f32 %v737, 0.99
    %v756 = vmul.f32 %v738, 0.99
    %v757 = vmul.f32 %v753, 0.001
    %v758 = vmul.f32 %v754, 0.001
    %v759 = vadd.f32 %v755, %v757
    %v760 = vadd.f32 %v756, %v758
    %vm761 = vcmp.gt.f32.partialorder %v753, 30.0
    %vm762 = vcmp.gt.f32.partialorder %v754, 30.0
    %v763 = vsel %vm761, -65.0, %v753
    %v764 = vsel %vm762, -65.0, %v754
    %v765 = vadd.f32 %v759, 4.0
    %v766 = vadd.f32 %v760, 4.0
    %v767 = vsel %vm761, %v765, %v759
    %v768 = vsel %vm762, %v766, %v760
    %v769 = vsel %vm761, 1, 0
    %v770 = vsel %vm762, 1, 0
    %v771 = vcvt.s32.f32 %v769
    %v772 = vcvt.s32.f32 %v770
    %v773 = vadd.f32 %v743, %v771
    %v774 = vadd.f32 %v744, %v772
    %v775 = vmul.f32 %v763, 0.02
    %v776 = vmul.f32 %v764, 0.02
    %v777 = vadd.f32 %v775, 3.5
    %v778 = vadd.f32 %v776, 3.5
    %v779 = vmul.f32 %v763, %v777
    %v780 = vmul.f32 %v764, %v778
    %v781 = vsub.f32 %v31, %v767
    %v782 = vsub.f32 %v32, %v768
    %v783 = vadd.f32 %v779, %v781
    %v784 = vadd.f32 %v780, %v782
    %v785 = vmul.f32 %v767, 0.99
    %v786 = vmul.f32 %v768, 0.99
    %v787 = vmul.f32 %v783, 0.001
    %v788 = vmul.f32 %v784, 0.001
    %v789 = vadd.f32 %v785, %v787
    %v790 = vadd.f32 %v786, %v788
    %vm791 = vcmp.gt.f32.partialorder %v783, 30.0
    %vm792 = vcmp.gt.f32.partialorder %v784, 30.0
    %v793 = vsel %vm791, -65.0, %v783
    %v794 = vsel %vm792, -65.0, %v784
    %v795 = vadd.f32 %v789, 4.0
    %v796 = vadd.f32 %v790, 4.0
    %v797 = vsel %vm791, %v795, %v789
    %v798 = vsel %vm792, %v796, %v790
    %v799 = vsel %vm791, 1, 0
    %v800 = vsel %vm792, 1, 0
    %v801 = vcvt.s32.f32 %v799
    %v802 = vcvt.s32.f32 %v800
    %v803 = vadd.f32 %v773, %v801
    %v804 = vadd.f32 %v774, %v802
    %v805 = vmul.f32 %v793, 0.02
    %v806 = vmul.f32 %v794, 0.02
    %v807 = vadd.f32 %v805, 3.5
    %v808 = vadd.f32 %v806, 3.5
    %v809 = vmul.f32 %v793, %v807
    %v810 = vmul.f32 %v794, %v808
    %v811 = vsub.f32 %v31, %v797
    %v812 = vsub.f32 %v32, %v798
    %v813 = vadd.f32 %v809, %v811
    %v814 = vadd.f32 %v810, %v812
    %v815 = vmul.f32 %v797, 0.99
    %v816 = vmul.f32 %v798, 0.99
    %v817 = vmul.f32 %v813, 0.001
    %v818 = vmul.f32 %v814, 0.001
    %v819 = vadd.f32 %v815, %v817
    %v820 = vadd.f32 %v816, %v818
    %vm821 = vcmp.gt.f32.partialorder %v813, 30.0
    %vm822 = vcmp.gt.f32.partialorder %v814, 30.0
    %v823 = vsel %vm821, -65.0, %v813
    %v824 = vsel %vm822, -65.0, %v814
    %v825 = vadd.f32 %v819, 4.0
    %v826 = vadd.f32 %v820, 4.0
    %v827 = vsel %vm821, %v825, %v819
    %v828 = vsel %vm822, %v826, %v820
    %v829 = vsel %vm821, 1, 0
    %v830 = vsel %vm822, 1, 0
    %v831 = vcvt.s32.f32 %v829
    %v832 = vcvt.s32.f32 %v830
    %v833 = vadd.f32 %v803, %v831
    %v834 = vadd.f32 %v804, %v832
    %v835 = vmul.f32 %v823, 0.02
    %v836 = vmul.f32 %v824, 0.02
    %v837 = vadd.f32 %v835, 3.5
    %v838 = vadd.f32 %v836, 3.5
    %v839 = vmul.f32 %v823, %v837
    %v840 = vmul.f32 %v824, %v838
    %v841 = vsub.f32 %v31, %v827
    %v842 = vsub.f32 %v32, %v828
    %v843 = vadd.f32 %v839, %v841
    %v844 = vadd.f32 %v840, %v842
    %v845 = vmul.f32 %v827, 0.99
    %v846 = vmul.f32 %v828, 0.99
    %v847 = vmul.f32 %v843, 0.001
    %v848 = vmul.f32 %v844, 0.001
    %v849 = vadd.f32 %v845, %v847
    %v850 = vadd.f32 %v846, %v848
    %vm851 = vcmp.gt.f32.partialorder %v843, 30.0
    %vm852 = vcmp.gt.f32.partialorder %v844, 30.0
    %v853 = vsel %vm851, -65.0, %v843
    %v854 = vsel %vm852, -65.0, %v844
    %v855 = vadd.f32 %v849, 4.0
    %v856 = vadd.f32 %v850, 4.0
    %v857 = vsel %vm851, %v855, %v849
    %v858 = vsel %vm852, %v856, %v850
    %v859 = vsel %vm851, 1, 0
    %v860 = vsel %vm852, 1, 0
    %v861 = vcvt.s32.f32 %v859
    %v862 = vcvt.s32.f32 %v860
    %v863 = vadd.f32 %v833, %v861
    %v864 = vadd.f32 %v834, %v862
    %v865 = vmul.f32 %v853, 0.02
    %v866 = vmul.f32 %v854, 0.02
    %v867 = vadd.f32 %v865, 3.5
    %v868 = vadd.f32 %v866, 3.5
    %v869 = vmul.f32 %v853, %v867
    %v870 = vmul.f32 %v854, %v868
    %v871 = vsub.f32 %v31, %v857
    %v872 = vsub.f32 %v32, %v858
    %v873 = vadd.f32 %v869, %v871
    %v874 = vadd.f32 %v870, %v872
    %v875 = vmul.f32 %v857, 0.99
    %v876 = vmul.f32 %v858, 0.99
    %v877 = vmul.f32 %v873, 0.001
    %v878 = vmul.f32 %v874, 0.001
    %v879 = vadd.f32 %v875, %v877
    %v880 = vadd.f32 %v876, %v878
    %vm881 = vcmp.gt.f32.partialorder %v873, 30.0
    %vm882 = vcmp.gt.f32.partialorder %v874, 30.0
    %v883 = vsel %vm881, -65.0, %v873
    %v884 = vsel %vm882, -65.0, %v874
    %v885 = vadd.f32 %v879, 4.0
    %v886 = vadd.f32 %v880, 4.0
    %v887 = vsel %vm881, %v885, %v879
    %v888 = vsel %vm882, %v886, %v880
    %v889 = vsel %vm881, 1, 0
    %v890 = vsel %vm882, 1, 0
    %v891 = vcvt.s32.f32 %v889
    %v892 = vcvt.s32.f32 %v890
    %v893 = vadd.f32 %v863, %v891
    %v894 = vadd.f32 %v864, %v892
    %v895 = vmul.f32 %v883, 0.02
    %v896 = vmul.f32 %v884, 0.02
    %v897 = vadd.f32 %v895, 3.5
    %v898 = vadd.f32 %v896, 3.5
    %v899 = vmul.f32 %v883, %v897
    %v900 = vmul.f32 %v884, %v898
    %v901 = vsub.f32 %v31, %v887
    %v902 = vsub.f32 %v32, %v888
    %v903 = vadd.f32 %v899, %v901
    %v904 = vadd.f32 %v900, %v902
    %v905 = vmul.f32 %v887, 0.99
    %v906 = vmul.f32 %v888, 0.99
    %v907 = vmul.f32 %v903, 0.001
    %v908 = vmul.f32 %v904, 0.001
    %v909 = vadd.f32 %v905, %v907
    %v910 = vadd.f32 %v906, %v908
    %vm911 = vcmp.gt.f32.partialorder %v903, 30.0
    %vm912 = vcmp.gt.f32.partialorder %v904, 30.0
    %v913 = vsel %vm911, -65.0, %v903
    %v914 = vsel %vm912, -65.0, %v904
    %v915 = vadd.f32 %v909, 4.0
    %v916 = vadd.f32 %v910, 4.0
    %v917 = vsel %vm911, %v915, %v909
    %v918 = vsel %vm912, %v916, %v910
    %v919 = vsel %vm911, 1, 0
    %v920 = vsel %vm912, 1, 0
    %v921 = vcvt.s32.f32 %v919
    %v922 = vcvt.s32.f32 %v920
    %v923 = vadd.f32 %v893, %v921
    %v924 = vadd.f32 %v894, %v922
    %v925 = vmul.f32 %v913, 0.02
    %v926 = vmul.f32 %v914, 0.02
    %v927 = vadd.f32 %v925, 3.5
    %v928 = vadd.f32 %v926, 3.5
    %v929 = vmul.f32 %v913, %v927
    %v930 = vmul.f32 %v914, %v928
    %v931 = vsub.f32 %v31, %v917
    %v932 = vsub.f32 %v32, %v918
    %v933 = vadd.f32 %v929, %v931
    %v934 = vadd.f32 %v930, %v932
    %v935 = vmul.f32 %v917, 0.99
    %v936 = vmul.f32 %v918, 0.99
    %v937 = vmul.f32 %v933, 0.001
    %v938 = vmul.f32 %v934, 0.001
    %v939 = vadd.f32 %v935, %v937
    %v940 = vadd.f32 %v936, %v938
    %vm941 = vcmp.gt.f32.partialorder %v933, 30.0
    %vm942 = vcmp.gt.f32.partialorder %v934, 30.0
    %v943 = vsel %vm941, -65.0, %v933
    %v944 = vsel %vm942, -65.0, %v934
    %v945 = vadd.f32 %v939, 4.0
    %v946 = vadd.f32 %v940, 4.0
    %v947 = vsel %vm941, %v945, %v939
    %v948 = vsel %vm942, %v946, %v940
    %v949 = vsel %vm941, 1, 0
    %v950 = vsel %vm942, 1, 0
    %v951 = vcvt.s32.f32 %v949
    %v952 = vcvt.s32.f32 %v950
    %v953 = vadd.f32 %v923, %v951
    %v954 = vadd.f32 %v924, %v952
    %v955 = vmul.f32 %v943, 0.02
    %v956 = vmul.f32 %v944, 0.02
    %v957 = vadd.f32 %v955, 3.5
    %v958 = vadd.f32 %v956, 3.5
    %v959 = vmul.f32 %v943, %v957
    %v960 = vmul.f32 %v944, %v958
    %v961 = vsub.f32 %v31, %v947
    %v962 = vsub.f32 %v32, %v948
    %v963 = vadd.f32 %v959, %v961
    %v964 = vadd.f32 %v960, %v962
    %v965 = vmul.f32 %v947, 0.99
    %v966 = vmul.f32 %v948, 0.99
    %v967 = vmul.f32 %v963, 0.001
    %v968 = vmul.f32 %v964, 0.001
    %v969 = vadd.f32 %v965, %v967
    %v970 = vadd.f32 %v966, %v968
    %vm971 = vcmp.gt.f32.partialorder %v963, 30.0
    %vm972 = vcmp.gt.f32.partialorder %v964, 30.0
    %v973 = vsel %vm971, -65.0, %v963
    %v974 = vsel %vm972, -65.0, %v964
    %v975 = vadd.f32 %v969, 4.0
    %v976 = vadd.f32 %v970, 4.0
    %v977 = vsel %vm971, %v975, %v969
    %v978 = vsel %vm972, %v976, %v970
    %v979 = vsel %vm971, 1, 0
    %v980 = vsel %vm972, 1, 0
    %v981 = vcvt.s32.f32 %v979
    %v982 = vcvt.s32.f32 %v980
    %v983 = vadd.f32 %v953, %v981
    %v984 = vadd.f32 %v954, %v982
    %v985 = vmul.f32 %v973, 0.02
    %v986 = vmul.f32 %v974, 0.02
    %v987 = vadd.f32 %v985, 3.5
    %v988 = vadd.f32 %v986, 3.5
    %v989 = vmul.f32 %v973, %v987
    %v990 = vmul.f32 %v974, %v988
    %v991 = vsub.f32 %v31, %v977
    %v992 = vsub.f32 %v32, %v978
    %v993 = vadd.f32 %v989, %v991
    %v994 = vadd.f32 %v990, %v992
    %v995 = vmul.f32 %v977, 0.99
    %v996 = vmul.f32 %v978, 0.99
    %v997 = vmul.f32 %v993, 0.001
    %v998 = vmul.f32 %v994, 0.001
    %v999 = vadd.f32 %v995, %v997
    %v1000 = vadd.f32 %v996, %v998
    %vm1001 = vcmp.gt.f32.partialorder %v993, 30.0
    %vm1002 = vcmp.gt.f32.partialorder %v994, 30.0
    %v1003 = vsel %vm1001, -65.0, %v993
    %v1004 = vsel %vm1002, -65.0, %v994
    %v1005 = vadd.f32 %v999, 4.0
    %v1006 = vadd.f32 %v1000, 4.0
    %v1007 = vsel %vm1001, %v1005, %v999
    %v1008 = vsel %vm1002, %v1006, %v1000
    %v1009 = vsel %vm1001, 1, 0
    %v1010 = vsel %vm1002, 1, 0
    %v1011 = vcvt.s32.f32 %v1009
    %v1012 = vcvt.s32.f32 %v1010
    %v1013 = vadd.f32 %v983, %v1011
    %v1014 = vadd.f32 %v984, %v1012
    %v1015 = vmul.f32 %v1003, 0.02
    %v1016 = vmul.f32 %v1004, 0.02
    %v1017 = vadd.f32 %v1015, 3.5
    %v1018 = vadd.f32 %v1016, 3.5
    %v1019 = vmul.f32 %v1003, %v1017
    %v1020 = vmul.f32 %v1004, %v1018
    %v1021 = vsub.f32 %v31, %v1007
    %v1022 = vsub.f32 %v32, %v1008
    %v1023 = vadd.f32 %v1019, %v1021
    %v1024 = vadd.f32 %v1020, %v1022
    %v1025 = vmul.f32 %v1007, 0.99
    %v1026 = vmul.f32 %v1008, 0.99
    %v1027 = vmul.f32 %v1023, 0.001
    %v1028 = vmul.f32 %v1024, 0.001
    %v1029 = vadd.f32 %v1025, %v1027
    %v1030 = vadd.f32 %v1026, %v1028
    %vm1031 = vcmp.gt.f32.partialorder %v1023, 30.0
    %vm1032 = vcmp.gt.f32.partialorder %v1024, 30.0
    %v1033 = vsel %vm1031, -65.0, %v1023
    %v1034 = vsel %vm1032, -65.0, %v1024
    %v1035 = vadd.f32 %v1029, 4.0
    %v1036 = vadd.f32 %v1030, 4.0
    %v1037 = vsel %vm1031, %v1035, %v1029
    %v1038 = vsel %vm1032, %v1036, %v1030
    %v1039 = vsel %vm1031, 1, 0
    %v1040 = vsel %vm1032, 1, 0
    %v1041 = vcvt.s32.f32 %v1039
    %v1042 = vcvt.s32.f32 %v1040
    %v1043 = vadd.f32 %v1013, %v1041
    %v1044 = vadd.f32 %v1014, %v1042
    %v1045 = vmul.f32 %v1033, 0.02
    %v1046 = vmul.f32 %v1034, 0.02
    %v1047 = vadd.f32 %v1045, 3.5
    %v1048 = vadd.f32 %v1046, 3.5
    %v1049 = vmul.f32 %v1033, %v1047
    %v1050 = vmul.f32 %v1034, %v1048
    %v1051 = vsub.f32 %v31, %v1037
    %v1052 = vsub.f32 %v32, %v1038
    %v1053 = vadd.f32 %v1049, %v1051
    %v1054 = vadd.f32 %v1050, %v1052
    %v1055 = vmul.f32 %v1037, 0.99
    %v1056 = vmul.f32 %v1038, 0.99
    %v1057 = vmul.f32 %v1053, 0.001
    %v1058 = vmul.f32 %v1054, 0.001
    %v1059 = vadd.f32 %v1055, %v1057
    %v1060 = vadd.f32 %v1056, %v1058
    %vm1061 = vcmp.gt.f32.partialorder %v1053, 30.0
    %vm1062 = vcmp.gt.f32.partialorder %v1054, 30.0
    %v1063 = vsel %vm1061, -65.0, %v1053
    %v1064 = vsel %vm1062, -65.0, %v1054
    %v1065 = vadd.f32 %v1059, 4.0
    %v1066 = vadd.f32 %v1060, 4.0
    %v1067 = vsel %vm1061, %v1065, %v1059
    %v1068 = vsel %vm1062, %v1066, %v1060
    %v1069 = vsel %vm1061, 1, 0
    %v1070 = vsel %vm1062, 1, 0
    %v1071 = vcvt.s32.f32 %v1069
    %v1072 = vcvt.s32.f32 %v1070
    %v1073 = vadd.f32 %v1043, %v1071
    %v1074 = vadd.f32 %v1044, %v1072
    %v1075 = vmul.f32 %v1063, 0.02
    %v1076 = vmul.f32 %v1064, 0.02
    %v1077 = vadd.f32 %v1075, 3.5
    %v1078 = vadd.f32 %v1076, 3.5
    %v1079 = vmul.f32 %v1063, %v1077
    %v1080 = vmul.f32 %v1064, %v1078
    %v1081 = vsub.f32 %v31, %v1067
    %v1082 = vsub.f32 %v32, %v1068
    %v1083 = vadd.f32 %v1079, %v1081
    %v1084 = vadd.f32 %v1080, %v1082
    %v1085 = vmul.f32 %v1067, 0.99
    %v1086 = vmul.f32 %v1068, 0.99
    %v1087 = vmul.f32 %v1083, 0.001
    %v1088 = vmul.f32 %v1084, 0.001
    %v1089 = vadd.f32 %v1085, %v1087
    %v1090 = vadd.f32 %v1086, %v1088
    %vm1091 = vcmp.gt.f32.partialorder %v1083, 30.0
    %vm1092 = vcmp.gt.f32.partialorder %v1084, 30.0
    %v1093 = vsel %vm1091, -65.0, %v1083
    %v1094 = vsel %vm1092, -65.0, %v1084
    %v1095 = vadd.f32 %v1089, 4.0
    %v1096 = vadd.f32 %v1090, 4.0
    %v1097 = vsel %vm1091, %v1095, %v1089
    %v1098 = vsel %vm1092, %v1096, %v1090
    %v1099 = vsel %vm1091, 1, 0
    %v1100 = vsel %vm1092, 1, 0
    %v1101 = vcvt.s32.f32 %v1099
    %v1102 = vcvt.s32.f32 %v1100
    %v1103 = vadd.f32 %v1073, %v1101
    %v1104 = vadd.f32 %v1074, %v1102
    %v1105 = vmul.f32 %v1093, 0.02
    %v1106 = vmul.f32 %v1094, 0.02
    %v1107 = vadd.f32 %v1105, 3.5
    %v1108 = vadd.f32 %v1106, 3.5
    %v1109 = vmul.f32 %v1093, %v1107
    %v1110 = vmul.f32 %v1094, %v1108
    %v1111 = vsub.f32 %v31, %v1097
    %v1112 = vsub.f32 %v32, %v1098
    %v1113 = vadd.f32 %v1109, %v1111
    %v1114 = vadd.f32 %v1110, %v1112
    %v1115 = vmul.f32 %v1097, 0.99
    %v1116 = vmul.f32 %v1098, 0.99
    %v1117 = vmul.f32 %v1113, 0.001
    %v1118 = vmul.f32 %v1114, 0.001
    %v1119 = vadd.f32 %v1115, %v1117
    %v1120 = vadd.f32 %v1116, %v1118
    %vm1121 = vcmp.gt.f32.partialorder %v1113, 30.0
    %vm1122 = vcmp.gt.f32.partialorder %v1114, 30.0
    %v1123 = vsel %vm1121, -65.0, %v1113
    %v1124 = vsel %vm1122, -65.0, %v1114
    %v1125 = vadd.f32 %v1119, 4.0
    %v1126 = vadd.f32 %v1120, 4.0
    %v1127 = vsel %vm1121, %v1125, %v1119
    %v1128 = vsel %vm1122, %v1126, %v1120
    %v1129 = vsel %vm1121, 1, 0
    %v1130 = vsel %vm1122, 1, 0
    %v1131 = vcvt.s32.f32 %v1129
    %v1132 = vcvt.s32.f32 %v1130
    %v1133 = vadd.f32 %v1103, %v1131
    %v1134 = vadd.f32 %v1104, %v1132
    %v1135 = vmul.f32 %v1123, 0.02
    %v1136 = vmul.f32 %v1124, 0.02
    %v1137 = vadd.f32 %v1135, 3.5
    %v1138 = vadd.f32 %v1136, 3.5
    %v1139 = vmul.f32 %v1123, %v1137
    %v1140 = vmul.f32 %v1124, %v1138
    %v1141 = vsub.f32 %v31, %v1127
    %v1142 = vsub.f32 %v32, %v1128
    %v1143 = vadd.f32 %v1139, %v1141
    %v1144 = vadd.f32 %v1140, %v1142
    %v1145 = vmul.f32 %v1127, 0.99
    %v1146 = vmul.f32 %v1128, 0.99
    %v1147 = vmul.f32 %v1143, 0.001
    %v1148 = vmul.f32 %v1144, 0.001
    %v1149 = vadd.f32 %v1145, %v1147
    %v1150 = vadd.f32 %v1146, %v1148
    %vm1151 = vcmp.gt.f32.partialorder %v1143, 30.0
    %vm1152 = vcmp.gt.f32.partialorder %v1144, 30.0
    %v1153 = vsel %vm1151, -65.0, %v1143
    %v1154 = vsel %vm1152, -65.0, %v1144
    %v1155 = vadd.f32 %v1149, 4.0
    %v1156 = vadd.f32 %v1150, 4.0
    %v1157 = vsel %vm1151, %v1155, %v1149
    %v1158 = vsel %vm1152, %v1156, %v1150
    %v1159 = vsel %vm1151, 1, 0
    %v1160 = vsel %vm1152, 1, 0
    %v1161 = vcvt.s32.f32 %v1159
    %v1162 = vcvt.s32.f32 %v1160
    %v1163 = vadd.f32 %v1133, %v1161
    %v1164 = vadd.f32 %v1134, %v1162
    %v1165 = vmul.f32 %v1153, 0.02
    %v1166 = vmul.f32 %v1154, 0.02
    %v1167 = vadd.f32 %v1165, 3.5
    %v1168 = vadd.f32 %v1166, 3.5
    %v1169 = vmul.f32 %v1153, %v1167
    %v1170 = vmul.f32 %v1154, %v1168
    %v1171 = vsub.f32 %v31, %v1157
    %v1172 = vsub.f32 %v32, %v1158
    %v1173 = vadd.f32 %v1169, %v1171
    %v1174 = vadd.f32 %v1170, %v1172
    %v1175 = vmul.f32 %v1157, 0.99
    %v1176 = vmul.f32 %v1158, 0.99
    %v1177 = vmul.f32 %v1173, 0.001
    %v1178 = vmul.f32 %v1174, 0.001
    %v1179 = vadd.f32 %v1175, %v1177
    %v1180 = vadd.f32 %v1176, %v1178
    %vm1181 = vcmp.gt.f32.partialorder %v1173, 30.0
    %vm1182 = vcmp.gt.f32.partialorder %v1174, 30.0
    %v1183 = vsel %vm1181, -65.0, %v1173
    %v1184 = vsel %vm1182, -65.0, %v1174
    %v1185 = vadd.f32 %v1179, 4.0
    %v1186 = vadd.f32 %v1180, 4.0
    %v1187 = vsel %vm1181, %v1185, %v1179
    %v1188 = vsel %vm1182, %v1186, %v1180
    %v1189 = vsel %vm1181, 1, 0
    %v1190 = vsel %vm1182, 1, 0
    %v1191 = vcvt.s32.f32 %v1189
    %v1192 = vcvt.s32.f32 %v1190
    %v1193 = vadd.f32 %v1163, %v1191
    %v1194 = vadd.f32 %v1164, %v1192
    %v1195 = vmul.f32 %v1183, 0.02
    %v1196 = vmul.f32 %v1184, 0.02
    %v1197 = vadd.f32 %v1195, 3.5
    %v1198 = vadd.f32 %v1196, 3.5
    %v1199 = vmul.f32 %v1183, %v1197
    %v1200 = vmul.f32 %v1184, %v1198
    %v1201 = vsub.f32 %v31, %v1187
    %v1202 = vsub.f32 %v32, %v1188
    %v1203 = vadd.f32 %v1199, %v1201
    %v1204 = vadd.f32 %v1200, %v1202
    %v1205 = vmul.f32 %v1187, 0.99
    %v1206 = vmul.f32 %v1188, 0.99
    %v1207 = vmul.f32 %v1203, 0.001
    %v1208 = vmul.f32 %v1204, 0.001
    %v1209 = vadd.f32 %v1205, %v1207
    %v1210 = vadd.f32 %v1206, %v1208
    %vm1211 = vcmp.gt.f32.partialorder %v1203, 30.0
    %vm1212 = vcmp.gt.f32.partialorder %v1204, 30.0
    %v1213 = vsel %vm1211, -65.0, %v1203
    %v1214 = vsel %vm1212, -65.0, %v1204
    %v1215 = vadd.f32 %v1209, 4.0
    %v1216 = vadd.f32 %v1210, 4.0
    %v1217 = vsel %vm1211, %v1215, %v1209
    %v1218 = vsel %vm1212, %v1216, %v1210
    %v1219 = vsel %vm1211, 1, 0
    %v1220 = vsel %vm1212, 1, 0
    %v1221 = vcvt.s32.f32 %v1219
    %v1222 = vcvt.s32.f32 %v1220
    %v1223 = vadd.f32 %v1193, %v1221
    %v1224 = vadd.f32 %v1194, %v1222
    %v1225 = vmul.f32 %v1213, 0.02
    %v1226 = vmul.f32 %v1214, 0.02
    %v1227 = vadd.f32 %v1225, 3.5
    %v1228 = vadd.f32 %v1226, 3.5
    %v1229 = vmul.f32 %v1213, %v1227
    %v1230 = vmul.f32 %v1214, %v1228
    %v1231 = vsub.f32 %v31, %v1217
    %v1232 = vsub.f32 %v32, %v1218
    %v1233 = vadd.f32 %v1229, %v1231
    %v1234 = vadd.f32 %v1230, %v1232
    %v1235 = vmul.f32 %v1217, 0.99
    %v1236 = vmul.f32 %v1218, 0.99
    %v1237 = vmul.f32 %v1233, 0.001
    %v1238 = vmul.f32 %v1234, 0.001
    %v1239 = vadd.f32 %v1235, %v1237
    %v1240 = vadd.f32 %v1236, %v1238
    %vm1241 = vcmp.gt.f32.partialorder %v1233, 30.0
    %vm1242 = vcmp.gt.f32.partialorder %v1234, 30.0
    %v1243 = vsel %vm1241, -65.0, %v1233
    %v1244 = vsel %vm1242, -65.0, %v1234
    %v1245 = vadd.f32 %v1239, 4.0
    %v1246 = vadd.f32 %v1240, 4.0
    %v1247 = vsel %vm1241, %v1245, %v1239
    %v1248 = vsel %vm1242, %v1246, %v1240
    %v1249 = vsel %vm1241, 1, 0
    %v1250 = vsel %vm1242, 1, 0
    %v1251 = vcvt.s32.f32 %v1249
    %v1252 = vcvt.s32.f32 %v1250
    %v1253 = vadd.f32 %v1223, %v1251
    %v1254 = vadd.f32 %v1224, %v1252
    %v1255 = vmul.f32 %v1243, 0.02
    %v1256 = vmul.f32 %v1244, 0.02
    %v1257 = vadd.f32 %v1255, 3.5
    %v1258 = vadd.f32 %v1256, 3.5
    %v1259 = vmul.f32 %v1243, %v1257
    %v1260 = vmul.f32 %v1244, %v1258
    %v1261 = vsub.f32 %v31, %v1247
    %v1262 = vsub.f32 %v32, %v1248
    %v1263 = vadd.f32 %v1259, %v1261
    %v1264 = vadd.f32 %v1260, %v1262
    %v1265 = vmul.f32 %v1247, 0.99
    %v1266 = vmul.f32 %v1248, 0.99
    %v1267 = vmul.f32 %v1263, 0.001
    %v1268 = vmul.f32 %v1264, 0.001
    %v1269 = vadd.f32 %v1265, %v1267
    %v1270 = vadd.f32 %v1266, %v1268
    %vm1271 = vcmp.gt.f32.partialorder %v1263, 30.0
    %vm1272 = vcmp.gt.f32.partialorder %v1264, 30.0
    %v1273 = vsel %vm1271, -65.0, %v1263
    %v1274 = vsel %vm1272, -65.0, %v1264
    %v1275 = vadd.f32 %v1269, 4.0
    %v1276 = vadd.f32 %v1270, 4.0
    %v1277 = vsel %vm1271, %v1275, %v1269
    %v1278 = vsel %vm1272, %v1276, %v1270
    %v1279 = vsel %vm1271, 1, 0
    %v1280 = vsel %vm1272, 1, 0
    %v1281 = vcvt.s32.f32 %v1279
    %v1282 = vcvt.s32.f32 %v1280
    %v1283 = vadd.f32 %v1253, %v1281
    %v1284 = vadd.f32 %v1254, %v1282
    %v1285 = vmul.f32 %v1273, 0.02
    %v1286 = vmul.f32 %v1274, 0.02
    %v1287 = vadd.f32 %v1285, 3.5
    %v1288 = vadd.f32 %v1286, 3.5
    %v1289 = vmul.f32 %v1273, %v1287
    %v1290 = vmul.f32 %v1274, %v1288
    %v1291 = vsub.f32 %v31, %v1277
    %v1292 = vsub.f32 %v32, %v1278
    %v1293 = vadd.f32 %v1289, %v1291
    %v1294 = vadd.f32 %v1290, %v1292
    %v1295 = vmul.f32 %v1277, 0.99
    %v1296 = vmul.f32 %v1278, 0.99
    %v1297 = vmul.f32 %v1293, 0.001
    %v1298 = vmul.f32 %v1294, 0.001
    %v1299 = vadd.f32 %v1295, %v1297
    %v1300 = vadd.f32 %v1296, %v1298
    %vm1301 = vcmp.gt.f32.partialorder %v1293, 30.0
    %vm1302 = vcmp.gt.f32.partialorder %v1294, 30.0
    %v1303 = vsel %vm1301, -65.0, %v1293
    %v1304 = vsel %vm1302, -65.0, %v1294
    %v1305 = vadd.f32 %v1299, 4.0
    %v1306 = vadd.f32 %v1300, 4.0
    %v1307 = vsel %vm1301, %v1305, %v1299
    %v1308 = vsel %vm1302, %v1306, %v1300
    %v1309 = vsel %vm1301, 1, 0
    %v1310 = vsel %vm1302, 1, 0
    %v1311 = vcvt.s32.f32 %v1309
    %v1312 = vcvt.s32.f32 %v1310
    %v1313 = vadd.f32 %v1283, %v1311
    %v1314 = vadd.f32 %v1284, %v1312
    %v1315 = vmul.f32 %v1303, 0.02
    %v1316 = vmul.f32 %v1304, 0.02
    %v1317 = vadd.f32 %v1315, 3.5
    %v1318 = vadd.f32 %v1316, 3.5
    %v1319 = vmul.f32 %v1303, %v1317
    %v1320 = vmul.f32 %v1304, %v1318
    %v1321 = vsub.f32 %v31, %v1307
    %v1322 = vsub.f32 %v32, %v1308
    %v1323 = vadd.f32 %v1319, %v1321
    %v1324 = vadd.f32 %v1320, %v1322
    %v1325 = vmul.f32 %v1307, 0.99
    %v1326 = vmul.f32 %v1308, 0.99
    %v1327 = vmul.f32 %v1323, 0.001
    %v1328 = vmul.f32 %v1324, 0.001
    %v1329 = vadd.f32 %v1325, %v1327
    %v1330 = vadd.f32 %v1326, %v1328
    %vm1331 = vcmp.gt.f32.partialorder %v1323, 30.0
    %vm1332 = vcmp.gt.f32.partialorder %v1324, 30.0
    %v1333 = vsel %vm1331, -65.0, %v1323
    %v1334 = vsel %vm1332, -65.0, %v1324
    %v1335 = vadd.f32 %v1329, 4.0
    %v1336 = vadd.f32 %v1330, 4.0
    %v1337 = vsel %vm1331, %v1335, %v1329
    %v1338 = vsel %vm1332, %v1336, %v1330
    %v1339 = vsel %vm1331, 1, 0
    %v1340 = vsel %vm1332, 1, 0
    %v1341 = vcvt.s32.f32 %v1339
    %v1342 = vcvt.s32.f32 %v1340
    %v1343 = vadd.f32 %v1313, %v1341
    %v1344 = vadd.f32 %v1314, %v1342
    %v1345 = vmul.f32 %v1333, 0.02
    %v1346 = vmul.f32 %v1334, 0.02
    %v1347 = vadd.f32 %v1345, 3.5
    %v1348 = vadd.f32 %v1346, 3.5
    %v1349 = vmul.f32 %v1333, %v1347
    %v1350 = vmul.f32 %v1334, %v1348
    %v1351 = vsub.f32 %v31, %v1337
    %v1352 = vsub.f32 %v32, %v1338
    %v1353 = vadd.f32 %v1349, %v1351
    %v1354 = vadd.f32 %v1350, %v1352
    %v1355 = vmul.f32 %v1337, 0.99
    %v1356 = vmul.f32 %v1338, 0.99
    %v1357 = vmul.f32 %v1353, 0.001
    %v1358 = vmul.f32 %v1354, 0.001
    %v1359 = vadd.f32 %v1355, %v1357
    %v1360 = vadd.f32 %v1356, %v1358
    %vm1361 = vcmp.gt.f32.partialorder %v1353, 30.0
    %vm1362 = vcmp.gt.f32.partialorder %v1354, 30.0
    %v1363 = vsel %vm1361, -65.0, %v1353
    %v1364 = vsel %vm1362, -65.0, %v1354
    %v1365 = vadd.f32 %v1359, 4.0
    %v1366 = vadd.f32 %v1360, 4.0
    %v1367 = vsel %vm1361, %v1365, %v1359
    %v1368 = vsel %vm1362, %v1366, %v1360
    %v1369 = vsel %vm1361, 1, 0
    %v1370 = vsel %vm1362, 1, 0
    %v1371 = vcvt.s32.f32 %v1369
    %v1372 = vcvt.s32.f32 %v1370
    %v1373 = vadd.f32 %v1343, %v1371
    %v1374 = vadd.f32 %v1344, %v1372
    %v1375 = vmul.f32 %v1363, 0.02
    %v1376 = vmul.f32 %v1364, 0.02
    %v1377 = vadd.f32 %v1375, 3.5
    %v1378 = vadd.f32 %v1376, 3.5
    %v1379 = vmul.f32 %v1363, %v1377
    %v1380 = vmul.f32 %v1364, %v1378
    %v1381 = vsub.f32 %v31, %v1367
    %v1382 = vsub.f32 %v32, %v1368
    %v1383 = vadd.f32 %v1379, %v1381
    %v1384 = vadd.f32 %v1380, %v1382
    %v1385 = vmul.f32 %v1367, 0.99
    %v1386 = vmul.f32 %v1368, 0.99
    %v1387 = vmul.f32 %v1383, 0.001
    %v1388 = vmul.f32 %v1384, 0.001
    %v1389 = vadd.f32 %v1385, %v1387
    %v1390 = vadd.f32 %v1386, %v1388
    %vm1391 = vcmp.gt.f32.partialorder %v1383, 30.0
    %vm1392 = vcmp.gt.f32.partialorder %v1384, 30.0
    %v1393 = vsel %vm1391, -65.0, %v1383
    %v1394 = vsel %vm1392, -65.0, %v1384
    %v1395 = vadd.f32 %v1389, 4.0
    %v1396 = vadd.f32 %v1390, 4.0
    %v1397 = vsel %vm1391, %v1395, %v1389
    %v1398 = vsel %vm1392, %v1396, %v1390
    %v1399 = vsel %vm1391, 1, 0
    %v1400 = vsel %vm1392, 1, 0
    %v1401 = vcvt.s32.f32 %v1399
    %v1402 = vcvt.s32.f32 %v1400
    %v1403 = vadd.f32 %v1373, %v1401
    %v1404 = vadd.f32 %v1374, %v1402
    %v1405 = vmul.f32 %v1393, 0.02
    %v1406 = vmul.f32 %v1394, 0.02
    %v1407 = vadd.f32 %v1405, 3.5
    %v1408 = vadd.f32 %v1406, 3.5
    %v1409 = vmul.f32 %v1393, %v1407
    %v1410 = vmul.f32 %v1394, %v1408
    %v1411 = vsub.f32 %v31, %v1397
    %v1412 = vsub.f32 %v32, %v1398
    %v1413 = vadd.f32 %v1409, %v1411
    %v1414 = vadd.f32 %v1410, %v1412
    %v1415 = vmul.f32 %v1397, 0.99
    %v1416 = vmul.f32 %v1398, 0.99
    %v1417 = vmul.f32 %v1413, 0.001
    %v1418 = vmul.f32 %v1414, 0.001
    %v1419 = vadd.f32 %v1415, %v1417
    %v1420 = vadd.f32 %v1416, %v1418
    %vm1421 = vcmp.gt.f32.partialorder %v1413, 30.0
    %vm1422 = vcmp.gt.f32.partialorder %v1414, 30.0
    %v1423 = vsel %vm1421, -65.0, %v1413
    %v1424 = vsel %vm1422, -65.0, %v1414
    %v1425 = vadd.f32 %v1419, 4.0
    %v1426 = vadd.f32 %v1420, 4.0
    %v1427 = vsel %vm1421, %v1425, %v1419
    %v1428 = vsel %vm1422, %v1426, %v1420
    %v1429 = vsel %vm1421, 1, 0
    %v1430 = vsel %vm1422, 1, 0
    %v1431 = vcvt.s32.f32 %v1429
    %v1432 = vcvt.s32.f32 %v1430
    %v1433 = vadd.f32 %v1403, %v1431
    %v1434 = vadd.f32 %v1404, %v1432
    %v1435 = vmul.f32 %v1423, 0.02
    %v1436 = vmul.f32 %v1424, 0.02
    %v1437 = vadd.f32 %v1435, 3.5
    %v1438 = vadd.f32 %v1436, 3.5
    %v1439 = vmul.f32 %v1423, %v1437
    %v1440 = vmul.f32 %v1424, %v1438
    %v1441 = vsub.f32 %v31, %v1427
    %v1442 = vsub.f32 %v32, %v1428
    %v1443 = vadd.f32 %v1439, %v1441
    %v1444 = vadd.f32 %v1440, %v1442
    %v1445 = vmul.f32 %v1427, 0.99
    %v1446 = vmul.f32 %v1428, 0.99
    %v1447 = vmul.f32 %v1443, 0.001
    %v1448 = vmul.f32 %v1444, 0.001
    %v1449 = vadd.f32 %v1445, %v1447
    %v1450 = vadd.f32 %v1446, %v1448
    %vm1451 = vcmp.gt.f32.partialorder %v1443, 30.0
    %vm1452 = vcmp.gt.f32.partialorder %v1444, 30.0
    %v1453 = vsel %vm1451, -65.0, %v1443
    %v1454 = vsel %vm1452, -65.0, %v1444
    %v1455 = vadd.f32 %v1449, 4.0
    %v1456 = vadd.f32 %v1450, 4.0
    %v1457 = vsel %vm1451, %v1455, %v1449
    %v1458 = vsel %vm1452, %v1456, %v1450
    %v1459 = vsel %vm1451, 1, 0
    %v1460 = vsel %vm1452, 1, 0
    %v1461 = vcvt.s32.f32 %v1459
    %v1462 = vcvt.s32.f32 %v1460
    %v1463 = vadd.f32 %v1433, %v1461
    %v1464 = vadd.f32 %v1434, %v1462
    %v1465 = vmul.f32 %v1453, 0.02
    %v1466 = vmul.f32 %v1454, 0.02
    %v1467 = vadd.f32 %v1465, 3.5
    %v1468 = vadd.f32 %v1466, 3.5
    %v1469 = vmul.f32 %v1453, %v1467
    %v1470 = vmul.f32 %v1454, %v1468
    %v1471 = vsub.f32 %v31, %v1457
    %v1472 = vsub.f32 %v32, %v1458
    %v1473 = vadd.f32 %v1469, %v1471
    %v1474 = vadd.f32 %v1470, %v1472
    %v1475 = vmul.f32 %v1457, 0.99
    %v1476 = vmul.f32 %v1458, 0.99
    %v1477 = vmul.f32 %v1473, 0.001
    %v1478 = vmul.f32 %v1474, 0.001
    %v1479 = vadd.f32 %v1475, %v1477
    %v1480 = vadd.f32 %v1476, %v1478
    %vm1481 = vcmp.gt.f32.partialorder %v1473, 30.0
    %vm1482 = vcmp.gt.f32.partialorder %v1474, 30.0
    %v1483 = vsel %vm1481, -65.0, %v1473
    %v1484 = vsel %vm1482, -65.0, %v1474
    %v1485 = vadd.f32 %v1479, 4.0
    %v1486 = vadd.f32 %v1480, 4.0
    %v1487 = vsel %vm1481, %v1485, %v1479
    %v1488 = vsel %vm1482, %v1486, %v1480
    %v1489 = vsel %vm1481, 1, 0
    %v1490 = vsel %vm1482, 1, 0
    %v1491 = vcvt.s32.f32 %v1489
    %v1492 = vcvt.s32.f32 %v1490
    %v1493 = vadd.f32 %v1463, %v1491
    %v1494 = vadd.f32 %v1464, %v1492
    %v1495 = vmul.f32 %v1483, 0.02
    %v1496 = vmul.f32 %v1484, 0.02
    %v1497 = vadd.f32 %v1495, 3.5
    %v1498 = vadd.f32 %v1496, 3.5
    %v1499 = vmul.f32 %v1483, %v1497
    %v1500 = vmul.f32 %v1484, %v1498
    %v1501 = vsub.f32 %v31, %v1487
    %v1502 = vsub.f32 %v32, %v1488
    %v1503 = vadd.f32 %v1499, %v1501
    %v1504 = vadd.f32 %v1500, %v1502
    %vm1505 = vcmp.gt.f32.partialorder %v1503, 30.0
    %vm1506 = vcmp.gt.f32.partialorder %v1504, 30.0
    %v1507 = vsel %vm1505, 1, 0
    %v1508 = vsel %vm1506, 1, 0
    %v1509 = vcvt.s32.f32 %v1507
    %v1510 = vcvt.s32.f32 %v1508
    %v1511 = vadd.f32 %v1493, %v1509
    %v1512 = vadd.f32 %v1494, %v1510
    %v1513 = vmul.f32 %v1511, 0.02
    %v1514 = vmul.f32 %v1512, 0.02
    %1515 = vst [vmem:[#allocation5] sm:$0xff] %v1513
    %1516 = vst [vmem:[#allocation5 + $0x8] sm:$0xff] %v1514
    // Predicated region
    $region10: #{m1net_forward.1} parent=1 // pred_check
      _
    $region11: #{m1net_forward.1} parent=1 // pred_check_branch
      %1518 = sbr.rel (0) target = $region13
    $region12: #{m1net_forward.1} parent=1 // pred_region
      %s1520 = ssub.s32 256, 256
      %1521 = vsyncadd [#allocation4], %s1520
      %s1522 = sshll.u32 [#allocation5], 4
      %s1523 = int_to_ptr.vmem [resolvable:$true] %s1522
      %1528 = dma.vmem_to_hbm [thread:$0]  %s1523, 256, %s1, [#allocation4], 128, 128, 8
    $region13: #{m1net_forward.1} parent=1 // pred_fallthru
      _
    // Predicated region
    $region14: #{m1net_forward.1} parent=1 // pred_check
      _
    $region15: #{m1net_forward.1} parent=1 // pred_check_branch
      %1530 = sbr.rel (0) target = $region17
    $region16: #{m1net_forward.1} parent=1 // pred_region
      %1531 = dma.done [#allocation4], 256
    $region17: #{m1net_forward.1} parent=1 // pred_fallthru
      _
    %1532 = vsyncpa [#allocation3], 1
    %1533 = vsyncpa [#allocation4], 1

</llo_original>
